<compile_context>
chip_gen: v7x
topology: tpu7x:2x2x1
jax: 0.10.0
libtpu: 0.0.40
codegen_flags: <defaults>
</compile_context>

<pallas_src>
import jax
import jax.numpy as jnp
from jax.experimental import pallas as pl
from jax.experimental.pallas import tpu as pltpu

EPS = 1e-5
EXPANSION = 4


# --------------------------------------------------------------------------- kernel
def _make_bottleneck_kernel(Nb, H, W, Cin, planes, Cout, stride, has_proj):
    Ho = (H + 2 - 3) // stride + 1
    Wo = (W + 2 - 3) // stride + 1
    fuse_sc = has_proj and stride == 1          # conv1 and projection share the same LHS

    def kernel(*refs):
        if has_proj and not fuse_sc:
            (x_ref, w1_ref, b1_ref, w2_ref, b2_ref, w3_ref, b3_ref,
             ws_ref, bs_ref, o_ref, pad_ref) = refs
        else:
            (x_ref, w1_ref, b1_ref, w2_ref, b2_ref, w3_ref, b3_ref,
             o_ref, pad_ref) = refs

        M1 = Nb * H * W
        x2d = x_ref[...].reshape(M1, Cin)                       # bf16, batch flattened

        # ---- conv1 (1x1) [+ fused projection shortcut 1x1] + bn + relu -------------
        # One MXU pass over x; BN scales are pre-folded into the weight columns.
        y = jnp.dot(x2d, w1_ref[...], preferred_element_type=jnp.float32) + b1_ref[...]
        if fuse_sc:
            y1 = jnp.maximum(y[:, :planes], 0.0)                # conv1 part
            sc = y[:, planes:]                                  # projection shortcut (f32)
        else:
            y1 = jnp.maximum(y, 0.0)
            sc = None

        # ---- write y1 into the zero-padded bf16 scratch -----------------------------
        # Zero only the 1-element border each step (interior fully rewritten below);
        # per-step border zeroing stays correct when the parallel axis is split across
        # TensorCores (each core owns its own scratch).
        zrow = jnp.zeros((Nb, 1, W + 2, planes), pad_ref.dtype)
        zcol = jnp.zeros((Nb, H + 2, 1, planes), pad_ref.dtype)
        pad_ref[:, 0:1, :, :] = zrow
        pad_ref[:, H + 1:H + 2, :, :] = zrow
        pad_ref[:, :, 0:1, :] = zcol
        pad_ref[:, :, W + 1:W + 2, :] = zcol
        pad_ref[:, 1:H + 1, 1:W + 1, :] = (
            y1.reshape(Nb, H, W, planes).astype(pad_ref.dtype))

        # ---- conv2 (3x3, stride, pad=1) as ONE K-concatenated matmul ----------------
        if stride == 1:
            taps = [pad_ref[:, dh:dh + Ho, dw:dw + Wo, :]
                    for dh in range(3) for dw in range(3)]
        else:
            # TODO(synk): strided tap reads untested (demo uses stride=1 only).
            taps = [pad_ref[:, pl.ds(dh, Ho, stride=stride),
                            pl.ds(dw, Wo, stride=stride), :]
                    for dh in range(3) for dw in range(3)]
        slab = jnp.concatenate(taps, axis=-1).reshape(Nb * Ho * Wo, 9 * planes)
        y2 = jnp.dot(slab, w2_ref[...], preferred_element_type=jnp.float32)
        y2 = jnp.maximum(y2 + b2_ref[...], 0.0).astype(jnp.bfloat16)

        # ---- conv3 (1x1) + bn3 + shortcut + residual relu ---------------------------
        out = jnp.dot(y2, w3_ref[...], preferred_element_type=jnp.float32) + b3_ref[...]
        if fuse_sc:
            out = out + sc
        elif has_proj:
            # stride>1 projection: shortcut LHS is the strided input, separate matmul.
            xs = x_ref[:, pl.ds(0, Ho, stride=stride), pl.ds(0, Wo, stride=stride), :]
            out = out + (jnp.dot(xs.reshape(Nb * Ho * Wo, Cin), ws_ref[...],
                                 preferred_element_type=jnp.float32) + bs_ref[...])
        else:
            # identity shortcut: stride == 1 and Cin == Cout guaranteed by the module.
            out = out + x2d.astype(jnp.float32)

        # TODO(synk): for Cout < 128 this is a masked (sub-128-lane) store; a lane-dense
        #             (Nb, Ho, Wo*Cout) packing would need a lane-retile reshape.
        o_ref[...] = jnp.maximum(out, 0.0).astype(o_ref.dtype).reshape(Nb, Ho, Wo, Cout)

    return kernel, Ho, Wo


# ----------------------------------------------------------------------------- glue
def bn_fold(bn):
    scale = bn["gamma"] / jnp.sqrt(bn["var"] + EPS)
    bias = bn["beta"] - bn["mean"] * scale
    return scale.astype(jnp.float32), bias.astype(jnp.float32)


def bottleneck_forward_nhwc(x_nhwc, p, stride, batch_block=2):
    """NHWC bf16 -> NHWC bf16 fused Bottleneck forward (eval-mode BN)."""
    x = x_nhwc.astype(jnp.bfloat16)
    N, H, W, Cin = x.shape
    planes = p["w1"].shape[0]
    Cout = p["w3"].shape[0]
    has_proj = p["has_proj"]
    fuse_sc = has_proj and stride == 1

    Nb = max(1, min(batch_block, N))
    while N % Nb:
        Nb -= 1

    s1, b1 = bn_fold(p["bn1"])
    s2, b2 = bn_fold(p["bn2"])
    s3, b3 = bn_fold(p["bn3"])

    # Fold BN scales into matmul-layout bf16 weights.
    w1f = (p["w1"].reshape(planes, Cin).T * s1[None, :]).astype(jnp.bfloat16)      # (Cin, planes)
    w2f = (jnp.transpose(p["w2"], (2, 3, 1, 0)) * s2[None, None, None, :]
           ).reshape(9 * planes, planes).astype(jnp.bfloat16)                      # (9*planes, planes)
    w3f = (p["w3"].reshape(Cout, planes).T * s3[None, :]).astype(jnp.bfloat16)     # (planes, Cout)
    if has_proj:
        ss, bs = bn_fold(p["bns"])
        wsf = (p["ws"].reshape(Cout, Cin).T * ss[None, :]).astype(jnp.bfloat16)    # (Cin, Cout)

    kernel, Ho, Wo = _make_bottleneck_kernel(Nb, H, W, Cin, planes, Cout, stride, has_proj)

    if fuse_sc:
        w1_in = jnp.concatenate([w1f, wsf], axis=1)                 # (Cin, planes+Cout)
        b1_in = jnp.concatenate([b1, bs]).reshape(1, -1)            # (1, planes+Cout)
    else:
        w1_in = w1f
        b1_in = b1.reshape(1, -1)
    C1 = w1_in.shape[1]

    args = [x, w1_in, b1_in, w2f, b2.reshape(1, -1), w3f, b3.reshape(1, -1)]
    in_specs = [
        pl.BlockSpec((Nb, H, W, Cin), lambda n: (n, 0, 0, 0)),
        pl.BlockSpec((Cin, C1), lambda n: (0, 0)),
        pl.BlockSpec((1, C1), lambda n: (0, 0)),
        pl.BlockSpec((9 * planes, planes), lambda n: (0, 0)),
        pl.BlockSpec((1, planes), lambda n: (0, 0)),
        pl.BlockSpec((planes, Cout), lambda n: (0, 0)),
        pl.BlockSpec((1, Cout), lambda n: (0, 0)),
    ]
    if has_proj and not fuse_sc:
        args += [wsf, bs.reshape(1, -1)]
        in_specs += [
            pl.BlockSpec((Cin, Cout), lambda n: (0, 0)),
            pl.BlockSpec((1, Cout), lambda n: (0, 0)),
        ]

    out = pl.pallas_call(
        kernel,
        out_shape=jax.ShapeDtypeStruct((N, Ho, Wo, Cout), jnp.bfloat16),
        grid_spec=pltpu.PrefetchScalarGridSpec(
            num_scalar_prefetch=0,
            grid=(N // Nb,),
            in_specs=in_specs,
            out_specs=pl.BlockSpec((Nb, Ho, Wo, Cout), lambda n: (n, 0, 0, 0)),
            scratch_shapes=[pltpu.VMEM((Nb, H + 2, W + 2, planes), jnp.bfloat16)],
        ),
        compiler_params=pltpu.CompilerParams(
            dimension_semantics=("parallel",),
        ),
    )(*args)
    return out                                                     # NHWC bf16


def bottleneck_forward(x_nchw, p, stride):
    """PyTorch-parity wrapper: NCHW in, NCHW out (transposes only for this demo)."""
    x = jnp.transpose(x_nchw, (0, 2, 3, 1))
    out = bottleneck_forward_nhwc(x, p, stride)
    return jnp.transpose(out, (0, 3, 1, 2))


# ------------------------------------------------------------------------- init/ref
def init_params(key, in_planes, planes, stride):
    out_planes = EXPANSION * planes
    ks = jax.random.split(key, 4)
    p = {
        "w1": jax.random.normal(ks[0], (planes, in_planes, 1, 1), jnp.float32) * 0.1,
        "w2": jax.random.normal(ks[1], (planes, planes, 3, 3), jnp.float32) * 0.1,
        "w3": jax.random.normal(ks[2], (out_planes, planes, 1, 1), jnp.float32) * 0.1,
    }
    for name, c in (("bn1", planes), ("bn2", planes), ("bn3", out_planes)):
        p[name] = dict(gamma=jnp.ones(c), beta=jnp.zeros(c),
                       mean=jnp.zeros(c), var=jnp.ones(c))
    p["has_proj"] = (stride != 1) or (in_planes != out_planes)
    if p["has_proj"]:
        p["ws"] = jax.random.normal(ks[3], (out_planes, in_planes, 1, 1), jnp.float32) * 0.1
        p["bns"] = dict(gamma=jnp.ones(out_planes), beta=jnp.zeros(out_planes),
                        mean=jnp.zeros(out_planes), var=jnp.ones(out_planes))
    return p


def ref_forward(x_nchw, p, stride):
    x = jnp.transpose(x_nchw, (0, 2, 3, 1)).astype(jnp.float32)

    def conv(h, w_oihw, st, pad):
        w_hwio = jnp.transpose(w_oihw, (2, 3, 1, 0))
        return jax.lax.conv_general_dilated(
            h, w_hwio, (st, st), pad, dimension_numbers=("NHWC", "HWIO", "NHWC"))

    def bn(h, b):
        s, o = bn_fold(b)
        return h * s + o

    y = jax.nn.relu(bn(conv(x, p["w1"], 1, [(0, 0), (0, 0)]), p["bn1"]))
    y = jax.nn.relu(bn(conv(y, p["w2"], stride, [(1, 1), (1, 1)]), p["bn2"]))
    y = bn(conv(y, p["w3"], 1, [(0, 0), (0, 0)]), p["bn3"])
    if p["has_proj"]:
        sc = bn(conv(x, p["ws"], stride, [(0, 0), (0, 0)]), p["bns"])
    else:
        sc = x[:, ::stride, ::stride, :]
    out = jax.nn.relu(y + sc)
    return jnp.transpose(out, (0, 3, 1, 2))


if __name__ == "__main__":
    key = jax.random.PRNGKey(0)
    k1, k2, k3, k4 = jax.random.split(key, 4)
    N = 8                                                   # 4 grid steps at Nb=2

    # Config A: projection shortcut (in_planes != expansion*planes), stride 1.
    in_planes, planes, stride = 4, 4, 1
    x = jax.random.normal(k1, (N, in_planes, 16, 16), jnp.float32)   # NCHW like PyTorch
    params = init_params(k2, in_planes, planes, stride)
    out = jax.block_until_ready(bottleneck_forward(x, params, stride))
    ref = jax.block_until_ready(ref_forward(x, params, stride))
    assert out.shape == (N, EXPANSION * planes, 16, 16), out.shape
    out_f = out.astype(jnp.float32)
    # bf16 I/O + bf16 matmuls with f32 accumulation vs an f32 reference -> loose tol.
    assert jnp.allclose(out_f, ref, atol=5e-2, rtol=5e-2), \
        float(jnp.max(jnp.abs(out_f - ref)))

    # Config B: identity shortcut (in_planes == expansion*planes, stride 1).
    in_planes_b, planes_b, stride_b = 16, 4, 1
    xb = jax.random.normal(k3, (N, in_planes_b, 16, 16), jnp.float32)
    params_b = init_params(k4, in_planes_b, planes_b, stride_b)
    out_b = jax.block_until_ready(bottleneck_forward(xb, params_b, stride_b))
    ref_b = jax.block_until_ready(ref_forward(xb, params_b, stride_b))
    assert out_b.shape == (N, EXPANSION * planes_b, 16, 16), out_b.shape
    out_bf = out_b.astype(jnp.float32)
    assert jnp.allclose(out_bf, ref_b, atol=5e-2, rtol=5e-2), \
        float(jnp.max(jnp.abs(out_bf - ref_b)))

    print("KERNEL_OK")
</pallas_src>

<mosaic_0001>
module attributes {stable_mosaic.version = 11 : i64} {
  func.func @kernel(%arg0: i32, %arg1: memref<2x16x16x4xbf16, #tpu.memory_space<vmem>>, %arg2: memref<4x20xbf16, #tpu.memory_space<vmem>>, %arg3: memref<1x20xf32, #tpu.memory_space<vmem>>, %arg4: memref<36x4xbf16, #tpu.memory_space<vmem>>, %arg5: memref<1x4xf32, #tpu.memory_space<vmem>>, %arg6: memref<4x16xbf16, #tpu.memory_space<vmem>>, %arg7: memref<1x16xf32, #tpu.memory_space<vmem>>, %arg8: memref<2x16x16x16xbf16, #tpu.memory_space<vmem>>, %arg9: memref<2x18x18x4xbf16, #tpu.memory_space<vmem>>) attributes {dimension_semantics = [#tpu.dimension_semantics<parallel>], iteration_bounds = array<i64: 4>, scalar_prefetch = 0 : i64, scratch_operands = 1 : i64, tpu.core_type = #tpu.core_type<tc>, window_params = [{transform_indices = @transform_0, window_bounds = array<i64: 2, 16, 16, 4>}, {pipeline_mode = #tpu.pipeline_mode<synchronous>, transform_indices = @transform_1, window_bounds = array<i64: 4, 20>}, {pipeline_mode = #tpu.pipeline_mode<synchronous>, transform_indices = @transform_2, window_bounds = array<i64: 1, 20>}, {pipeline_mode = #tpu.pipeline_mode<synchronous>, transform_indices = @transform_3, window_bounds = array<i64: 36, 4>}, {pipeline_mode = #tpu.pipeline_mode<synchronous>, transform_indices = @transform_4, window_bounds = array<i64: 1, 4>}, {pipeline_mode = #tpu.pipeline_mode<synchronous>, transform_indices = @transform_5, window_bounds = array<i64: 4, 16>}, {pipeline_mode = #tpu.pipeline_mode<synchronous>, transform_indices = @transform_6, window_bounds = array<i64: 1, 16>}, {transform_indices = @transform_7, window_bounds = array<i64: 2, 16, 16, 16>}]} {
    %c0 = arith.constant 0 : index
    %c0_0 = arith.constant 0 : index
    %c0_1 = arith.constant 0 : index
    %c0_2 = arith.constant 0 : index
    %0 = vector.load %arg1[%c0, %c0_0, %c0_1, %c0_2] : memref<2x16x16x4xbf16, #tpu.memory_space<vmem>>, vector<2x16x16x4xbf16>
    %1 = vector.shape_cast %0 : vector<2x16x16x4xbf16> to vector<512x4xbf16>
    %c0_3 = arith.constant 0 : index
    %c0_4 = arith.constant 0 : index
    %2 = vector.load %arg2[%c0_3, %c0_4] : memref<4x20xbf16, #tpu.memory_space<vmem>>, vector<4x20xbf16>
    %cst = arith.constant dense<0.000000e+00> : vector<512x20xf32>
    %3 = tpu.matmul %1, %2, %cst {dimension_numbers = #tpu.dot_dimension_numbers<[1], [0], [0], [1], [0, 0, 1, 1], [], []>} : vector<512x4xbf16>, vector<4x20xbf16>, vector<512x20xf32> -> vector<512x20xf32>
    %c0_5 = arith.constant 0 : index
    %c0_6 = arith.constant 0 : index
    %4 = vector.load %arg3[%c0_5, %c0_6] : memref<1x20xf32, #tpu.memory_space<vmem>>, vector<1x20xf32>
    %5 = vector.broadcast %4 : vector<1x20xf32> to vector<512x20xf32>
    %6 = arith.addf %3, %5 : vector<512x20xf32>
    %7 = vector.extract_strided_slice %6 {offsets = [0, 0], sizes = [512, 4], strides = [1, 1]} : vector<512x20xf32> to vector<512x4xf32>
    %cst_7 = arith.constant 0.000000e+00 : f32
    %8 = vector.broadcast %cst_7 : f32 to vector<512x4xf32>
    %9 = arith.maximumf %7, %8 : vector<512x4xf32>
    %10 = vector.extract_strided_slice %6 {offsets = [0, 4], sizes = [512, 16], strides = [1, 1]} : vector<512x20xf32> to vector<512x16xf32>
    %cst_8 = arith.constant 0.000000e+00 : bf16
    %11 = vector.broadcast %cst_8 : bf16 to vector<2x1x18x4xbf16>
    %cst_9 = arith.constant 0.000000e+00 : bf16
    %12 = vector.broadcast %cst_9 : bf16 to vector<2x18x1x4xbf16>
    %c0_10 = arith.constant 0 : index
    %c0_11 = arith.constant 0 : index
    %c0_12 = arith.constant 0 : index
    %c0_13 = arith.constant 0 : index
    %13 = vector.load %arg9[%c0_10, %c0_11, %c0_12, %c0_13] : memref<2x18x18x4xbf16, #tpu.memory_space<vmem>>, vector<2x1x18x4xbf16>
    tpu.vector_store %arg9[%c0_10, %c0_11, %c0_12, %c0_13], %11 {strides = array<i32>} : memref<2x18x18x4xbf16, #tpu.memory_space<vmem>>, vector<2x1x18x4xbf16>,
    %c0_14 = arith.constant 0 : index
    %c17 = arith.constant 17 : index
    %c0_15 = arith.constant 0 : index
    %c0_16 = arith.constant 0 : index
    %14 = vector.load %arg9[%c0_14, %c17, %c0_15, %c0_16] : memref<2x18x18x4xbf16, #tpu.memory_space<vmem>>, vector<2x1x18x4xbf16>
    tpu.vector_store %arg9[%c0_14, %c17, %c0_15, %c0_16], %11 {strides = array<i32>} : memref<2x18x18x4xbf16, #tpu.memory_space<vmem>>, vector<2x1x18x4xbf16>,
    %c0_17 = arith.constant 0 : index
    %c0_18 = arith.constant 0 : index
    %c0_19 = arith.constant 0 : index
    %c0_20 = arith.constant 0 : index
    %15 = vector.load %arg9[%c0_17, %c0_18, %c0_19, %c0_20] : memref<2x18x18x4xbf16, #tpu.memory_space<vmem>>, vector<2x18x1x4xbf16>
    tpu.vector_store %arg9[%c0_17, %c0_18, %c0_19, %c0_20], %12 {strides = array<i32>} : memref<2x18x18x4xbf16, #tpu.memory_space<vmem>>, vector<2x18x1x4xbf16>,
    %c0_21 = arith.constant 0 : index
    %c0_22 = arith.constant 0 : index
    %c17_23 = arith.constant 17 : index
    %c0_24 = arith.constant 0 : index
    %16 = vector.load %arg9[%c0_21, %c0_22, %c17_23, %c0_24] : memref<2x18x18x4xbf16, #tpu.memory_space<vmem>>, vector<2x18x1x4xbf16>
    tpu.vector_store %arg9[%c0_21, %c0_22, %c17_23, %c0_24], %12 {strides = array<i32>} : memref<2x18x18x4xbf16, #tpu.memory_space<vmem>>, vector<2x18x1x4xbf16>,
    %17 = vector.shape_cast %9 : vector<512x4xf32> to vector<2x16x16x4xf32>
    %18 = arith.truncf %17 : vector<2x16x16x4xf32> to vector<2x16x16x4xbf16>
    %c0_25 = arith.constant 0 : index
    %c1 = arith.constant 1 : index
    %c1_26 = arith.constant 1 : index
    %c0_27 = arith.constant 0 : index
    %19 = vector.load %arg9[%c0_25, %c1, %c1_26, %c0_27] : memref<2x18x18x4xbf16, #tpu.memory_space<vmem>>, vector<2x16x16x4xbf16>
    tpu.vector_store %arg9[%c0_25, %c1, %c1_26, %c0_27], %18 {strides = array<i32>} : memref<2x18x18x4xbf16, #tpu.memory_space<vmem>>, vector<2x16x16x4xbf16>,
    %c0_28 = arith.constant 0 : index
    %c0_29 = arith.constant 0 : index
    %c0_30 = arith.constant 0 : index
    %c0_31 = arith.constant 0 : index
    %20 = vector.load %arg9[%c0_28, %c0_29, %c0_30, %c0_31] : memref<2x18x18x4xbf16, #tpu.memory_space<vmem>>, vector<2x16x16x4xbf16>
    %c0_32 = arith.constant 0 : index
    %c0_33 = arith.constant 0 : index
    %c1_34 = arith.constant 1 : index
    %c0_35 = arith.constant 0 : index
    %21 = vector.load %arg9[%c0_32, %c0_33, %c1_34, %c0_35] : memref<2x18x18x4xbf16, #tpu.memory_space<vmem>>, vector<2x16x16x4xbf16>
    %c0_36 = arith.constant 0 : index
    %c0_37 = arith.constant 0 : index
    %c2 = arith.constant 2 : index
    %c0_38 = arith.constant 0 : index
    %22 = vector.load %arg9[%c0_36, %c0_37, %c2, %c0_38] : memref<2x18x18x4xbf16, #tpu.memory_space<vmem>>, vector<2x16x16x4xbf16>
    %c0_39 = arith.constant 0 : index
    %c1_40 = arith.constant 1 : index
    %c0_41 = arith.constant 0 : index
    %c0_42 = arith.constant 0 : index
    %23 = vector.load %arg9[%c0_39, %c1_40, %c0_41, %c0_42] : memref<2x18x18x4xbf16, #tpu.memory_space<vmem>>, vector<2x16x16x4xbf16>
    %c0_43 = arith.constant 0 : index
    %c1_44 = arith.constant 1 : index
    %c1_45 = arith.constant 1 : index
    %c0_46 = arith.constant 0 : index
    %24 = vector.load %arg9[%c0_43, %c1_44, %c1_45, %c0_46] : memref<2x18x18x4xbf16, #tpu.memory_space<vmem>>, vector<2x16x16x4xbf16>
    %c0_47 = arith.constant 0 : index
    %c1_48 = arith.constant 1 : index
    %c2_49 = arith.constant 2 : index
    %c0_50 = arith.constant 0 : index
    %25 = vector.load %arg9[%c0_47, %c1_48, %c2_49, %c0_50] : memref<2x18x18x4xbf16, #tpu.memory_space<vmem>>, vector<2x16x16x4xbf16>
    %c0_51 = arith.constant 0 : index
    %c2_52 = arith.constant 2 : index
    %c0_53 = arith.constant 0 : index
    %c0_54 = arith.constant 0 : index
    %26 = vector.load %arg9[%c0_51, %c2_52, %c0_53, %c0_54] : memref<2x18x18x4xbf16, #tpu.memory_space<vmem>>, vector<2x16x16x4xbf16>
    %c0_55 = arith.constant 0 : index
    %c2_56 = arith.constant 2 : index
    %c1_57 = arith.constant 1 : index
    %c0_58 = arith.constant 0 : index
    %27 = vector.load %arg9[%c0_55, %c2_56, %c1_57, %c0_58] : memref<2x18x18x4xbf16, #tpu.memory_space<vmem>>, vector<2x16x16x4xbf16>
    %c0_59 = arith.constant 0 : index
    %c2_60 = arith.constant 2 : index
    %c2_61 = arith.constant 2 : index
    %c0_62 = arith.constant 0 : index
    %28 = vector.load %arg9[%c0_59, %c2_60, %c2_61, %c0_62] : memref<2x18x18x4xbf16, #tpu.memory_space<vmem>>, vector<2x16x16x4xbf16>
    %29 = tpu.concatenate %20, %21, %22, %23, %24, %25, %26, %27, %28 in 3 : vector<2x16x16x4xbf16>, vector<2x16x16x4xbf16>, vector<2x16x16x4xbf16>, vector<2x16x16x4xbf16>, vector<2x16x16x4xbf16>, vector<2x16x16x4xbf16>, vector<2x16x16x4xbf16>, vector<2x16x16x4xbf16>, vector<2x16x16x4xbf16> -> vector<2x16x16x36xbf16>
    %30 = vector.shape_cast %29 : vector<2x16x16x36xbf16> to vector<512x36xbf16>
    %c0_63 = arith.constant 0 : index
    %c0_64 = arith.constant 0 : index
    %31 = vector.load %arg4[%c0_63, %c0_64] : memref<36x4xbf16, #tpu.memory_space<vmem>>, vector<36x4xbf16>
    %cst_65 = arith.constant dense<0.000000e+00> : vector<512x4xf32>
    %32 = tpu.matmul %30, %31, %cst_65 {dimension_numbers = #tpu.dot_dimension_numbers<[1], [0], [0], [1], [0, 0, 1, 1], [], []>} : vector<512x36xbf16>, vector<36x4xbf16>, vector<512x4xf32> -> vector<512x4xf32>
    %c0_66 = arith.constant 0 : index
    %c0_67 = arith.constant 0 : index
    %33 = vector.load %arg5[%c0_66, %c0_67] : memref<1x4xf32, #tpu.memory_space<vmem>>, vector<1x4xf32>
    %34 = vector.broadcast %33 : vector<1x4xf32> to vector<512x4xf32>
    %35 = arith.addf %32, %34 : vector<512x4xf32>
    %cst_68 = arith.constant 0.000000e+00 : f32
    %36 = vector.broadcast %cst_68 : f32 to vector<512x4xf32>
    %37 = arith.maximumf %35, %36 : vector<512x4xf32>
    %38 = arith.truncf %37 : vector<512x4xf32> to vector<512x4xbf16>
    %c0_69 = arith.constant 0 : index
    %c0_70 = arith.constant 0 : index
    %39 = vector.load %arg6[%c0_69, %c0_70] : memref<4x16xbf16, #tpu.memory_space<vmem>>, vector<4x16xbf16>
    %cst_71 = arith.constant dense<0.000000e+00> : vector<512x16xf32>
    %40 = tpu.matmul %38, %39, %cst_71 {dimension_numbers = #tpu.dot_dimension_numbers<[1], [0], [0], [1], [0, 0, 1, 1], [], []>} : vector<512x4xbf16>, vector<4x16xbf16>, vector<512x16xf32> -> vector<512x16xf32>
    %c0_72 = arith.constant 0 : index
    %c0_73 = arith.constant 0 : index
    %41 = vector.load %arg7[%c0_72, %c0_73] : memref<1x16xf32, #tpu.memory_space<vmem>>, vector<1x16xf32>
    %42 = vector.broadcast %41 : vector<1x16xf32> to vector<512x16xf32>
    %43 = arith.addf %40, %42 : vector<512x16xf32>
    %44 = arith.addf %43, %10 : vector<512x16xf32>
    %cst_74 = arith.constant 0.000000e+00 : f32
    %45 = vector.broadcast %cst_74 : f32 to vector<512x16xf32>
    %46 = arith.maximumf %44, %45 : vector<512x16xf32>
    %47 = arith.truncf %46 : vector<512x16xf32> to vector<512x16xbf16>
    %48 = vector.shape_cast %47 : vector<512x16xbf16> to vector<2x16x16x16xbf16>
    %c0_75 = arith.constant 0 : index
    %c0_76 = arith.constant 0 : index
    %c0_77 = arith.constant 0 : index
    %c0_78 = arith.constant 0 : index
    %49 = vector.load %arg8[%c0_75, %c0_76, %c0_77, %c0_78] : memref<2x16x16x16xbf16, #tpu.memory_space<vmem>>, vector<2x16x16x16xbf16>
    tpu.vector_store %arg8[%c0_75, %c0_76, %c0_77, %c0_78], %48 {strides = array<i32>} : memref<2x16x16x16xbf16, #tpu.memory_space<vmem>>, vector<2x16x16x16xbf16>,
    return
  }
  func.func @transform_0(%arg0: i32) -> (i32, i32, i32, i32) {
    %c0_i32 = arith.constant 0 : i32
    %c0_i32_0 = arith.constant 0 : i32
    %c0_i32_1 = arith.constant 0 : i32
    %c0_i32_2 = arith.constant 0 : i32
    return %arg0, %c0_i32, %c0_i32_0, %c0_i32_1 : i32, i32, i32, i32
  }
  func.func @transform_1(%arg0: i32) -> (i32, i32) {
    %c0_i32 = arith.constant 0 : i32
    %c0_i32_0 = arith.constant 0 : i32
    %c0_i32_1 = arith.constant 0 : i32
    return %c0_i32, %c0_i32_0 : i32, i32
  }
  func.func @transform_2(%arg0: i32) -> (i32, i32) {
    %c0_i32 = arith.constant 0 : i32
    %c0_i32_0 = arith.constant 0 : i32
    %c0_i32_1 = arith.constant 0 : i32
    return %c0_i32, %c0_i32_0 : i32, i32
  }
  func.func @transform_3(%arg0: i32) -> (i32, i32) {
    %c0_i32 = arith.constant 0 : i32
    %c0_i32_0 = arith.constant 0 : i32
    %c0_i32_1 = arith.constant 0 : i32
    return %c0_i32, %c0_i32_0 : i32, i32
  }
  func.func @transform_4(%arg0: i32) -> (i32, i32) {
    %c0_i32 = arith.constant 0 : i32
    %c0_i32_0 = arith.constant 0 : i32
    %c0_i32_1 = arith.constant 0 : i32
    return %c0_i32, %c0_i32_0 : i32, i32
  }
  func.func @transform_5(%arg0: i32) -> (i32, i32) {
    %c0_i32 = arith.constant 0 : i32
    %c0_i32_0 = arith.constant 0 : i32
    %c0_i32_1 = arith.constant 0 : i32
    return %c0_i32, %c0_i32_0 : i32, i32
  }
  func.func @transform_6(%arg0: i32) -> (i32, i32) {
    %c0_i32 = arith.constant 0 : i32
    %c0_i32_0 = arith.constant 0 : i32
    %c0_i32_1 = arith.constant 0 : i32
    return %c0_i32, %c0_i32_0 : i32, i32
  }
  func.func @transform_7(%arg0: i32) -> (i32, i32, i32, i32) {
    %c0_i32 = arith.constant 0 : i32
    %c0_i32_0 = arith.constant 0 : i32
    %c0_i32_1 = arith.constant 0 : i32
    %c0_i32_2 = arith.constant 0 : i32
    return %arg0, %c0_i32, %c0_i32_0, %c0_i32_1 : i32, i32, i32, i32
  }
}

</mosaic_0001>

<llo_original>
// kernel: tpu_custom_call.1
$region0: #{tpu_custom_call.1}
  #allocation0 [shape = 'u32[]', space=smem, size = 0x4, offset = 0x4, fixed_abs, tag = 'smem constant byte address 0x4 - core index']
  #allocation1 [shape = 'u32[144,128]{1,0:T(1,128)}', space=vmem, size = 0x12000, scoped, tag = 'internal scratch']
  #allocation2 [shape = 'bf16[2,18,18,4]{3,2,1,0:T(8,128)(2,1)}', space=vmem, size = 0x36000, scoped, tag = 'scratch operand']
  %s0 = inlined_call_operand.vmem [shape: bf16[8,16,16,4], index: 0, kind: input, shape index: {}]
  %s1 = inlined_call_operand.vmem [shape: bf16[4,20], index: 1, kind: input, shape index: {}]
  %s2 = inlined_call_operand.vmem [shape: f32[1,20], index: 2, kind: input, shape index: {}]
  %s3 = inlined_call_operand.vmem [shape: bf16[36,4], index: 3, kind: input, shape index: {}]
  %s4 = inlined_call_operand.vmem [shape: f32[1,4], index: 4, kind: input, shape index: {}]
  %s5 = inlined_call_operand.vmem [shape: bf16[4,16], index: 5, kind: input, shape index: {}]
  %s6 = inlined_call_operand.vmem [shape: f32[1,16], index: 6, kind: input, shape index: {}]
  %s7 = inlined_call_operand.hbm [shape: bf16[8,16,16,16], index: 7, kind: output, shape index: {}]
  %s8 = sld [smem:[#allocation0]]
  $region61: #{tpu_custom_call.1} parent=0
    _
  %s10 = ssub.s32 1, %s8
  %s11 = scalar_select 0, %s10, %s8
  $region1: #{tpu_custom_call.1} parent=0
    #allocation3 [shape = 'u8[262144]{0}', space=vmem, size = 0x40000, scoped, tag = 'output window, operand 0']
    #allocation4 [shape = 's32[2]{0}', space=sflag, size = 0x8, scoped, tag = 'scoped memory for tpu_custom_call.1']
    %12 = vsyncpa [#allocation4], 0
    %s13 = scalar_lea.sflag [#allocation4], 1
    %14 = vsyncpa %s13, 0
    loop: start=0, step=1, limit=6
    $region2: #{tpu_custom_call.1} parent=1 // loop_pre_header
      _
    $region3: #{tpu_custom_call.1} parent=1 // loop_header
      %s16 = sphi 0, %s20
      %p17 = scmp.ge.s32.totalorder %s16, 6
      %s26 = sphi 0, %s28
      %s29 = sphi 0, %s26
      %s30 = sphi 0, %s29
      %s46 = sphi 0, %s30
      %s50 = sphi 0, %s50
      %s52 = sphi 0, %s50
      %s53 = sphi 0, %s52
      %s67 = sphi 0, %s53
      %s71 = sphi 0, %s71
      %s73 = sphi 0, %s71
      %s74 = sphi 0, %s73
      %s88 = sphi 0, %s74
      %s92 = sphi 0, %s92
      %s94 = sphi 0, %s92
      %s95 = sphi 0, %s94
      %s109 = sphi 0, %s95
      %s113 = sphi 0, %s113
      %s115 = sphi 0, %s113
      %s116 = sphi 0, %s115
      %s130 = sphi 0, %s116
      %s134 = sphi 0, %s134
      %s136 = sphi 0, %s134
      %s137 = sphi 0, %s136
      %s151 = sphi 0, %s137
      %s155 = sphi 0, %s155
      %s157 = sphi 0, %s155
      %s158 = sphi 0, %s157
      %s172 = sphi 0, %s158
      %s178 = sphi 0, %s180
      %s181 = sphi 0, %s178
      %s182 = sphi 0, %s181
      %s198 = sphi 0, %s182
    $region4: #{tpu_custom_call.1} parent=1 // loop_header_branch
      %19 = sbr.rel (%p17) target = $region8
    $region5: #{tpu_custom_call.1} parent=1 // loop_body
      %s21 = ssub.s32 %s16, 1
      %s22 = ssub.s32 %s16, 2
      %s23 = sadd.s32 %s16, 1
      %s24 = ssub.s32 %s16, %s23
      %p25 = scmp.eq.s32.totalorder %s24, 0
      %s27 = sadd.s32 %s26, 1
      %s28 = scalar_select %p25, %s26, %s27
      %p31 = pneg %p25
      %p32 = scmp.eq.s32.totalorder %s16, 3
      %p33 = por %p31, %p32
      %p34 = scmp.ne.s32.totalorder %s26, %s29
      %p35 = scmp.eq.s32.totalorder %s16, 0
      %p36 = por %p34, %p35
      %p37 = scmp.ne.s32.totalorder %s26, %s29
      %p38 = scmp.eq.s32.totalorder %s21, 3
      %p39 = por %p37, %p38
      %p40 = scmp.ne.s32.totalorder %s29, %s30
      %p41 = scmp.eq.s32.totalorder %s21, 0
      %p42 = por %p40, %p41
      %p43 = scmp.ne.s32.totalorder %s29, %s30
      %p44 = scmp.eq.s32.totalorder %s22, 3
      %p45 = por %p43, %p44
      %p47 = scmp.ne.s32.totalorder %s30, %s46
      %p48 = scmp.eq.s32.totalorder %s22, 0
      %p49 = por %p47, %p48
      %s51 = sadd.s32 %s50, 1
      %p54 = scmp.eq.s32.totalorder %s16, 3
      %p55 = scmp.ne.s32.totalorder %s50, %s52
      %p56 = scmp.eq.s32.totalorder %s16, 0
      %p57 = por %p55, %p56
      %p58 = scmp.ne.s32.totalorder %s50, %s52
      %p59 = scmp.eq.s32.totalorder %s21, 3
      %p60 = por %p58, %p59
      %p61 = scmp.ne.s32.totalorder %s52, %s53
      %p62 = scmp.eq.s32.totalorder %s21, 0
      %p63 = por %p61, %p62
      %p64 = scmp.ne.s32.totalorder %s52, %s53
      %p65 = scmp.eq.s32.totalorder %s22, 3
      %p66 = por %p64, %p65
      %p68 = scmp.ne.s32.totalorder %s53, %s67
      %p69 = scmp.eq.s32.totalorder %s22, 0
      %p70 = por %p68, %p69
      %s72 = sadd.s32 %s71, 1
      %p75 = scmp.eq.s32.totalorder %s16, 3
      %p76 = scmp.ne.s32.totalorder %s71, %s73
      %p77 = scmp.eq.s32.totalorder %s16, 0
      %p78 = por %p76, %p77
      %p79 = scmp.ne.s32.totalorder %s71, %s73
      %p80 = scmp.eq.s32.totalorder %s21, 3
      %p81 = por %p79, %p80
      %p82 = scmp.ne.s32.totalorder %s73, %s74
      %p83 = scmp.eq.s32.totalorder %s21, 0
      %p84 = por %p82, %p83
      %p85 = scmp.ne.s32.totalorder %s73, %s74
      %p86 = scmp.eq.s32.totalorder %s22, 3
      %p87 = por %p85, %p86
      %p89 = scmp.ne.s32.totalorder %s74, %s88
      %p90 = scmp.eq.s32.totalorder %s22, 0
      %p91 = por %p89, %p90
      %s93 = sadd.s32 %s92, 1
      %p96 = scmp.eq.s32.totalorder %s16, 3
      %p97 = scmp.ne.s32.totalorder %s92, %s94
      %p98 = scmp.eq.s32.totalorder %s16, 0
      %p99 = por %p97, %p98
      %p100 = scmp.ne.s32.totalorder %s92, %s94
      %p101 = scmp.eq.s32.totalorder %s21, 3
      %p102 = por %p100, %p101
      %p103 = scmp.ne.s32.totalorder %s94, %s95
      %p104 = scmp.eq.s32.totalorder %s21, 0
      %p105 = por %p103, %p104
      %p106 = scmp.ne.s32.totalorder %s94, %s95
      %p107 = scmp.eq.s32.totalorder %s22, 3
      %p108 = por %p106, %p107
      %p110 = scmp.ne.s32.totalorder %s95, %s109
      %p111 = scmp.eq.s32.totalorder %s22, 0
      %p112 = por %p110, %p111
      %s114 = sadd.s32 %s113, 1
      %p117 = scmp.eq.s32.totalorder %s16, 3
      %p118 = scmp.ne.s32.totalorder %s113, %s115
      %p119 = scmp.eq.s32.totalorder %s16, 0
      %p120 = por %p118, %p119
      %p121 = scmp.ne.s32.totalorder %s113, %s115
      %p122 = scmp.eq.s32.totalorder %s21, 3
      %p123 = por %p121, %p122
      %p124 = scmp.ne.s32.totalorder %s115, %s116
      %p125 = scmp.eq.s32.totalorder %s21, 0
      %p126 = por %p124, %p125
      %p127 = scmp.ne.s32.totalorder %s115, %s116
      %p128 = scmp.eq.s32.totalorder %s22, 3
      %p129 = por %p127, %p128
      %p131 = scmp.ne.s32.totalorder %s116, %s130
      %p132 = scmp.eq.s32.totalorder %s22, 0
      %p133 = por %p131, %p132
      %s135 = sadd.s32 %s134, 1
      %p138 = scmp.eq.s32.totalorder %s16, 3
      %p139 = scmp.ne.s32.totalorder %s134, %s136
      %p140 = scmp.eq.s32.totalorder %s16, 0
      %p141 = por %p139, %p140
      %p142 = scmp.ne.s32.totalorder %s134, %s136
      %p143 = scmp.eq.s32.totalorder %s21, 3
      %p144 = por %p142, %p143
      %p145 = scmp.ne.s32.totalorder %s136, %s137
      %p146 = scmp.eq.s32.totalorder %s21, 0
      %p147 = por %p145, %p146
      %p148 = scmp.ne.s32.totalorder %s136, %s137
      %p149 = scmp.eq.s32.totalorder %s22, 3
      %p150 = por %p148, %p149
      %p152 = scmp.ne.s32.totalorder %s137, %s151
      %p153 = scmp.eq.s32.totalorder %s22, 0
      %p154 = por %p152, %p153
      %s156 = sadd.s32 %s155, 1
      %p159 = scmp.eq.s32.totalorder %s16, 3
      %p160 = scmp.ne.s32.totalorder %s155, %s157
      %p161 = scmp.eq.s32.totalorder %s16, 0
      %p162 = por %p160, %p161
      %p163 = scmp.ne.s32.totalorder %s155, %s157
      %p164 = scmp.eq.s32.totalorder %s21, 3
      %p165 = por %p163, %p164
      %p166 = scmp.ne.s32.totalorder %s157, %s158
      %p167 = scmp.eq.s32.totalorder %s21, 0
      %p168 = por %p166, %p167
      %p169 = scmp.ne.s32.totalorder %s157, %s158
      %p170 = scmp.eq.s32.totalorder %s22, 3
      %p171 = por %p169, %p170
      %p173 = scmp.ne.s32.totalorder %s158, %s172
      %p174 = scmp.eq.s32.totalorder %s22, 0
      %p175 = por %p173, %p174
      %s176 = ssub.s32 %s16, %s23
      %p177 = scmp.eq.s32.totalorder %s176, 0
      %s179 = sadd.s32 %s178, 1
      %s180 = scalar_select %p177, %s178, %s179
      %p183 = pneg %p177
      %p184 = scmp.eq.s32.totalorder %s16, 3
      %p185 = por %p183, %p184
      %p186 = scmp.ne.s32.totalorder %s178, %s181
      %p187 = scmp.eq.s32.totalorder %s16, 0
      %p188 = por %p186, %p187
      %p189 = scmp.ne.s32.totalorder %s178, %s181
      %p190 = scmp.eq.s32.totalorder %s21, 3
      %p191 = por %p189, %p190
      %p192 = scmp.ne.s32.totalorder %s181, %s182
      %p193 = scmp.eq.s32.totalorder %s21, 0
      %p194 = por %p192, %p193
      %p195 = scmp.ne.s32.totalorder %s181, %s182
      %p196 = scmp.eq.s32.totalorder %s22, 3
      %p197 = por %p195, %p196
      %p199 = scmp.ne.s32.totalorder %s182, %s198
      %p200 = scmp.eq.s32.totalorder %s22, 0
      %p201 = por %p199, %p200
      %p202 = scmp.le.s32.totalorder 1, %s16
      %p203 = scmp.lt.s32.totalorder %s16, 5
      %p204 = pnand %p202, %p203
      %p205 = pneg %p204
      // Predicated region
      $region9: #{tpu_custom_call.1} parent=5 // pred_check
        _
      $region10: #{tpu_custom_call.1} parent=5 // pred_check_branch
        %207 = sbr.rel (%p204) target = $region12
      $region11: #{tpu_custom_call.1} parent=5 // pred_region
        %s208 = ssub.s32 %s16, 1
        // Predicated region
        $region13: #{tpu_custom_call.1} parent=11 // pred_check
          %p209 = pneg %p63
        $region14: #{tpu_custom_call.1} parent=11 // pred_check_branch
          %211 = sbr.rel (%p209) target = $region16
        $region15: #{tpu_custom_call.1} parent=11 // pred_region
          _
        $region16: #{tpu_custom_call.1} parent=11 // pred_fallthru
          _
        // Predicated region
        $region17: #{tpu_custom_call.1} parent=11 // pred_check
          %p212 = pneg %p84
        $region18: #{tpu_custom_call.1} parent=11 // pred_check_branch
          %214 = sbr.rel (%p212) target = $region20
        $region19: #{tpu_custom_call.1} parent=11 // pred_region
          _
        $region20: #{tpu_custom_call.1} parent=11 // pred_fallthru
          _
        // Predicated region
        $region21: #{tpu_custom_call.1} parent=11 // pred_check
          %p215 = pneg %p105
        $region22: #{tpu_custom_call.1} parent=11 // pred_check_branch
          %217 = sbr.rel (%p215) target = $region24
        $region23: #{tpu_custom_call.1} parent=11 // pred_region
          _
        $region24: #{tpu_custom_call.1} parent=11 // pred_fallthru
          _
        // Predicated region
        $region25: #{tpu_custom_call.1} parent=11 // pred_check
          %p218 = pneg %p126
        $region26: #{tpu_custom_call.1} parent=11 // pred_check_branch
          %220 = sbr.rel (%p218) target = $region28
        $region27: #{tpu_custom_call.1} parent=11 // pred_region
          _
        $region28: #{tpu_custom_call.1} parent=11 // pred_fallthru
          _
        // Predicated region
        $region29: #{tpu_custom_call.1} parent=11 // pred_check
          %p221 = pneg %p147
        $region30: #{tpu_custom_call.1} parent=11 // pred_check_branch
          %223 = sbr.rel (%p221) target = $region32
        $region31: #{tpu_custom_call.1} parent=11 // pred_region
          _
        $region32: #{tpu_custom_call.1} parent=11 // pred_fallthru
          _
        // Predicated region
        $region33: #{tpu_custom_call.1} parent=11 // pred_check
          %p224 = pneg %p168
        $region34: #{tpu_custom_call.1} parent=11 // pred_check_branch
          %226 = sbr.rel (%p224) target = $region36
        $region35: #{tpu_custom_call.1} parent=11 // pred_region
          _
        $region36: #{tpu_custom_call.1} parent=11 // pred_fallthru
          _
      $region12: #{tpu_custom_call.1} parent=5 // pred_fallthru
        _
      %p227 = scmp.lt.s32.totalorder %s16, 4
      // Predicated region
      $region37: #{tpu_custom_call.1} parent=5 // pred_check
        %p228 = pneg %p227
      $region38: #{tpu_custom_call.1} parent=5 // pred_check_branch
        %230 = sbr.rel (%p228) target = $region40
      $region39: #{tpu_custom_call.1} parent=5 // pred_region
        // Predicated region
        $region41: #{tpu_custom_call.1} parent=39 // pred_check
          %p231 = pneg %p36
        $region42: #{tpu_custom_call.1} parent=39 // pred_check_branch
          %233 = sbr.rel (%p231) target = $region44
        $region43: #{tpu_custom_call.1} parent=39 // pred_region
          %s234 = smul.u32 2, %s16
          %p235 = scmp.lt.s32.totalorder %s234, 7
          %s236 = scalar_select %p235, %s234, 7
          %s237 = smul.addr %s236, 32
          %s238 = smul.addr %s237, 4
          %s239 = scalar_lea.vmem %s0, %s238
          %s240 = smul.u32 2, %s16
        $region44: #{tpu_custom_call.1} parent=39 // pred_fallthru
          _
      $region40: #{tpu_custom_call.1} parent=5 // pred_fallthru
        _
      %p241 = scmp.le.s32.totalorder 1, %s16
      %p242 = scmp.lt.s32.totalorder %s16, 5
      %p243 = pnand %p241, %p242
      %p244 = pneg %p243
      // Predicated region
      $region45: #{tpu_custom_call.1} parent=5 // pred_check
        _
      $region46: #{tpu_custom_call.1} parent=5 // pred_check_branch
        %246 = sbr.rel (%p243) target = $region48
      $region47: #{tpu_custom_call.1} parent=5 // pred_region
        %s247 = ssub.s32 %s16, 1
        %s248 = smul.u32 2, %s21
        %p249 = scmp.lt.s32.totalorder %s248, 7
        %s250 = scalar_select %p249, %s248, 7
        %s251 = smul.addr %s250, 32
        %s252 = smul.addr %s251, 4
        %s253 = scalar_lea.vmem %s0, %s252
        %p254 = pneg %p42
        %p255 = pneg %p39
        %p256 = pneg %p63
        %p257 = pneg %p60
        %p258 = pneg %p84
        %p259 = pneg %p81
        %p260 = pneg %p105
        %p261 = pneg %p102
        %p262 = pneg %p126
        %p263 = pneg %p123
        %p264 = pneg %p147
        %p265 = pneg %p144
        %p266 = pneg %p168
        %p267 = pneg %p165
        %p268 = pneg %p194
        %p269 = pneg %p191
        %s270 = sand.u32 %s181, 1
        %s271 = scalar_lea.sflag [#allocation4], %s270
        %s272 = sand.u32 %s181, 1
        %s273 = smul.addr %s272, 256
        %s274 = scalar_lea.vmem [#allocation3], %s273
        %s275 = smul.u32 2, %s21
        %p276 = scmp.lt.s32.totalorder %s275, 7
        %s277 = scalar_select %p276, %s275, 7
        %s278 = smul.addr %s277, 32
        %s279 = smul.addr %s278, 4
        %s280 = scalar_lea.vmem %s0, %s279
        %s281 = smul.u32 2, %s21
        %s282 = smul.u32 2, %s21
        %v284 = vld [vmem:[%s280] sm:$0xf]
        %v285 = vld [vmem:[%s280 + $0x4] sm:$0xf]
        %v286 = vld [vmem:[%s280 + $0x8] sm:$0xf]
        %v287 = vld [vmem:[%s280 + $0xc] sm:$0xf]
        %v288 = vld [vmem:[%s280 + $0x10] sm:$0xf]
        %v289 = vld [vmem:[%s280 + $0x14] sm:$0xf]
        %v290 = vld [vmem:[%s280 + $0x18] sm:$0xf]
        %v291 = vld [vmem:[%s280 + $0x1c] sm:$0xf]
        %v292 = vld [vmem:[%s280 + $0x20] sm:$0xf]
        %v293 = vld [vmem:[%s280 + $0x24] sm:$0xf]
        %v294 = vld [vmem:[%s280 + $0x28] sm:$0xf]
        %v295 = vld [vmem:[%s280 + $0x2c] sm:$0xf]
        %v296 = vld [vmem:[%s280 + $0x30] sm:$0xf]
        %v297 = vld [vmem:[%s280 + $0x34] sm:$0xf]
        %v298 = vld [vmem:[%s280 + $0x38] sm:$0xf]
        %v299 = vld [vmem:[%s280 + $0x3c] sm:$0xf]
        %v300 = vld [vmem:[%s280 + $0x40] sm:$0xf]
        %v301 = vld [vmem:[%s280 + $0x44] sm:$0xf]
        %v302 = vld [vmem:[%s280 + $0x48] sm:$0xf]
        %v303 = vld [vmem:[%s280 + $0x4c] sm:$0xf]
        %v304 = vld [vmem:[%s280 + $0x50] sm:$0xf]
        %v305 = vld [vmem:[%s280 + $0x54] sm:$0xf]
        %v306 = vld [vmem:[%s280 + $0x58] sm:$0xf]
        %v307 = vld [vmem:[%s280 + $0x5c] sm:$0xf]
        %v308 = vld [vmem:[%s280 + $0x60] sm:$0xf]
        %v309 = vld [vmem:[%s280 + $0x64] sm:$0xf]
        %v310 = vld [vmem:[%s280 + $0x68] sm:$0xf]
        %v311 = vld [vmem:[%s280 + $0x6c] sm:$0xf]
        %v312 = vld [vmem:[%s280 + $0x70] sm:$0xf]
        %v313 = vld [vmem:[%s280 + $0x74] sm:$0xf]
        %v314 = vld [vmem:[%s280 + $0x78] sm:$0xf]
        %v315 = vld [vmem:[%s280 + $0x7c] sm:$0xf]
        %v316 = vld [vmem:[%s280 + $0x80] sm:$0xf]
        %v317 = vld [vmem:[%s280 + $0x84] sm:$0xf]
        %v318 = vld [vmem:[%s280 + $0x88] sm:$0xf]
        %v319 = vld [vmem:[%s280 + $0x8c] sm:$0xf]
        %v320 = vld [vmem:[%s280 + $0x90] sm:$0xf]
        %v321 = vld [vmem:[%s280 + $0x94] sm:$0xf]
        %v322 = vld [vmem:[%s280 + $0x98] sm:$0xf]
        %v323 = vld [vmem:[%s280 + $0x9c] sm:$0xf]
        %v324 = vld [vmem:[%s280 + $0xa0] sm:$0xf]
        %v325 = vld [vmem:[%s280 + $0xa4] sm:$0xf]
        %v326 = vld [vmem:[%s280 + $0xa8] sm:$0xf]
        %v327 = vld [vmem:[%s280 + $0xac] sm:$0xf]
        %v328 = vld [vmem:[%s280 + $0xb0] sm:$0xf]
        %v329 = vld [vmem:[%s280 + $0xb4] sm:$0xf]
        %v330 = vld [vmem:[%s280 + $0xb8] sm:$0xf]
        %v331 = vld [vmem:[%s280 + $0xbc] sm:$0xf]
        %v332 = vld [vmem:[%s280 + $0xc0] sm:$0xf]
        %v333 = vld [vmem:[%s280 + $0xc4] sm:$0xf]
        %v334 = vld [vmem:[%s280 + $0xc8] sm:$0xf]
        %v335 = vld [vmem:[%s280 + $0xcc] sm:$0xf]
        %v336 = vld [vmem:[%s280 + $0xd0] sm:$0xf]
        %v337 = vld [vmem:[%s280 + $0xd4] sm:$0xf]
        %v338 = vld [vmem:[%s280 + $0xd8] sm:$0xf]
        %v339 = vld [vmem:[%s280 + $0xdc] sm:$0xf]
        %v340 = vld [vmem:[%s280 + $0xe0] sm:$0xf]
        %v341 = vld [vmem:[%s280 + $0xe4] sm:$0xf]
        %v342 = vld [vmem:[%s280 + $0xe8] sm:$0xf]
        %v343 = vld [vmem:[%s280 + $0xec] sm:$0xf]
        %v344 = vld [vmem:[%s280 + $0xf0] sm:$0xf]
        %v345 = vld [vmem:[%s280 + $0xf4] sm:$0xf]
        %v346 = vld [vmem:[%s280 + $0xf8] sm:$0xf]
        %v347 = vld [vmem:[%s280 + $0xfc] sm:$0xf]
        %v348 = vld [vmem:[%s1] sm:$0x3]
        %v349 = vld [vmem:[%s2] sm:$0x1]
        %v351 = vlaneseq
        %v352 = vshrl.u32 %v351, 7
        %v353 = vsub.s32 0, %v352
        %v354 = vrot.slane %v349, %v353
        %v420 = vunpack.c.l.b16 %v284
        %v421 = vunpack.c.l.b16 %v285
        %v422 = vunpack.c.l.b16 %v286
        %v423 = vunpack.c.l.b16 %v287
        %v424 = vunpack.c.l.b16 %v288
        %v425 = vunpack.c.l.b16 %v289
        %v426 = vunpack.c.l.b16 %v290
        %v427 = vunpack.c.l.b16 %v291
        %v428 = vunpack.c.l.b16 %v292
        %v429 = vunpack.c.l.b16 %v293
        %v430 = vunpack.c.l.b16 %v294
        %v431 = vunpack.c.l.b16 %v295
        %v432 = vunpack.c.l.b16 %v296
        %v433 = vunpack.c.l.b16 %v297
        %v434 = vunpack.c.l.b16 %v298
        %v435 = vunpack.c.l.b16 %v299
        %v436 = vunpack.c.l.b16 %v300
        %v437 = vunpack.c.l.b16 %v301
        %v438 = vunpack.c.l.b16 %v302
        %v439 = vunpack.c.l.b16 %v303
        %v440 = vunpack.c.l.b16 %v304
        %v441 = vunpack.c.l.b16 %v305
        %v442 = vunpack.c.l.b16 %v306
        %v443 = vunpack.c.l.b16 %v307
        %v444 = vunpack.c.l.b16 %v308
        %v445 = vunpack.c.l.b16 %v309
        %v446 = vunpack.c.l.b16 %v310
        %v447 = vunpack.c.l.b16 %v311
        %v448 = vunpack.c.l.b16 %v312
        %v449 = vunpack.c.l.b16 %v313
        %v450 = vunpack.c.l.b16 %v314
        %v451 = vunpack.c.l.b16 %v315
        %v452 = vunpack.c.l.b16 %v316
        %v453 = vunpack.c.l.b16 %v317
        %v454 = vunpack.c.l.b16 %v318
        %v455 = vunpack.c.l.b16 %v319
        %v456 = vunpack.c.l.b16 %v320
        %v457 = vunpack.c.l.b16 %v321
        %v458 = vunpack.c.l.b16 %v322
        %v459 = vunpack.c.l.b16 %v323
        %v460 = vunpack.c.l.b16 %v324
        %v461 = vunpack.c.l.b16 %v325
        %v462 = vunpack.c.l.b16 %v326
        %v463 = vunpack.c.l.b16 %v327
        %v464 = vunpack.c.l.b16 %v328
        %v465 = vunpack.c.l.b16 %v329
        %v466 = vunpack.c.l.b16 %v330
        %v467 = vunpack.c.l.b16 %v331
        %v468 = vunpack.c.l.b16 %v332
        %v469 = vunpack.c.l.b16 %v333
        %v470 = vunpack.c.l.b16 %v334
        %v471 = vunpack.c.l.b16 %v335
        %v472 = vunpack.c.l.b16 %v336
        %v473 = vunpack.c.l.b16 %v337
        %v474 = vunpack.c.l.b16 %v338
        %v475 = vunpack.c.l.b16 %v339
        %v476 = vunpack.c.l.b16 %v340
        %v477 = vunpack.c.l.b16 %v341
        %v478 = vunpack.c.l.b16 %v342
        %v479 = vunpack.c.l.b16 %v343
        %v480 = vunpack.c.l.b16 %v344
        %v481 = vunpack.c.l.b16 %v345
        %v482 = vunpack.c.l.b16 %v346
        %v483 = vunpack.c.l.b16 %v347
        %v484 = vpack.c.b16 %v421, %v420
        %v485 = vpack.c.b16 %v423, %v422
        %v486 = vpack.c.b16 %v425, %v424
        %v487 = vpack.c.b16 %v427, %v426
        %v488 = vpack.c.b16 %v429, %v428
        %v489 = vpack.c.b16 %v431, %v430
        %v490 = vpack.c.b16 %v433, %v432
        %v491 = vpack.c.b16 %v435, %v434
        %v492 = vpack.c.b16 %v437, %v436
        %v493 = vpack.c.b16 %v439, %v438
        %v494 = vpack.c.b16 %v441, %v440
        %v495 = vpack.c.b16 %v443, %v442
        %v496 = vpack.c.b16 %v445, %v444
        %v497 = vpack.c.b16 %v447, %v446
        %v498 = vpack.c.b16 %v449, %v448
        %v499 = vpack.c.b16 %v451, %v450
        %v500 = vpack.c.b16 %v453, %v452
        %v501 = vpack.c.b16 %v455, %v454
        %v502 = vpack.c.b16 %v457, %v456
        %v503 = vpack.c.b16 %v459, %v458
        %v504 = vpack.c.b16 %v461, %v460
        %v505 = vpack.c.b16 %v463, %v462
        %v506 = vpack.c.b16 %v465, %v464
        %v507 = vpack.c.b16 %v467, %v466
        %v508 = vpack.c.b16 %v469, %v468
        %v509 = vpack.c.b16 %v471, %v470
        %v510 = vpack.c.b16 %v473, %v472
        %v511 = vpack.c.b16 %v475, %v474
        %v512 = vpack.c.b16 %v477, %v476
        %v513 = vpack.c.b16 %v479, %v478
        %v514 = vpack.c.b16 %v481, %v480
        %v515 = vpack.c.b16 %v483, %v482
        %vm516 = vcmask 31744
        %v518 = vsel %vm516, %v484, 0
        %v521 = vsel %vm516, %v485, 0
        %v524 = vsel %vm516, %v486, 0
        %v527 = vsel %vm516, %v487, 0
        %v530 = vsel %vm516, %v488, 0
        %v533 = vsel %vm516, %v489, 0
        %v536 = vsel %vm516, %v490, 0
        %v539 = vsel %vm516, %v491, 0
        %v542 = vsel %vm516, %v492, 0
        %v545 = vsel %vm516, %v493, 0
        %v548 = vsel %vm516, %v494, 0
        %v551 = vsel %vm516, %v495, 0
        %v554 = vsel %vm516, %v496, 0
        %v557 = vsel %vm516, %v497, 0
        %v560 = vsel %vm516, %v498, 0
        %v563 = vsel %vm516, %v499, 0
        %v566 = vsel %vm516, %v500, 0
        %v569 = vsel %vm516, %v501, 0
        %v572 = vsel %vm516, %v502, 0
        %v575 = vsel %vm516, %v503, 0
        %v578 = vsel %vm516, %v504, 0
        %v581 = vsel %vm516, %v505, 0
        %v584 = vsel %vm516, %v506, 0
        %v587 = vsel %vm516, %v507, 0
        %v590 = vsel %vm516, %v508, 0
        %v593 = vsel %vm516, %v509, 0
        %v596 = vsel %vm516, %v510, 0
        %v599 = vsel %vm516, %v511, 0
        %v602 = vsel %vm516, %v512, 0
        %v605 = vsel %vm516, %v513, 0
        %v608 = vsel %vm516, %v514, 0
        %v611 = vsel %vm516, %v515, 0
        %vm613 = vcmask 1041408
        %v615 = vsel %vm613, %v348, 0
        %617 = vmatprep.subr.bf16.mxu0 0
        %618 = vmatpush1.bf16.msra.mxu0 %v615
        %619 = vmatprep.subr.bf16.mxu0 0
        %620 = vmatpush1.bf16.msra.mxu0 0
        %621 = vmatprep.subr.bf16.mxu0 0
        %622 = vmatpush1.bf16.msra.mxu0 0
        %623 = vmatprep.subr.bf16.mxu0 0
        %624 = vmatpush1.bf16.msra.mxu0 0
        %625 = vmatprep.subr.bf16.mxu0 0
        %626 = vmatpush1.bf16.msra.mxu0 0
        %627 = vmatprep.subr.bf16.mxu0 0
        %628 = vmatpush1.bf16.msra.mxu0 0
        %629 = vmatprep.subr.bf16.mxu0 0
        %630 = vmatpush1.bf16.msra.mxu0 0
        %631 = vmatprep.subr.bf16.mxu0 0
        %632 = vmatpush1.bf16.msra.mxu0 0
        %633 = vmatprep.subr.bf16.mxu0 0
        %634 = vmatpush1.bf16.msra.mxu0 0
        %635 = vmatprep.subr.bf16.mxu0 0
        %636 = vmatpush1.bf16.msra.mxu0 0
        %637 = vmatprep.subr.bf16.mxu0 0
        %638 = vmatpush1.bf16.msra.mxu0 0
        %639 = vmatprep.subr.bf16.mxu0 0
        %640 = vmatpush1.bf16.msra.mxu0 0
        %641 = vmatprep.subr.bf16.mxu0 0
        %642 = vmatpush1.bf16.msra.mxu0 0
        %643 = vmatprep.subr.bf16.mxu0 0
        %644 = vmatpush1.bf16.msra.mxu0 0
        %645 = vmatprep.subr.bf16.mxu0 0
        %646 = vmatpush1.bf16.msra.mxu0 0
        %647 = vmatprep.subr.bf16.mxu0 0
        %648 = vmatpush1.bf16.msra.mxu0 0
        %649 = vmatprep.mubr.bf16.mxu0 0
        %650 = vmatmul.mubr.bf16.gmra.mrb[0].mxu0 %v518
        %v651 = vpop.f32.mrb[0].mxu0
        %v652 = vadd.f32 %v354, %v651
        %v653 = vpop.f32.mrb[0].mxu0
        %v654 = vpop.f32.mrb[0].mxu0
        %v655 = vadd.f32 %v354, %v654
        %v656 = vpop.f32.mrb[0].mxu0
        %657 = vmatprep.mubr.bf16.mxu0 0
        %658 = vmatmul.mubr.bf16.gmra.mrb[0].mxu0 %v521
        %v659 = vpop.f32.mrb[0].mxu0
        %v660 = vadd.f32 %v354, %v659
        %v661 = vpop.f32.mrb[0].mxu0
        %v662 = vpop.f32.mrb[0].mxu0
        %v663 = vadd.f32 %v354, %v662
        %v664 = vpop.f32.mrb[0].mxu0
        %665 = vmatprep.mubr.bf16.mxu0 0
        %666 = vmatmul.mubr.bf16.gmra.mrb[0].mxu0 %v524
        %v667 = vpop.f32.mrb[0].mxu0
        %v668 = vadd.f32 %v354, %v667
        %v669 = vpop.f32.mrb[0].mxu0
        %v670 = vpop.f32.mrb[0].mxu0
        %v671 = vadd.f32 %v354, %v670
        %v672 = vpop.f32.mrb[0].mxu0
        %673 = vmatprep.mubr.bf16.mxu0 0
        %674 = vmatmul.mubr.bf16.gmra.mrb[0].mxu0 %v527
        %v675 = vpop.f32.mrb[0].mxu0
        %v676 = vadd.f32 %v354, %v675
        %v677 = vpop.f32.mrb[0].mxu0
        %v678 = vpop.f32.mrb[0].mxu0
        %v679 = vadd.f32 %v354, %v678
        %v680 = vpop.f32.mrb[0].mxu0
        %681 = vmatprep.mubr.bf16.mxu0 0
        %682 = vmatmul.mubr.bf16.gmra.mrb[0].mxu0 %v530
        %v683 = vpop.f32.mrb[0].mxu0
        %v684 = vadd.f32 %v354, %v683
        %v685 = vpop.f32.mrb[0].mxu0
        %v686 = vpop.f32.mrb[0].mxu0
        %v687 = vadd.f32 %v354, %v686
        %v688 = vpop.f32.mrb[0].mxu0
        %689 = vmatprep.mubr.bf16.mxu0 0
        %690 = vmatmul.mubr.bf16.gmra.mrb[0].mxu0 %v533
        %v691 = vpop.f32.mrb[0].mxu0
        %v692 = vadd.f32 %v354, %v691
        %v693 = vpop.f32.mrb[0].mxu0
        %v694 = vpop.f32.mrb[0].mxu0
        %v695 = vadd.f32 %v354, %v694
        %v696 = vpop.f32.mrb[0].mxu0
        %697 = vmatprep.mubr.bf16.mxu0 0
        %698 = vmatmul.mubr.bf16.gmra.mrb[0].mxu0 %v536
        %v699 = vpop.f32.mrb[0].mxu0
        %v700 = vadd.f32 %v354, %v699
        %v701 = vpop.f32.mrb[0].mxu0
        %v702 = vpop.f32.mrb[0].mxu0
        %v703 = vadd.f32 %v354, %v702
        %v704 = vpop.f32.mrb[0].mxu0
        %705 = vmatprep.mubr.bf16.mxu0 0
        %706 = vmatmul.mubr.bf16.gmra.mrb[0].mxu0 %v539
        %v707 = vpop.f32.mrb[0].mxu0
        %v708 = vadd.f32 %v354, %v707
        %v709 = vpop.f32.mrb[0].mxu0
        %v710 = vpop.f32.mrb[0].mxu0
        %v711 = vadd.f32 %v354, %v710
        %v712 = vpop.f32.mrb[0].mxu0
        %713 = vmatprep.mubr.bf16.mxu0 0
        %714 = vmatmul.mubr.bf16.gmra.mrb[0].mxu0 %v542
        %v715 = vpop.f32.mrb[0].mxu0
        %v716 = vadd.f32 %v354, %v715
        %v717 = vpop.f32.mrb[0].mxu0
        %v718 = vpop.f32.mrb[0].mxu0
        %v719 = vadd.f32 %v354, %v718
        %v720 = vpop.f32.mrb[0].mxu0
        %721 = vmatprep.mubr.bf16.mxu0 0
        %722 = vmatmul.mubr.bf16.gmra.mrb[0].mxu0 %v545
        %v723 = vpop.f32.mrb[0].mxu0
        %v724 = vadd.f32 %v354, %v723
        %v725 = vpop.f32.mrb[0].mxu0
        %v726 = vpop.f32.mrb[0].mxu0
        %v727 = vadd.f32 %v354, %v726
        %v728 = vpop.f32.mrb[0].mxu0
        %729 = vmatprep.mubr.bf16.mxu0 0
        %730 = vmatmul.mubr.bf16.gmra.mrb[0].mxu0 %v548
        %v731 = vpop.f32.mrb[0].mxu0
        %v732 = vadd.f32 %v354, %v731
        %v733 = vpop.f32.mrb[0].mxu0
        %v734 = vpop.f32.mrb[0].mxu0
        %v735 = vadd.f32 %v354, %v734
        %v736 = vpop.f32.mrb[0].mxu0
        %737 = vmatprep.mubr.bf16.mxu0 0
        %738 = vmatmul.mubr.bf16.gmra.mrb[0].mxu0 %v551
        %v739 = vpop.f32.mrb[0].mxu0
        %v740 = vadd.f32 %v354, %v739
        %v741 = vpop.f32.mrb[0].mxu0
        %v742 = vpop.f32.mrb[0].mxu0
        %v743 = vadd.f32 %v354, %v742
        %v744 = vpop.f32.mrb[0].mxu0
        %745 = vmatprep.mubr.bf16.mxu0 0
        %746 = vmatmul.mubr.bf16.gmra.mrb[0].mxu0 %v554
        %v747 = vpop.f32.mrb[0].mxu0
        %v748 = vadd.f32 %v354, %v747
        %v749 = vpop.f32.mrb[0].mxu0
        %v750 = vpop.f32.mrb[0].mxu0
        %v751 = vadd.f32 %v354, %v750
        %v752 = vpop.f32.mrb[0].mxu0
        %753 = vmatprep.mubr.bf16.mxu0 0
        %754 = vmatmul.mubr.bf16.gmra.mrb[0].mxu0 %v557
        %v755 = vpop.f32.mrb[0].mxu0
        %v756 = vadd.f32 %v354, %v755
        %v757 = vpop.f32.mrb[0].mxu0
        %v758 = vpop.f32.mrb[0].mxu0
        %v759 = vadd.f32 %v354, %v758
        %v760 = vpop.f32.mrb[0].mxu0
        %761 = vmatprep.mubr.bf16.mxu0 0
        %762 = vmatmul.mubr.bf16.gmra.mrb[0].mxu0 %v560
        %v763 = vpop.f32.mrb[0].mxu0
        %v764 = vadd.f32 %v354, %v763
        %v765 = vpop.f32.mrb[0].mxu0
        %v766 = vpop.f32.mrb[0].mxu0
        %v767 = vadd.f32 %v354, %v766
        %v768 = vpop.f32.mrb[0].mxu0
        %769 = vmatprep.mubr.bf16.mxu0 0
        %770 = vmatmul.mubr.bf16.gmra.mrb[0].mxu0 %v563
        %v771 = vpop.f32.mrb[0].mxu0
        %v772 = vadd.f32 %v354, %v771
        %v773 = vpop.f32.mrb[0].mxu0
        %v774 = vpop.f32.mrb[0].mxu0
        %v775 = vadd.f32 %v354, %v774
        %v776 = vpop.f32.mrb[0].mxu0
        %777 = vmatprep.mubr.bf16.mxu0 0
        %778 = vmatmul.mubr.bf16.gmra.mrb[0].mxu0 %v566
        %v779 = vpop.f32.mrb[0].mxu0
        %v780 = vadd.f32 %v354, %v779
        %v781 = vpop.f32.mrb[0].mxu0
        %v782 = vpop.f32.mrb[0].mxu0
        %v783 = vadd.f32 %v354, %v782
        %v784 = vpop.f32.mrb[0].mxu0
        %785 = vmatprep.mubr.bf16.mxu0 0
        %786 = vmatmul.mubr.bf16.gmra.mrb[0].mxu0 %v569
        %v787 = vpop.f32.mrb[0].mxu0
        %v788 = vadd.f32 %v354, %v787
        %v789 = vpop.f32.mrb[0].mxu0
        %v790 = vpop.f32.mrb[0].mxu0
        %v791 = vadd.f32 %v354, %v790
        %v792 = vpop.f32.mrb[0].mxu0
        %793 = vmatprep.mubr.bf16.mxu0 0
        %794 = vmatmul.mubr.bf16.gmra.mrb[0].mxu0 %v572
        %v795 = vpop.f32.mrb[0].mxu0
        %v796 = vadd.f32 %v354, %v795
        %v797 = vpop.f32.mrb[0].mxu0
        %v798 = vpop.f32.mrb[0].mxu0
        %v799 = vadd.f32 %v354, %v798
        %v800 = vpop.f32.mrb[0].mxu0
        %801 = vmatprep.mubr.bf16.mxu0 0
        %802 = vmatmul.mubr.bf16.gmra.mrb[0].mxu0 %v575
        %v803 = vpop.f32.mrb[0].mxu0
        %v804 = vadd.f32 %v354, %v803
        %v805 = vpop.f32.mrb[0].mxu0
        %v806 = vpop.f32.mrb[0].mxu0
        %v807 = vadd.f32 %v354, %v806
        %v808 = vpop.f32.mrb[0].mxu0
        %809 = vmatprep.mubr.bf16.mxu0 0
        %810 = vmatmul.mubr.bf16.gmra.mrb[0].mxu0 %v578
        %v811 = vpop.f32.mrb[0].mxu0
        %v812 = vadd.f32 %v354, %v811
        %v813 = vpop.f32.mrb[0].mxu0
        %v814 = vpop.f32.mrb[0].mxu0
        %v815 = vadd.f32 %v354, %v814
        %v816 = vpop.f32.mrb[0].mxu0
        %817 = vmatprep.mubr.bf16.mxu0 0
        %818 = vmatmul.mubr.bf16.gmra.mrb[0].mxu0 %v581
        %v819 = vpop.f32.mrb[0].mxu0
        %v820 = vadd.f32 %v354, %v819
        %v821 = vpop.f32.mrb[0].mxu0
        %v822 = vpop.f32.mrb[0].mxu0
        %v823 = vadd.f32 %v354, %v822
        %v824 = vpop.f32.mrb[0].mxu0
        %825 = vmatprep.mubr.bf16.mxu0 0
        %826 = vmatmul.mubr.bf16.gmra.mrb[0].mxu0 %v584
        %v827 = vpop.f32.mrb[0].mxu0
        %v828 = vadd.f32 %v354, %v827
        %v829 = vpop.f32.mrb[0].mxu0
        %v830 = vpop.f32.mrb[0].mxu0
        %v831 = vadd.f32 %v354, %v830
        %v832 = vpop.f32.mrb[0].mxu0
        %833 = vmatprep.mubr.bf16.mxu0 0
        %834 = vmatmul.mubr.bf16.gmra.mrb[0].mxu0 %v587
        %v835 = vpop.f32.mrb[0].mxu0
        %v836 = vadd.f32 %v354, %v835
        %v837 = vpop.f32.mrb[0].mxu0
        %v838 = vpop.f32.mrb[0].mxu0
        %v839 = vadd.f32 %v354, %v838
        %v840 = vpop.f32.mrb[0].mxu0
        %841 = vmatprep.mubr.bf16.mxu0 0
        %842 = vmatmul.mubr.bf16.gmra.mrb[0].mxu0 %v590
        %v843 = vpop.f32.mrb[0].mxu0
        %v844 = vadd.f32 %v354, %v843
        %v845 = vpop.f32.mrb[0].mxu0
        %v846 = vpop.f32.mrb[0].mxu0
        %v847 = vadd.f32 %v354, %v846
        %v848 = vpop.f32.mrb[0].mxu0
        %849 = vmatprep.mubr.bf16.mxu0 0
        %850 = vmatmul.mubr.bf16.gmra.mrb[0].mxu0 %v593
        %v851 = vpop.f32.mrb[0].mxu0
        %v852 = vadd.f32 %v354, %v851
        %v853 = vpop.f32.mrb[0].mxu0
        %v854 = vpop.f32.mrb[0].mxu0
        %v855 = vadd.f32 %v354, %v854
        %v856 = vpop.f32.mrb[0].mxu0
        %857 = vmatprep.mubr.bf16.mxu0 0
        %858 = vmatmul.mubr.bf16.gmra.mrb[0].mxu0 %v596
        %v859 = vpop.f32.mrb[0].mxu0
        %v860 = vadd.f32 %v354, %v859
        %v861 = vpop.f32.mrb[0].mxu0
        %v862 = vpop.f32.mrb[0].mxu0
        %v863 = vadd.f32 %v354, %v862
        %v864 = vpop.f32.mrb[0].mxu0
        %865 = vmatprep.mubr.bf16.mxu0 0
        %866 = vmatmul.mubr.bf16.gmra.mrb[0].mxu0 %v599
        %v867 = vpop.f32.mrb[0].mxu0
        %v868 = vadd.f32 %v354, %v867
        %v869 = vpop.f32.mrb[0].mxu0
        %v870 = vpop.f32.mrb[0].mxu0
        %v871 = vadd.f32 %v354, %v870
        %v872 = vpop.f32.mrb[0].mxu0
        %873 = vmatprep.mubr.bf16.mxu0 0
        %874 = vmatmul.mubr.bf16.gmra.mrb[0].mxu0 %v602
        %v875 = vpop.f32.mrb[0].mxu0
        %v876 = vadd.f32 %v354, %v875
        %v877 = vpop.f32.mrb[0].mxu0
        %v878 = vpop.f32.mrb[0].mxu0
        %v879 = vadd.f32 %v354, %v878
        %v880 = vpop.f32.mrb[0].mxu0
        %881 = vmatprep.mubr.bf16.mxu0 0
        %882 = vmatmul.mubr.bf16.gmra.mrb[0].mxu0 %v605
        %v883 = vpop.f32.mrb[0].mxu0
        %v884 = vadd.f32 %v354, %v883
        %v885 = vpop.f32.mrb[0].mxu0
        %v886 = vpop.f32.mrb[0].mxu0
        %v887 = vadd.f32 %v354, %v886
        %v888 = vpop.f32.mrb[0].mxu0
        %889 = vmatprep.mubr.bf16.mxu0 0
        %890 = vmatmul.mubr.bf16.gmra.mrb[0].mxu0 %v608
        %v891 = vpop.f32.mrb[0].mxu0
        %v892 = vadd.f32 %v354, %v891
        %v893 = vpop.f32.mrb[0].mxu0
        %v894 = vpop.f32.mrb[0].mxu0
        %v895 = vadd.f32 %v354, %v894
        %v896 = vpop.f32.mrb[0].mxu0
        %897 = vmatprep.mubr.bf16.mxu0 0
        %898 = vmatmul.mubr.bf16.gmra.mrb[0].mxu0 %v611
        %v899 = vpop.f32.mrb[0].mxu0
        %v900 = vadd.f32 %v354, %v899
        %v901 = vpop.f32.mrb[0].mxu0
        %v902 = vpop.f32.mrb[0].mxu0
        %v903 = vadd.f32 %v354, %v902
        %v904 = vpop.f32.mrb[0].mxu0
        %905 = vdwg.mxu0
        %v906 = vmax.f32 %v652, 0.0
        %v907 = vmax.f32 %v655, 0.0
        %v908 = vmax.f32 %v660, 0.0
        %v909 = vmax.f32 %v663, 0.0
        %v910 = vmax.f32 %v668, 0.0
        %v911 = vmax.f32 %v671, 0.0
        %v912 = vmax.f32 %v676, 0.0
        %v913 = vmax.f32 %v679, 0.0
        %v914 = vmax.f32 %v684, 0.0
        %v915 = vmax.f32 %v687, 0.0
        %v916 = vmax.f32 %v692, 0.0
        %v917 = vmax.f32 %v695, 0.0
        %v918 = vmax.f32 %v700, 0.0
        %v919 = vmax.f32 %v703, 0.0
        %v920 = vmax.f32 %v708, 0.0
        %v921 = vmax.f32 %v711, 0.0
        %v922 = vmax.f32 %v716, 0.0
        %v923 = vmax.f32 %v719, 0.0
        %v924 = vmax.f32 %v724, 0.0
        %v925 = vmax.f32 %v727, 0.0
        %v926 = vmax.f32 %v732, 0.0
        %v927 = vmax.f32 %v735, 0.0
        %v928 = vmax.f32 %v740, 0.0
        %v929 = vmax.f32 %v743, 0.0
        %v930 = vmax.f32 %v748, 0.0
        %v931 = vmax.f32 %v751, 0.0
        %v932 = vmax.f32 %v756, 0.0
        %v933 = vmax.f32 %v759, 0.0
        %v934 = vmax.f32 %v764, 0.0
        %v935 = vmax.f32 %v767, 0.0
        %v936 = vmax.f32 %v772, 0.0
        %v937 = vmax.f32 %v775, 0.0
        %v938 = vmax.f32 %v780, 0.0
        %v939 = vmax.f32 %v783, 0.0
        %v940 = vmax.f32 %v788, 0.0
        %v941 = vmax.f32 %v791, 0.0
        %v942 = vmax.f32 %v796, 0.0
        %v943 = vmax.f32 %v799, 0.0
        %v944 = vmax.f32 %v804, 0.0
        %v945 = vmax.f32 %v807, 0.0
        %v946 = vmax.f32 %v812, 0.0
        %v947 = vmax.f32 %v815, 0.0
        %v948 = vmax.f32 %v820, 0.0
        %v949 = vmax.f32 %v823, 0.0
        %v950 = vmax.f32 %v828, 0.0
        %v951 = vmax.f32 %v831, 0.0
        %v952 = vmax.f32 %v836, 0.0
        %v953 = vmax.f32 %v839, 0.0
        %v954 = vmax.f32 %v844, 0.0
        %v955 = vmax.f32 %v847, 0.0
        %v956 = vmax.f32 %v852, 0.0
        %v957 = vmax.f32 %v855, 0.0
        %v958 = vmax.f32 %v860, 0.0
        %v959 = vmax.f32 %v863, 0.0
        %v960 = vmax.f32 %v868, 0.0
        %v961 = vmax.f32 %v871, 0.0
        %v962 = vmax.f32 %v876, 0.0
        %v963 = vmax.f32 %v879, 0.0
        %v964 = vmax.f32 %v884, 0.0
        %v965 = vmax.f32 %v887, 0.0
        %v966 = vmax.f32 %v892, 0.0
        %v967 = vmax.f32 %v895, 0.0
        %v968 = vmax.f32 %v900, 0.0
        %v969 = vmax.f32 %v903, 0.0
        %vm970 = vcmask 27648
        %971 = vst.msk [vmem:[#allocation2] sm:$0xf] %vm970, 0
        %972 = vst.msk [vmem:[#allocation2 + $0x4] sm:$0xf] %vm970, 0
        %vm973 = vcmask 24576
        %974 = vst.msk [vmem:[#allocation2 + $0x8] sm:$0x1] %vm973, 0
        %975 = vst.msk [vmem:[#allocation2 + $0xd8] sm:$0xf] %vm970, 0
        %976 = vst.msk [vmem:[#allocation2 + $0xdc] sm:$0xf] %vm970, 0
        %977 = vst.msk [vmem:[#allocation2 + $0xe0] sm:$0x1] %vm973, 0
        %s978 = scalar_lea.vmem [#allocation2], 204
        %979 = vst.msk [vmem:[%s978] sm:$0xf] %vm970, 0
        %980 = vst.msk [vmem:[%s978 + $0x4] sm:$0xf] %vm970, 0
        %981 = vst.msk [vmem:[%s978 + $0x8] sm:$0x1] %vm973, 0
        %982 = vst.msk [vmem:[%s978 + $0xd8] sm:$0xf] %vm970, 0
        %983 = vst.msk [vmem:[%s978 + $0xdc] sm:$0xf] %vm970, 0
        %984 = vst.msk [vmem:[%s978 + $0xe0] sm:$0x1] %vm973, 0
        %vm985 = vcmask 24576
        %vm986 = vsmask.f32 256
        %vm987 = vmand %vm985, %vm986
        %v988 = vld [vmem:[#allocation2] sm:$0x1]
        %v989 = vsel %vm987, 0, %v988
        %990 = vst [vmem:[#allocation2] sm:$0x1] %v989
        %v991 = vld [vmem:[#allocation2 + $0xc] sm:$0x1]
        %v992 = vsel %vm987, 0, %v991
        %993 = vst [vmem:[#allocation2 + $0xc] sm:$0x1] %v992
        %v994 = vld [vmem:[#allocation2 + $0x18] sm:$0x1]
        %v995 = vsel %vm987, 0, %v994
        %996 = vst [vmem:[#allocation2 + $0x18] sm:$0x1] %v995
        %v997 = vld [vmem:[#allocation2 + $0x24] sm:$0x1]
        %v998 = vsel %vm987, 0, %v997
        %999 = vst [vmem:[#allocation2 + $0x24] sm:$0x1] %v998
        %v1000 = vld [vmem:[#allocation2 + $0x30] sm:$0x1]
        %v1001 = vsel %vm987, 0, %v1000
        %1002 = vst [vmem:[#allocation2 + $0x30] sm:$0x1] %v1001
        %v1003 = vld [vmem:[#allocation2 + $0x3c] sm:$0x1]
        %v1004 = vsel %vm987, 0, %v1003
        %1005 = vst [vmem:[#allocation2 + $0x3c] sm:$0x1] %v1004
        %v1006 = vld [vmem:[#allocation2 + $0x48] sm:$0x1]
        %v1007 = vsel %vm987, 0, %v1006
        %1008 = vst [vmem:[#allocation2 + $0x48] sm:$0x1] %v1007
        %v1009 = vld [vmem:[#allocation2 + $0x54] sm:$0x1]
        %v1010 = vsel %vm987, 0, %v1009
        %1011 = vst [vmem:[#allocation2 + $0x54] sm:$0x1] %v1010
        %v1012 = vld [vmem:[#allocation2 + $0x60] sm:$0x1]
        %v1013 = vsel %vm987, 0, %v1012
        %1014 = vst [vmem:[#allocation2 + $0x60] sm:$0x1] %v1013
        %v1015 = vld [vmem:[#allocation2 + $0x6c] sm:$0x1]
        %v1016 = vsel %vm987, 0, %v1015
        %1017 = vst [vmem:[#allocation2 + $0x6c] sm:$0x1] %v1016
        %v1018 = vld [vmem:[#allocation2 + $0x78] sm:$0x1]
        %v1019 = vsel %vm987, 0, %v1018
        %1020 = vst [vmem:[#allocation2 + $0x78] sm:$0x1] %v1019
        %v1021 = vld [vmem:[#allocation2 + $0x84] sm:$0x1]
        %v1022 = vsel %vm987, 0, %v1021
        %1023 = vst [vmem:[#allocation2 + $0x84] sm:$0x1] %v1022
        %v1024 = vld [vmem:[#allocation2 + $0x90] sm:$0x1]
        %v1025 = vsel %vm987, 0, %v1024
        %1026 = vst [vmem:[#allocation2 + $0x90] sm:$0x1] %v1025
        %v1027 = vld [vmem:[#allocation2 + $0x9c] sm:$0x1]
        %v1028 = vsel %vm987, 0, %v1027
        %1029 = vst [vmem:[#allocation2 + $0x9c] sm:$0x1] %v1028
        %v1030 = vld [vmem:[#allocation2 + $0xa8] sm:$0x1]
        %v1031 = vsel %vm987, 0, %v1030
        %1032 = vst [vmem:[#allocation2 + $0xa8] sm:$0x1] %v1031
        %v1033 = vld [vmem:[#allocation2 + $0xb4] sm:$0x1]
        %v1034 = vsel %vm987, 0, %v1033
        %1035 = vst [vmem:[#allocation2 + $0xb4] sm:$0x1] %v1034
        %v1036 = vld [vmem:[#allocation2 + $0xc0] sm:$0x1]
        %v1037 = vsel %vm987, 0, %v1036
        %1038 = vst [vmem:[#allocation2 + $0xc0] sm:$0x1] %v1037
        %v1039 = vld [vmem:[#allocation2 + $0xcc] sm:$0x1]
        %v1040 = vsel %vm987, 0, %v1039
        %1041 = vst [vmem:[#allocation2 + $0xcc] sm:$0x1] %v1040
        %v1042 = vld [vmem:[#allocation2 + $0xd8] sm:$0x1]
        %v1043 = vsel %vm987, 0, %v1042
        %1044 = vst [vmem:[#allocation2 + $0xd8] sm:$0x1] %v1043
        %v1045 = vld [vmem:[#allocation2 + $0xe4] sm:$0x1]
        %v1046 = vsel %vm987, 0, %v1045
        %1047 = vst [vmem:[#allocation2 + $0xe4] sm:$0x1] %v1046
        %v1048 = vld [vmem:[#allocation2 + $0xf0] sm:$0x1]
        %v1049 = vsel %vm987, 0, %v1048
        %1050 = vst [vmem:[#allocation2 + $0xf0] sm:$0x1] %v1049
        %v1051 = vld [vmem:[#allocation2 + $0xfc] sm:$0x1]
        %v1052 = vsel %vm987, 0, %v1051
        %1053 = vst [vmem:[#allocation2 + $0xfc] sm:$0x1] %v1052
        %v1054 = vld [vmem:[#allocation2 + $0x108] sm:$0x1]
        %v1055 = vsel %vm987, 0, %v1054
        %1056 = vst [vmem:[#allocation2 + $0x108] sm:$0x1] %v1055
        %v1057 = vld [vmem:[#allocation2 + $0x114] sm:$0x1]
        %v1058 = vsel %vm987, 0, %v1057
        %1059 = vst [vmem:[#allocation2 + $0x114] sm:$0x1] %v1058
        %v1060 = vld [vmem:[#allocation2 + $0x120] sm:$0x1]
        %v1061 = vsel %vm987, 0, %v1060
        %1062 = vst [vmem:[#allocation2 + $0x120] sm:$0x1] %v1061
        %v1063 = vld [vmem:[#allocation2 + $0x12c] sm:$0x1]
        %v1064 = vsel %vm987, 0, %v1063
        %1065 = vst [vmem:[#allocation2 + $0x12c] sm:$0x1] %v1064
        %v1066 = vld [vmem:[#allocation2 + $0x138] sm:$0x1]
        %v1067 = vsel %vm987, 0, %v1066
        %1068 = vst [vmem:[#allocation2 + $0x138] sm:$0x1] %v1067
        %v1069 = vld [vmem:[#allocation2 + $0x144] sm:$0x1]
        %v1070 = vsel %vm987, 0, %v1069
        %1071 = vst [vmem:[#allocation2 + $0x144] sm:$0x1] %v1070
        %v1072 = vld [vmem:[#allocation2 + $0x150] sm:$0x1]
        %v1073 = vsel %vm987, 0, %v1072
        %1074 = vst [vmem:[#allocation2 + $0x150] sm:$0x1] %v1073
        %v1075 = vld [vmem:[#allocation2 + $0x15c] sm:$0x1]
        %v1076 = vsel %vm987, 0, %v1075
        %1077 = vst [vmem:[#allocation2 + $0x15c] sm:$0x1] %v1076
        %v1078 = vld [vmem:[#allocation2 + $0x168] sm:$0x1]
        %v1079 = vsel %vm987, 0, %v1078
        %1080 = vst [vmem:[#allocation2 + $0x168] sm:$0x1] %v1079
        %v1081 = vld [vmem:[#allocation2 + $0x174] sm:$0x1]
        %v1082 = vsel %vm987, 0, %v1081
        %1083 = vst [vmem:[#allocation2 + $0x174] sm:$0x1] %v1082
        %v1084 = vld [vmem:[#allocation2 + $0x180] sm:$0x1]
        %v1085 = vsel %vm987, 0, %v1084
        %1086 = vst [vmem:[#allocation2 + $0x180] sm:$0x1] %v1085
        %v1087 = vld [vmem:[#allocation2 + $0x18c] sm:$0x1]
        %v1088 = vsel %vm987, 0, %v1087
        %1089 = vst [vmem:[#allocation2 + $0x18c] sm:$0x1] %v1088
        %v1090 = vld [vmem:[#allocation2 + $0x198] sm:$0x1]
        %v1091 = vsel %vm987, 0, %v1090
        %1092 = vst [vmem:[#allocation2 + $0x198] sm:$0x1] %v1091
        %v1093 = vld [vmem:[#allocation2 + $0x1a4] sm:$0x1]
        %v1094 = vsel %vm987, 0, %v1093
        %1095 = vst [vmem:[#allocation2 + $0x1a4] sm:$0x1] %v1094
        %vm1096 = vsmask.f32 7938
        %vm1097 = vmand %vm985, %vm1096
        %v1098 = vld [vmem:[#allocation2 + $0x8] sm:$0x1]
        %v1099 = vsel %vm1097, 0, %v1098
        %1100 = vst [vmem:[#allocation2 + $0x8] sm:$0x1] %v1099
        %v1101 = vld [vmem:[#allocation2 + $0x14] sm:$0x1]
        %v1102 = vsel %vm1097, 0, %v1101
        %1103 = vst [vmem:[#allocation2 + $0x14] sm:$0x1] %v1102
        %v1104 = vld [vmem:[#allocation2 + $0x20] sm:$0x1]
        %v1105 = vsel %vm1097, 0, %v1104
        %1106 = vst [vmem:[#allocation2 + $0x20] sm:$0x1] %v1105
        %v1107 = vld [vmem:[#allocation2 + $0x2c] sm:$0x1]
        %v1108 = vsel %vm1097, 0, %v1107
        %1109 = vst [vmem:[#allocation2 + $0x2c] sm:$0x1] %v1108
        %v1110 = vld [vmem:[#allocation2 + $0x38] sm:$0x1]
        %v1111 = vsel %vm1097, 0, %v1110
        %1112 = vst [vmem:[#allocation2 + $0x38] sm:$0x1] %v1111
        %v1113 = vld [vmem:[#allocation2 + $0x44] sm:$0x1]
        %v1114 = vsel %vm1097, 0, %v1113
        %1115 = vst [vmem:[#allocation2 + $0x44] sm:$0x1] %v1114
        %v1116 = vld [vmem:[#allocation2 + $0x50] sm:$0x1]
        %v1117 = vsel %vm1097, 0, %v1116
        %1118 = vst [vmem:[#allocation2 + $0x50] sm:$0x1] %v1117
        %v1119 = vld [vmem:[#allocation2 + $0x5c] sm:$0x1]
        %v1120 = vsel %vm1097, 0, %v1119
        %1121 = vst [vmem:[#allocation2 + $0x5c] sm:$0x1] %v1120
        %v1122 = vld [vmem:[#allocation2 + $0x68] sm:$0x1]
        %v1123 = vsel %vm1097, 0, %v1122
        %1124 = vst [vmem:[#allocation2 + $0x68] sm:$0x1] %v1123
        %v1125 = vld [vmem:[#allocation2 + $0x74] sm:$0x1]
        %v1126 = vsel %vm1097, 0, %v1125
        %1127 = vst [vmem:[#allocation2 + $0x74] sm:$0x1] %v1126
        %v1128 = vld [vmem:[#allocation2 + $0x80] sm:$0x1]
        %v1129 = vsel %vm1097, 0, %v1128
        %1130 = vst [vmem:[#allocation2 + $0x80] sm:$0x1] %v1129
        %v1131 = vld [vmem:[#allocation2 + $0x8c] sm:$0x1]
        %v1132 = vsel %vm1097, 0, %v1131
        %1133 = vst [vmem:[#allocation2 + $0x8c] sm:$0x1] %v1132
        %v1134 = vld [vmem:[#allocation2 + $0x98] sm:$0x1]
        %v1135 = vsel %vm1097, 0, %v1134
        %1136 = vst [vmem:[#allocation2 + $0x98] sm:$0x1] %v1135
        %v1137 = vld [vmem:[#allocation2 + $0xa4] sm:$0x1]
        %v1138 = vsel %vm1097, 0, %v1137
        %1139 = vst [vmem:[#allocation2 + $0xa4] sm:$0x1] %v1138
        %v1140 = vld [vmem:[#allocation2 + $0xb0] sm:$0x1]
        %v1141 = vsel %vm1097, 0, %v1140
        %1142 = vst [vmem:[#allocation2 + $0xb0] sm:$0x1] %v1141
        %v1143 = vld [vmem:[#allocation2 + $0xbc] sm:$0x1]
        %v1144 = vsel %vm1097, 0, %v1143
        %1145 = vst [vmem:[#allocation2 + $0xbc] sm:$0x1] %v1144
        %v1146 = vld [vmem:[#allocation2 + $0xc8] sm:$0x1]
        %v1147 = vsel %vm1097, 0, %v1146
        %1148 = vst [vmem:[#allocation2 + $0xc8] sm:$0x1] %v1147
        %v1149 = vld [vmem:[#allocation2 + $0xd4] sm:$0x1]
        %v1150 = vsel %vm1097, 0, %v1149
        %1151 = vst [vmem:[#allocation2 + $0xd4] sm:$0x1] %v1150
        %v1152 = vld [vmem:[#allocation2 + $0xe0] sm:$0x1]
        %v1153 = vsel %vm1097, 0, %v1152
        %1154 = vst [vmem:[#allocation2 + $0xe0] sm:$0x1] %v1153
        %v1155 = vld [vmem:[#allocation2 + $0xec] sm:$0x1]
        %v1156 = vsel %vm1097, 0, %v1155
        %1157 = vst [vmem:[#allocation2 + $0xec] sm:$0x1] %v1156
        %v1158 = vld [vmem:[#allocation2 + $0xf8] sm:$0x1]
        %v1159 = vsel %vm1097, 0, %v1158
        %1160 = vst [vmem:[#allocation2 + $0xf8] sm:$0x1] %v1159
        %v1161 = vld [vmem:[#allocation2 + $0x104] sm:$0x1]
        %v1162 = vsel %vm1097, 0, %v1161
        %1163 = vst [vmem:[#allocation2 + $0x104] sm:$0x1] %v1162
        %v1164 = vld [vmem:[#allocation2 + $0x110] sm:$0x1]
        %v1165 = vsel %vm1097, 0, %v1164
        %1166 = vst [vmem:[#allocation2 + $0x110] sm:$0x1] %v1165
        %v1167 = vld [vmem:[#allocation2 + $0x11c] sm:$0x1]
        %v1168 = vsel %vm1097, 0, %v1167
        %1169 = vst [vmem:[#allocation2 + $0x11c] sm:$0x1] %v1168
        %v1170 = vld [vmem:[#allocation2 + $0x128] sm:$0x1]
        %v1171 = vsel %vm1097, 0, %v1170
        %1172 = vst [vmem:[#allocation2 + $0x128] sm:$0x1] %v1171
        %v1173 = vld [vmem:[#allocation2 + $0x134] sm:$0x1]
        %v1174 = vsel %vm1097, 0, %v1173
        %1175 = vst [vmem:[#allocation2 + $0x134] sm:$0x1] %v1174
        %v1176 = vld [vmem:[#allocation2 + $0x140] sm:$0x1]
        %v1177 = vsel %vm1097, 0, %v1176
        %1178 = vst [vmem:[#allocation2 + $0x140] sm:$0x1] %v1177
        %v1179 = vld [vmem:[#allocation2 + $0x14c] sm:$0x1]
        %v1180 = vsel %vm1097, 0, %v1179
        %1181 = vst [vmem:[#allocation2 + $0x14c] sm:$0x1] %v1180
        %v1182 = vld [vmem:[#allocation2 + $0x158] sm:$0x1]
        %v1183 = vsel %vm1097, 0, %v1182
        %1184 = vst [vmem:[#allocation2 + $0x158] sm:$0x1] %v1183
        %v1185 = vld [vmem:[#allocation2 + $0x164] sm:$0x1]
        %v1186 = vsel %vm1097, 0, %v1185
        %1187 = vst [vmem:[#allocation2 + $0x164] sm:$0x1] %v1186
        %v1188 = vld [vmem:[#allocation2 + $0x170] sm:$0x1]
        %v1189 = vsel %vm1097, 0, %v1188
        %1190 = vst [vmem:[#allocation2 + $0x170] sm:$0x1] %v1189
        %v1191 = vld [vmem:[#allocation2 + $0x17c] sm:$0x1]
        %v1192 = vsel %vm1097, 0, %v1191
        %1193 = vst [vmem:[#allocation2 + $0x17c] sm:$0x1] %v1192
        %v1194 = vld [vmem:[#allocation2 + $0x188] sm:$0x1]
        %v1195 = vsel %vm1097, 0, %v1194
        %1196 = vst [vmem:[#allocation2 + $0x188] sm:$0x1] %v1195
        %v1197 = vld [vmem:[#allocation2 + $0x194] sm:$0x1]
        %v1198 = vsel %vm1097, 0, %v1197
        %1199 = vst [vmem:[#allocation2 + $0x194] sm:$0x1] %v1198
        %v1200 = vld [vmem:[#allocation2 + $0x1a0] sm:$0x1]
        %v1201 = vsel %vm1097, 0, %v1200
        %1202 = vst [vmem:[#allocation2 + $0x1a0] sm:$0x1] %v1201
        %v1203 = vld [vmem:[#allocation2 + $0x1ac] sm:$0x1]
        %v1204 = vsel %vm1097, 0, %v1203
        %1205 = vst [vmem:[#allocation2 + $0x1ac] sm:$0x1] %v1204
        %v1206 = vpack.c.bf16 %v907, %v906
        %v1207 = vpack.c.bf16 %v909, %v908
        %v1208 = vpack.c.bf16 %v911, %v910
        %v1209 = vpack.c.bf16 %v913, %v912
        %v1210 = vpack.c.bf16 %v915, %v914
        %v1211 = vpack.c.bf16 %v917, %v916
        %v1212 = vpack.c.bf16 %v919, %v918
        %v1213 = vpack.c.bf16 %v921, %v920
        %v1214 = vpack.c.bf16 %v923, %v922
        %v1215 = vpack.c.bf16 %v925, %v924
        %v1216 = vpack.c.bf16 %v927, %v926
        %v1217 = vpack.c.bf16 %v929, %v928
        %v1218 = vpack.c.bf16 %v931, %v930
        %v1219 = vpack.c.bf16 %v933, %v932
        %v1220 = vpack.c.bf16 %v935, %v934
        %v1221 = vpack.c.bf16 %v937, %v936
        %v1222 = vpack.c.bf16 %v939, %v938
        %v1223 = vpack.c.bf16 %v941, %v940
        %v1224 = vpack.c.bf16 %v943, %v942
        %v1225 = vpack.c.bf16 %v945, %v944
        %v1226 = vpack.c.bf16 %v947, %v946
        %v1227 = vpack.c.bf16 %v949, %v948
        %v1228 = vpack.c.bf16 %v951, %v950
        %v1229 = vpack.c.bf16 %v953, %v952
        %v1230 = vpack.c.bf16 %v955, %v954
        %v1231 = vpack.c.bf16 %v957, %v956
        %v1232 = vpack.c.bf16 %v959, %v958
        %v1233 = vpack.c.bf16 %v961, %v960
        %v1234 = vpack.c.bf16 %v963, %v962
        %v1235 = vpack.c.bf16 %v965, %v964
        %v1236 = vpack.c.bf16 %v967, %v966
        %v1237 = vpack.c.bf16 %v969, %v968
        %v1270 = vunpack.c.l.b16 %v1206
        %v1271 = vunpack.c.h.b16 %v1206
        %v1272 = vunpack.c.l.b16 %v1207
        %v1273 = vunpack.c.h.b16 %v1207
        %v1274 = vunpack.c.l.b16 %v1208
        %v1275 = vunpack.c.h.b16 %v1208
        %v1276 = vunpack.c.l.b16 %v1209
        %v1277 = vunpack.c.h.b16 %v1209
        %v1278 = vunpack.c.l.b16 %v1210
        %v1279 = vunpack.c.h.b16 %v1210
        %v1280 = vunpack.c.l.b16 %v1211
        %v1281 = vunpack.c.h.b16 %v1211
        %v1282 = vunpack.c.l.b16 %v1212
        %v1283 = vunpack.c.h.b16 %v1212
        %v1284 = vunpack.c.l.b16 %v1213
        %v1285 = vunpack.c.h.b16 %v1213
        %v1286 = vunpack.c.l.b16 %v1214
        %v1287 = vunpack.c.h.b16 %v1214
        %v1288 = vunpack.c.l.b16 %v1215
        %v1289 = vunpack.c.h.b16 %v1215
        %v1290 = vunpack.c.l.b16 %v1216
        %v1291 = vunpack.c.h.b16 %v1216
        %v1292 = vunpack.c.l.b16 %v1217
        %v1293 = vunpack.c.h.b16 %v1217
        %v1294 = vunpack.c.l.b16 %v1218
        %v1295 = vunpack.c.h.b16 %v1218
        %v1296 = vunpack.c.l.b16 %v1219
        %v1297 = vunpack.c.h.b16 %v1219
        %v1298 = vunpack.c.l.b16 %v1220
        %v1299 = vunpack.c.h.b16 %v1220
        %v1300 = vunpack.c.l.b16 %v1221
        %v1301 = vunpack.c.h.b16 %v1221
        %v1302 = vunpack.c.l.b16 %v1222
        %v1303 = vunpack.c.h.b16 %v1222
        %v1304 = vunpack.c.l.b16 %v1223
        %v1305 = vunpack.c.h.b16 %v1223
        %v1306 = vunpack.c.l.b16 %v1224
        %v1307 = vunpack.c.h.b16 %v1224
        %v1308 = vunpack.c.l.b16 %v1225
        %v1309 = vunpack.c.h.b16 %v1225
        %v1310 = vunpack.c.l.b16 %v1226
        %v1311 = vunpack.c.h.b16 %v1226
        %v1312 = vunpack.c.l.b16 %v1227
        %v1313 = vunpack.c.h.b16 %v1227
        %v1314 = vunpack.c.l.b16 %v1228
        %v1315 = vunpack.c.h.b16 %v1228
        %v1316 = vunpack.c.l.b16 %v1229
        %v1317 = vunpack.c.h.b16 %v1229
        %v1318 = vunpack.c.l.b16 %v1230
        %v1319 = vunpack.c.h.b16 %v1230
        %v1320 = vunpack.c.l.b16 %v1231
        %v1321 = vunpack.c.h.b16 %v1231
        %v1322 = vunpack.c.l.b16 %v1232
        %v1323 = vunpack.c.h.b16 %v1232
        %v1324 = vunpack.c.l.b16 %v1233
        %v1325 = vunpack.c.h.b16 %v1233
        %v1326 = vunpack.c.l.b16 %v1234
        %v1327 = vunpack.c.h.b16 %v1234
        %v1328 = vunpack.c.l.b16 %v1235
        %v1329 = vunpack.c.h.b16 %v1235
        %v1330 = vunpack.c.l.b16 %v1236
        %v1331 = vunpack.c.h.b16 %v1236
        %v1332 = vunpack.c.l.b16 %v1237
        %v1333 = vunpack.c.h.b16 %v1237
        %v1334 = vpack.c.b16 %v1270, %v1270
        %v1335 = vpack.c.b16 %v1271, %v1271
        %v1336 = vpack.c.b16 %v1272, %v1272
        %v1337 = vpack.c.b16 %v1273, %v1273
        %v1338 = vpack.c.b16 %v1274, %v1274
        %v1339 = vpack.c.b16 %v1275, %v1275
        %v1340 = vpack.c.b16 %v1276, %v1276
        %v1341 = vpack.c.b16 %v1277, %v1277
        %v1342 = vpack.c.b16 %v1278, %v1278
        %v1343 = vpack.c.b16 %v1279, %v1279
        %v1344 = vpack.c.b16 %v1280, %v1280
        %v1345 = vpack.c.b16 %v1281, %v1281
        %v1346 = vpack.c.b16 %v1282, %v1282
        %v1347 = vpack.c.b16 %v1283, %v1283
        %v1348 = vpack.c.b16 %v1284, %v1284
        %v1349 = vpack.c.b16 %v1285, %v1285
        %v1350 = vpack.c.b16 %v1286, %v1286
        %v1351 = vpack.c.b16 %v1287, %v1287
        %v1352 = vpack.c.b16 %v1288, %v1288
        %v1353 = vpack.c.b16 %v1289, %v1289
        %v1354 = vpack.c.b16 %v1290, %v1290
        %v1355 = vpack.c.b16 %v1291, %v1291
        %v1356 = vpack.c.b16 %v1292, %v1292
        %v1357 = vpack.c.b16 %v1293, %v1293
        %v1358 = vpack.c.b16 %v1294, %v1294
        %v1359 = vpack.c.b16 %v1295, %v1295
        %v1360 = vpack.c.b16 %v1296, %v1296
        %v1361 = vpack.c.b16 %v1297, %v1297
        %v1362 = vpack.c.b16 %v1298, %v1298
        %v1363 = vpack.c.b16 %v1299, %v1299
        %v1364 = vpack.c.b16 %v1300, %v1300
        %v1365 = vpack.c.b16 %v1301, %v1301
        %v1366 = vpack.c.b16 %v1302, %v1302
        %v1367 = vpack.c.b16 %v1303, %v1303
        %v1368 = vpack.c.b16 %v1304, %v1304
        %v1369 = vpack.c.b16 %v1305, %v1305
        %v1370 = vpack.c.b16 %v1306, %v1306
        %v1371 = vpack.c.b16 %v1307, %v1307
        %v1372 = vpack.c.b16 %v1308, %v1308
        %v1373 = vpack.c.b16 %v1309, %v1309
        %v1374 = vpack.c.b16 %v1310, %v1310
        %v1375 = vpack.c.b16 %v1311, %v1311
        %v1376 = vpack.c.b16 %v1312, %v1312
        %v1377 = vpack.c.b16 %v1313, %v1313
        %v1378 = vpack.c.b16 %v1314, %v1314
        %v1379 = vpack.c.b16 %v1315, %v1315
        %v1380 = vpack.c.b16 %v1316, %v1316
        %v1381 = vpack.c.b16 %v1317, %v1317
        %v1382 = vpack.c.b16 %v1318, %v1318
        %v1383 = vpack.c.b16 %v1319, %v1319
        %v1384 = vpack.c.b16 %v1320, %v1320
        %v1385 = vpack.c.b16 %v1321, %v1321
        %v1386 = vpack.c.b16 %v1322, %v1322
        %v1387 = vpack.c.b16 %v1323, %v1323
        %v1388 = vpack.c.b16 %v1324, %v1324
        %v1389 = vpack.c.b16 %v1325, %v1325
        %v1390 = vpack.c.b16 %v1326, %v1326
        %v1391 = vpack.c.b16 %v1327, %v1327
        %v1392 = vpack.c.b16 %v1328, %v1328
        %v1393 = vpack.c.b16 %v1329, %v1329
        %v1394 = vpack.c.b16 %v1330, %v1330
        %v1395 = vpack.c.b16 %v1331, %v1331
        %v1396 = vpack.c.b16 %v1332, %v1332
        %v1397 = vpack.c.b16 %v1333, %v1333
        %vm1398 = vsmask.f32 4368
        %vm1399 = vmor %vm986, %vm1398
        %v1401 = vshrl.u32 %v1334, 16
        %v1403 = vrot.slane %v1401, 7
        %v1404 = vshll.u32 %v1334, 16
        %v1406 = vor.u32 %v1403, %v1404
        %v1407 = vrot.slane %v1403, 4
        %v1409 = vshrl.u32 %v1335, 16
        %v1411 = vrot.slane %v1409, 7
        %v1412 = vshll.u32 %v1335, 16
        %v1414 = vor.u32 %v1411, %v1412
        %v1415 = vsel %vm1399, %v1407, %v1414
        %v1416 = vrot.slane %v1411, 4
        %v1418 = vshrl.u32 %v1336, 16
        %v1420 = vrot.slane %v1418, 7
        %v1421 = vshll.u32 %v1336, 16
        %v1423 = vor.u32 %v1420, %v1421
        %v1424 = vrot.slane %v1420, 4
        %v1426 = vshrl.u32 %v1337, 16
        %v1428 = vrot.slane %v1426, 7
        %v1429 = vshll.u32 %v1337, 16
        %v1431 = vor.u32 %v1428, %v1429
        %v1432 = vsel %vm1399, %v1424, %v1431
        %v1433 = vrot.slane %v1428, 4
        %v1435 = vshrl.u32 %v1338, 16
        %v1437 = vrot.slane %v1435, 7
        %v1438 = vshll.u32 %v1338, 16
        %v1440 = vor.u32 %v1437, %v1438
        %v1441 = vrot.slane %v1437, 4
        %v1443 = vshrl.u32 %v1339, 16
        %v1445 = vrot.slane %v1443, 7
        %v1446 = vshll.u32 %v1339, 16
        %v1448 = vor.u32 %v1445, %v1446
        %v1449 = vsel %vm1399, %v1441, %v1448
        %v1450 = vrot.slane %v1445, 4
        %v1452 = vshrl.u32 %v1340, 16
        %v1454 = vrot.slane %v1452, 7
        %v1455 = vshll.u32 %v1340, 16
        %v1457 = vor.u32 %v1454, %v1455
        %v1458 = vrot.slane %v1454, 4
        %v1460 = vshrl.u32 %v1341, 16
        %v1462 = vrot.slane %v1460, 7
        %v1463 = vshll.u32 %v1341, 16
        %v1465 = vor.u32 %v1462, %v1463
        %v1466 = vsel %vm1399, %v1458, %v1465
        %v1467 = vrot.slane %v1462, 4
        %v1469 = vshrl.u32 %v1342, 16
        %v1471 = vrot.slane %v1469, 7
        %v1472 = vshll.u32 %v1342, 16
        %v1474 = vor.u32 %v1471, %v1472
        %v1475 = vrot.slane %v1471, 4
        %v1477 = vshrl.u32 %v1343, 16
        %v1479 = vrot.slane %v1477, 7
        %v1480 = vshll.u32 %v1343, 16
        %v1482 = vor.u32 %v1479, %v1480
        %v1483 = vsel %vm1399, %v1475, %v1482
        %v1484 = vrot.slane %v1479, 4
        %v1486 = vshrl.u32 %v1344, 16
        %v1488 = vrot.slane %v1486, 7
        %v1489 = vshll.u32 %v1344, 16
        %v1491 = vor.u32 %v1488, %v1489
        %v1492 = vrot.slane %v1488, 4
        %v1494 = vshrl.u32 %v1345, 16
        %v1496 = vrot.slane %v1494, 7
        %v1497 = vshll.u32 %v1345, 16
        %v1499 = vor.u32 %v1496, %v1497
        %v1500 = vsel %vm1399, %v1492, %v1499
        %v1501 = vrot.slane %v1496, 4
        %v1503 = vshrl.u32 %v1346, 16
        %v1505 = vrot.slane %v1503, 7
        %v1506 = vshll.u32 %v1346, 16
        %v1508 = vor.u32 %v1505, %v1506
        %v1509 = vrot.slane %v1505, 4
        %v1511 = vshrl.u32 %v1347, 16
        %v1513 = vrot.slane %v1511, 7
        %v1514 = vshll.u32 %v1347, 16
        %v1516 = vor.u32 %v1513, %v1514
        %v1517 = vsel %vm1399, %v1509, %v1516
        %v1518 = vrot.slane %v1513, 4
        %v1520 = vshrl.u32 %v1348, 16
        %v1522 = vrot.slane %v1520, 7
        %v1523 = vshll.u32 %v1348, 16
        %v1525 = vor.u32 %v1522, %v1523
        %v1526 = vrot.slane %v1522, 4
        %v1528 = vshrl.u32 %v1349, 16
        %v1530 = vrot.slane %v1528, 7
        %v1531 = vshll.u32 %v1349, 16
        %v1533 = vor.u32 %v1530, %v1531
        %v1534 = vsel %vm1399, %v1526, %v1533
        %v1535 = vrot.slane %v1530, 4
        %v1537 = vshrl.u32 %v1350, 16
        %v1539 = vrot.slane %v1537, 7
        %v1540 = vshll.u32 %v1350, 16
        %v1542 = vor.u32 %v1539, %v1540
        %v1543 = vrot.slane %v1539, 4
        %v1545 = vshrl.u32 %v1351, 16
        %v1547 = vrot.slane %v1545, 7
        %v1548 = vshll.u32 %v1351, 16
        %v1550 = vor.u32 %v1547, %v1548
        %v1551 = vsel %vm1399, %v1543, %v1550
        %v1552 = vrot.slane %v1547, 4
        %v1554 = vshrl.u32 %v1352, 16
        %v1556 = vrot.slane %v1554, 7
        %v1557 = vshll.u32 %v1352, 16
        %v1559 = vor.u32 %v1556, %v1557
        %v1560 = vrot.slane %v1556, 4
        %v1562 = vshrl.u32 %v1353, 16
        %v1564 = vrot.slane %v1562, 7
        %v1565 = vshll.u32 %v1353, 16
        %v1567 = vor.u32 %v1564, %v1565
        %v1568 = vsel %vm1399, %v1560, %v1567
        %v1569 = vrot.slane %v1564, 4
        %v1571 = vshrl.u32 %v1354, 16
        %v1573 = vrot.slane %v1571, 7
        %v1574 = vshll.u32 %v1354, 16
        %v1576 = vor.u32 %v1573, %v1574
        %v1577 = vrot.slane %v1573, 4
        %v1579 = vshrl.u32 %v1355, 16
        %v1581 = vrot.slane %v1579, 7
        %v1582 = vshll.u32 %v1355, 16
        %v1584 = vor.u32 %v1581, %v1582
        %v1585 = vsel %vm1399, %v1577, %v1584
        %v1586 = vrot.slane %v1581, 4
        %v1588 = vshrl.u32 %v1356, 16
        %v1590 = vrot.slane %v1588, 7
        %v1591 = vshll.u32 %v1356, 16
        %v1593 = vor.u32 %v1590, %v1591
        %v1594 = vrot.slane %v1590, 4
        %v1596 = vshrl.u32 %v1357, 16
        %v1598 = vrot.slane %v1596, 7
        %v1599 = vshll.u32 %v1357, 16
        %v1601 = vor.u32 %v1598, %v1599
        %v1602 = vsel %vm1399, %v1594, %v1601
        %v1603 = vrot.slane %v1598, 4
        %v1605 = vshrl.u32 %v1358, 16
        %v1607 = vrot.slane %v1605, 7
        %v1608 = vshll.u32 %v1358, 16
        %v1610 = vor.u32 %v1607, %v1608
        %v1611 = vrot.slane %v1607, 4
        %v1613 = vshrl.u32 %v1359, 16
        %v1615 = vrot.slane %v1613, 7
        %v1616 = vshll.u32 %v1359, 16
        %v1618 = vor.u32 %v1615, %v1616
        %v1619 = vsel %vm1399, %v1611, %v1618
        %v1620 = vrot.slane %v1615, 4
        %v1622 = vshrl.u32 %v1360, 16
        %v1624 = vrot.slane %v1622, 7
        %v1625 = vshll.u32 %v1360, 16
        %v1627 = vor.u32 %v1624, %v1625
        %v1628 = vrot.slane %v1624, 4
        %v1630 = vshrl.u32 %v1361, 16
        %v1632 = vrot.slane %v1630, 7
        %v1633 = vshll.u32 %v1361, 16
        %v1635 = vor.u32 %v1632, %v1633
        %v1636 = vsel %vm1399, %v1628, %v1635
        %v1637 = vrot.slane %v1632, 4
        %v1639 = vshrl.u32 %v1362, 16
        %v1641 = vrot.slane %v1639, 7
        %v1642 = vshll.u32 %v1362, 16
        %v1644 = vor.u32 %v1641, %v1642
        %v1645 = vrot.slane %v1641, 4
        %v1647 = vshrl.u32 %v1363, 16
        %v1649 = vrot.slane %v1647, 7
        %v1650 = vshll.u32 %v1363, 16
        %v1652 = vor.u32 %v1649, %v1650
        %v1653 = vsel %vm1399, %v1645, %v1652
        %v1654 = vrot.slane %v1649, 4
        %v1656 = vshrl.u32 %v1364, 16
        %v1658 = vrot.slane %v1656, 7
        %v1659 = vshll.u32 %v1364, 16
        %v1661 = vor.u32 %v1658, %v1659
        %v1662 = vrot.slane %v1658, 4
        %v1664 = vshrl.u32 %v1365, 16
        %v1666 = vrot.slane %v1664, 7
        %v1667 = vshll.u32 %v1365, 16
        %v1669 = vor.u32 %v1666, %v1667
        %v1670 = vsel %vm1399, %v1662, %v1669
        %v1671 = vrot.slane %v1666, 4
        %v1673 = vshrl.u32 %v1366, 16
        %v1675 = vrot.slane %v1673, 7
        %v1676 = vshll.u32 %v1366, 16
        %v1678 = vor.u32 %v1675, %v1676
        %v1679 = vrot.slane %v1675, 4
        %v1681 = vshrl.u32 %v1367, 16
        %v1683 = vrot.slane %v1681, 7
        %v1684 = vshll.u32 %v1367, 16
        %v1686 = vor.u32 %v1683, %v1684
        %v1687 = vsel %vm1399, %v1679, %v1686
        %v1688 = vrot.slane %v1683, 4
        %v1690 = vshrl.u32 %v1368, 16
        %v1692 = vrot.slane %v1690, 7
        %v1693 = vshll.u32 %v1368, 16
        %v1695 = vor.u32 %v1692, %v1693
        %v1696 = vrot.slane %v1692, 4
        %v1698 = vshrl.u32 %v1369, 16
        %v1700 = vrot.slane %v1698, 7
        %v1701 = vshll.u32 %v1369, 16
        %v1703 = vor.u32 %v1700, %v1701
        %v1704 = vsel %vm1399, %v1696, %v1703
        %v1705 = vrot.slane %v1700, 4
        %v1707 = vshrl.u32 %v1370, 16
        %v1709 = vrot.slane %v1707, 7
        %v1710 = vshll.u32 %v1370, 16
        %v1712 = vor.u32 %v1709, %v1710
        %v1713 = vrot.slane %v1709, 4
        %v1715 = vshrl.u32 %v1371, 16
        %v1717 = vrot.slane %v1715, 7
        %v1718 = vshll.u32 %v1371, 16
        %v1720 = vor.u32 %v1717, %v1718
        %v1721 = vsel %vm1399, %v1713, %v1720
        %v1722 = vrot.slane %v1717, 4
        %v1724 = vshrl.u32 %v1372, 16
        %v1726 = vrot.slane %v1724, 7
        %v1727 = vshll.u32 %v1372, 16
        %v1729 = vor.u32 %v1726, %v1727
        %v1730 = vrot.slane %v1726, 4
        %v1732 = vshrl.u32 %v1373, 16
        %v1734 = vrot.slane %v1732, 7
        %v1735 = vshll.u32 %v1373, 16
        %v1737 = vor.u32 %v1734, %v1735
        %v1738 = vsel %vm1399, %v1730, %v1737
        %v1739 = vrot.slane %v1734, 4
        %v1741 = vshrl.u32 %v1374, 16
        %v1743 = vrot.slane %v1741, 7
        %v1744 = vshll.u32 %v1374, 16
        %v1746 = vor.u32 %v1743, %v1744
        %v1747 = vrot.slane %v1743, 4
        %v1749 = vshrl.u32 %v1375, 16
        %v1751 = vrot.slane %v1749, 7
        %v1752 = vshll.u32 %v1375, 16
        %v1754 = vor.u32 %v1751, %v1752
        %v1755 = vsel %vm1399, %v1747, %v1754
        %v1756 = vrot.slane %v1751, 4
        %v1758 = vshrl.u32 %v1376, 16
        %v1760 = vrot.slane %v1758, 7
        %v1761 = vshll.u32 %v1376, 16
        %v1763 = vor.u32 %v1760, %v1761
        %v1764 = vrot.slane %v1760, 4
        %v1766 = vshrl.u32 %v1377, 16
        %v1768 = vrot.slane %v1766, 7
        %v1769 = vshll.u32 %v1377, 16
        %v1771 = vor.u32 %v1768, %v1769
        %v1772 = vsel %vm1399, %v1764, %v1771
        %v1773 = vrot.slane %v1768, 4
        %v1775 = vshrl.u32 %v1378, 16
        %v1777 = vrot.slane %v1775, 7
        %v1778 = vshll.u32 %v1378, 16
        %v1780 = vor.u32 %v1777, %v1778
        %v1781 = vrot.slane %v1777, 4
        %v1783 = vshrl.u32 %v1379, 16
        %v1785 = vrot.slane %v1783, 7
        %v1786 = vshll.u32 %v1379, 16
        %v1788 = vor.u32 %v1785, %v1786
        %v1789 = vsel %vm1399, %v1781, %v1788
        %v1790 = vrot.slane %v1785, 4
        %v1792 = vshrl.u32 %v1380, 16
        %v1794 = vrot.slane %v1792, 7
        %v1795 = vshll.u32 %v1380, 16
        %v1797 = vor.u32 %v1794, %v1795
        %v1798 = vrot.slane %v1794, 4
        %v1800 = vshrl.u32 %v1381, 16
        %v1802 = vrot.slane %v1800, 7
        %v1803 = vshll.u32 %v1381, 16
        %v1805 = vor.u32 %v1802, %v1803
        %v1806 = vsel %vm1399, %v1798, %v1805
        %v1807 = vrot.slane %v1802, 4
        %v1809 = vshrl.u32 %v1382, 16
        %v1811 = vrot.slane %v1809, 7
        %v1812 = vshll.u32 %v1382, 16
        %v1814 = vor.u32 %v1811, %v1812
        %v1815 = vrot.slane %v1811, 4
        %v1817 = vshrl.u32 %v1383, 16
        %v1819 = vrot.slane %v1817, 7
        %v1820 = vshll.u32 %v1383, 16
        %v1822 = vor.u32 %v1819, %v1820
        %v1823 = vsel %vm1399, %v1815, %v1822
        %v1824 = vrot.slane %v1819, 4
        %v1826 = vshrl.u32 %v1384, 16
        %v1828 = vrot.slane %v1826, 7
        %v1829 = vshll.u32 %v1384, 16
        %v1831 = vor.u32 %v1828, %v1829
        %v1832 = vrot.slane %v1828, 4
        %v1834 = vshrl.u32 %v1385, 16
        %v1836 = vrot.slane %v1834, 7
        %v1837 = vshll.u32 %v1385, 16
        %v1839 = vor.u32 %v1836, %v1837
        %v1840 = vsel %vm1399, %v1832, %v1839
        %v1841 = vrot.slane %v1836, 4
        %v1843 = vshrl.u32 %v1386, 16
        %v1845 = vrot.slane %v1843, 7
        %v1846 = vshll.u32 %v1386, 16
        %v1848 = vor.u32 %v1845, %v1846
        %v1849 = vrot.slane %v1845, 4
        %v1851 = vshrl.u32 %v1387, 16
        %v1853 = vrot.slane %v1851, 7
        %v1854 = vshll.u32 %v1387, 16
        %v1856 = vor.u32 %v1853, %v1854
        %v1857 = vsel %vm1399, %v1849, %v1856
        %v1858 = vrot.slane %v1853, 4
        %v1860 = vshrl.u32 %v1388, 16
        %v1862 = vrot.slane %v1860, 7
        %v1863 = vshll.u32 %v1388, 16
        %v1865 = vor.u32 %v1862, %v1863
        %v1866 = vrot.slane %v1862, 4
        %v1868 = vshrl.u32 %v1389, 16
        %v1870 = vrot.slane %v1868, 7
        %v1871 = vshll.u32 %v1389, 16
        %v1873 = vor.u32 %v1870, %v1871
        %v1874 = vsel %vm1399, %v1866, %v1873
        %v1875 = vrot.slane %v1870, 4
        %v1877 = vshrl.u32 %v1390, 16
        %v1879 = vrot.slane %v1877, 7
        %v1880 = vshll.u32 %v1390, 16
        %v1882 = vor.u32 %v1879, %v1880
        %v1883 = vrot.slane %v1879, 4
        %v1885 = vshrl.u32 %v1391, 16
        %v1887 = vrot.slane %v1885, 7
        %v1888 = vshll.u32 %v1391, 16
        %v1890 = vor.u32 %v1887, %v1888
        %v1891 = vsel %vm1399, %v1883, %v1890
        %v1892 = vrot.slane %v1887, 4
        %v1894 = vshrl.u32 %v1392, 16
        %v1896 = vrot.slane %v1894, 7
        %v1897 = vshll.u32 %v1392, 16
        %v1899 = vor.u32 %v1896, %v1897
        %v1900 = vrot.slane %v1896, 4
        %v1902 = vshrl.u32 %v1393, 16
        %v1904 = vrot.slane %v1902, 7
        %v1905 = vshll.u32 %v1393, 16
        %v1907 = vor.u32 %v1904, %v1905
        %v1908 = vsel %vm1399, %v1900, %v1907
        %v1909 = vrot.slane %v1904, 4
        %v1911 = vshrl.u32 %v1394, 16
        %v1913 = vrot.slane %v1911, 7
        %v1914 = vshll.u32 %v1394, 16
        %v1916 = vor.u32 %v1913, %v1914
        %v1917 = vrot.slane %v1913, 4
        %v1919 = vshrl.u32 %v1395, 16
        %v1921 = vrot.slane %v1919, 7
        %v1922 = vshll.u32 %v1395, 16
        %v1924 = vor.u32 %v1921, %v1922
        %v1925 = vsel %vm1399, %v1917, %v1924
        %v1926 = vrot.slane %v1921, 4
        %v1928 = vshrl.u32 %v1396, 16
        %v1930 = vrot.slane %v1928, 7
        %v1931 = vshll.u32 %v1396, 16
        %v1933 = vor.u32 %v1930, %v1931
        %v1934 = vrot.slane %v1930, 4
        %v1936 = vshrl.u32 %v1397, 16
        %v1938 = vrot.slane %v1936, 7
        %v1939 = vshll.u32 %v1397, 16
        %v1941 = vor.u32 %v1938, %v1939
        %v1942 = vsel %vm1399, %v1934, %v1941
        %v1943 = vrot.slane %v1938, 4
        %s2040 = scalar_lea.vmem [#allocation2], 12
        %vm2041 = vcmask 27648
        %vm2042 = vmand %vm2041, %vm1096
        %v2043 = vld [vmem:[%s2040] sm:$0xf]
        %v2044 = vsel %vm2042, %v1406, %v2043
        %2045 = vst [vmem:[%s2040] sm:$0xf] %v2044
        %2046 = vst.msk [vmem:[%s2040 + $0x4] sm:$0xf] %vm970, %v1415
        %v2047 = vld [vmem:[%s2040 + $0x8] sm:$0x1]
        %v2048 = vsel %vm987, %v1416, %v2047
        %2049 = vst [vmem:[%s2040 + $0x8] sm:$0x1] %v2048
        %v2050 = vld [vmem:[%s2040 + $0xc] sm:$0xf]
        %v2051 = vsel %vm2042, %v1423, %v2050
        %2052 = vst [vmem:[%s2040 + $0xc] sm:$0xf] %v2051
        %2053 = vst.msk [vmem:[%s2040 + $0x10] sm:$0xf] %vm970, %v1432
        %v2054 = vld [vmem:[%s2040 + $0x14] sm:$0x1]
        %v2055 = vsel %vm987, %v1433, %v2054
        %2056 = vst [vmem:[%s2040 + $0x14] sm:$0x1] %v2055
        %v2057 = vld [vmem:[%s2040 + $0x18] sm:$0xf]
        %v2058 = vsel %vm2042, %v1440, %v2057
        %2059 = vst [vmem:[%s2040 + $0x18] sm:$0xf] %v2058
        %2060 = vst.msk [vmem:[%s2040 + $0x1c] sm:$0xf] %vm970, %v1449
        %v2061 = vld [vmem:[%s2040 + $0x20] sm:$0x1]
        %v2062 = vsel %vm987, %v1450, %v2061
        %2063 = vst [vmem:[%s2040 + $0x20] sm:$0x1] %v2062
        %v2064 = vld [vmem:[%s2040 + $0x24] sm:$0xf]
        %v2065 = vsel %vm2042, %v1457, %v2064
        %2066 = vst [vmem:[%s2040 + $0x24] sm:$0xf] %v2065
        %2067 = vst.msk [vmem:[%s2040 + $0x28] sm:$0xf] %vm970, %v1466
        %v2068 = vld [vmem:[%s2040 + $0x2c] sm:$0x1]
        %v2069 = vsel %vm987, %v1467, %v2068
        %2070 = vst [vmem:[%s2040 + $0x2c] sm:$0x1] %v2069
        %v2071 = vld [vmem:[%s2040 + $0x30] sm:$0xf]
        %v2072 = vsel %vm2042, %v1474, %v2071
        %2073 = vst [vmem:[%s2040 + $0x30] sm:$0xf] %v2072
        %2074 = vst.msk [vmem:[%s2040 + $0x34] sm:$0xf] %vm970, %v1483
        %v2075 = vld [vmem:[%s2040 + $0x38] sm:$0x1]
        %v2076 = vsel %vm987, %v1484, %v2075
        %2077 = vst [vmem:[%s2040 + $0x38] sm:$0x1] %v2076
        %v2078 = vld [vmem:[%s2040 + $0x3c] sm:$0xf]
        %v2079 = vsel %vm2042, %v1491, %v2078
        %2080 = vst [vmem:[%s2040 + $0x3c] sm:$0xf] %v2079
        %2081 = vst.msk [vmem:[%s2040 + $0x40] sm:$0xf] %vm970, %v1500
        %v2082 = vld [vmem:[%s2040 + $0x44] sm:$0x1]
        %v2083 = vsel %vm987, %v1501, %v2082
        %2084 = vst [vmem:[%s2040 + $0x44] sm:$0x1] %v2083
        %v2085 = vld [vmem:[%s2040 + $0x48] sm:$0xf]
        %v2086 = vsel %vm2042, %v1508, %v2085
        %2087 = vst [vmem:[%s2040 + $0x48] sm:$0xf] %v2086
        %2088 = vst.msk [vmem:[%s2040 + $0x4c] sm:$0xf] %vm970, %v1517
        %v2089 = vld [vmem:[%s2040 + $0x50] sm:$0x1]
        %v2090 = vsel %vm987, %v1518, %v2089
        %2091 = vst [vmem:[%s2040 + $0x50] sm:$0x1] %v2090
        %v2092 = vld [vmem:[%s2040 + $0x54] sm:$0xf]
        %v2093 = vsel %vm2042, %v1525, %v2092
        %2094 = vst [vmem:[%s2040 + $0x54] sm:$0xf] %v2093
        %2095 = vst.msk [vmem:[%s2040 + $0x58] sm:$0xf] %vm970, %v1534
        %v2096 = vld [vmem:[%s2040 + $0x5c] sm:$0x1]
        %v2097 = vsel %vm987, %v1535, %v2096
        %2098 = vst [vmem:[%s2040 + $0x5c] sm:$0x1] %v2097
        %v2099 = vld [vmem:[%s2040 + $0x60] sm:$0xf]
        %v2100 = vsel %vm2042, %v1542, %v2099
        %2101 = vst [vmem:[%s2040 + $0x60] sm:$0xf] %v2100
        %2102 = vst.msk [vmem:[%s2040 + $0x64] sm:$0xf] %vm970, %v1551
        %v2103 = vld [vmem:[%s2040 + $0x68] sm:$0x1]
        %v2104 = vsel %vm987, %v1552, %v2103
        %2105 = vst [vmem:[%s2040 + $0x68] sm:$0x1] %v2104
        %v2106 = vld [vmem:[%s2040 + $0x6c] sm:$0xf]
        %v2107 = vsel %vm2042, %v1559, %v2106
        %2108 = vst [vmem:[%s2040 + $0x6c] sm:$0xf] %v2107
        %2109 = vst.msk [vmem:[%s2040 + $0x70] sm:$0xf] %vm970, %v1568
        %v2110 = vld [vmem:[%s2040 + $0x74] sm:$0x1]
        %v2111 = vsel %vm987, %v1569, %v2110
        %2112 = vst [vmem:[%s2040 + $0x74] sm:$0x1] %v2111
        %v2113 = vld [vmem:[%s2040 + $0x78] sm:$0xf]
        %v2114 = vsel %vm2042, %v1576, %v2113
        %2115 = vst [vmem:[%s2040 + $0x78] sm:$0xf] %v2114
        %2116 = vst.msk [vmem:[%s2040 + $0x7c] sm:$0xf] %vm970, %v1585
        %v2117 = vld [vmem:[%s2040 + $0x80] sm:$0x1]
        %v2118 = vsel %vm987, %v1586, %v2117
        %2119 = vst [vmem:[%s2040 + $0x80] sm:$0x1] %v2118
        %v2120 = vld [vmem:[%s2040 + $0x84] sm:$0xf]
        %v2121 = vsel %vm2042, %v1593, %v2120
        %2122 = vst [vmem:[%s2040 + $0x84] sm:$0xf] %v2121
        %2123 = vst.msk [vmem:[%s2040 + $0x88] sm:$0xf] %vm970, %v1602
        %v2124 = vld [vmem:[%s2040 + $0x8c] sm:$0x1]
        %v2125 = vsel %vm987, %v1603, %v2124
        %2126 = vst [vmem:[%s2040 + $0x8c] sm:$0x1] %v2125
        %v2127 = vld [vmem:[%s2040 + $0x90] sm:$0xf]
        %v2128 = vsel %vm2042, %v1610, %v2127
        %2129 = vst [vmem:[%s2040 + $0x90] sm:$0xf] %v2128
        %2130 = vst.msk [vmem:[%s2040 + $0x94] sm:$0xf] %vm970, %v1619
        %v2131 = vld [vmem:[%s2040 + $0x98] sm:$0x1]
        %v2132 = vsel %vm987, %v1620, %v2131
        %2133 = vst [vmem:[%s2040 + $0x98] sm:$0x1] %v2132
        %v2134 = vld [vmem:[%s2040 + $0x9c] sm:$0xf]
        %v2135 = vsel %vm2042, %v1627, %v2134
        %2136 = vst [vmem:[%s2040 + $0x9c] sm:$0xf] %v2135
        %2137 = vst.msk [vmem:[%s2040 + $0xa0] sm:$0xf] %vm970, %v1636
        %v2138 = vld [vmem:[%s2040 + $0xa4] sm:$0x1]
        %v2139 = vsel %vm987, %v1637, %v2138
        %2140 = vst [vmem:[%s2040 + $0xa4] sm:$0x1] %v2139
        %v2141 = vld [vmem:[%s2040 + $0xa8] sm:$0xf]
        %v2142 = vsel %vm2042, %v1644, %v2141
        %2143 = vst [vmem:[%s2040 + $0xa8] sm:$0xf] %v2142
        %2144 = vst.msk [vmem:[%s2040 + $0xac] sm:$0xf] %vm970, %v1653
        %v2145 = vld [vmem:[%s2040 + $0xb0] sm:$0x1]
        %v2146 = vsel %vm987, %v1654, %v2145
        %2147 = vst [vmem:[%s2040 + $0xb0] sm:$0x1] %v2146
        %v2148 = vld [vmem:[%s2040 + $0xb4] sm:$0xf]
        %v2149 = vsel %vm2042, %v1661, %v2148
        %2150 = vst [vmem:[%s2040 + $0xb4] sm:$0xf] %v2149
        %2151 = vst.msk [vmem:[%s2040 + $0xb8] sm:$0xf] %vm970, %v1670
        %v2152 = vld [vmem:[%s2040 + $0xbc] sm:$0x1]
        %v2153 = vsel %vm987, %v1671, %v2152
        %2154 = vst [vmem:[%s2040 + $0xbc] sm:$0x1] %v2153
        %v2155 = vld [vmem:[%s2040 + $0xd8] sm:$0xf]
        %v2156 = vsel %vm2042, %v1678, %v2155
        %2157 = vst [vmem:[%s2040 + $0xd8] sm:$0xf] %v2156
        %2158 = vst.msk [vmem:[%s2040 + $0xdc] sm:$0xf] %vm970, %v1687
        %v2159 = vld [vmem:[%s2040 + $0xe0] sm:$0x1]
        %v2160 = vsel %vm987, %v1688, %v2159
        %2161 = vst [vmem:[%s2040 + $0xe0] sm:$0x1] %v2160
        %v2162 = vld [vmem:[%s2040 + $0xe4] sm:$0xf]
        %v2163 = vsel %vm2042, %v1695, %v2162
        %2164 = vst [vmem:[%s2040 + $0xe4] sm:$0xf] %v2163
        %2165 = vst.msk [vmem:[%s2040 + $0xe8] sm:$0xf] %vm970, %v1704
        %v2166 = vld [vmem:[%s2040 + $0xec] sm:$0x1]
        %v2167 = vsel %vm987, %v1705, %v2166
        %2168 = vst [vmem:[%s2040 + $0xec] sm:$0x1] %v2167
        %v2169 = vld [vmem:[%s2040 + $0xf0] sm:$0xf]
        %v2170 = vsel %vm2042, %v1712, %v2169
        %2171 = vst [vmem:[%s2040 + $0xf0] sm:$0xf] %v2170
        %2172 = vst.msk [vmem:[%s2040 + $0xf4] sm:$0xf] %vm970, %v1721
        %v2173 = vld [vmem:[%s2040 + $0xf8] sm:$0x1]
        %v2174 = vsel %vm987, %v1722, %v2173
        %2175 = vst [vmem:[%s2040 + $0xf8] sm:$0x1] %v2174
        %v2176 = vld [vmem:[%s2040 + $0xfc] sm:$0xf]
        %v2177 = vsel %vm2042, %v1729, %v2176
        %2178 = vst [vmem:[%s2040 + $0xfc] sm:$0xf] %v2177
        %2179 = vst.msk [vmem:[%s2040 + $0x100] sm:$0xf] %vm970, %v1738
        %v2180 = vld [vmem:[%s2040 + $0x104] sm:$0x1]
        %v2181 = vsel %vm987, %v1739, %v2180
        %2182 = vst [vmem:[%s2040 + $0x104] sm:$0x1] %v2181
        %v2183 = vld [vmem:[%s2040 + $0x108] sm:$0xf]
        %v2184 = vsel %vm2042, %v1746, %v2183
        %2185 = vst [vmem:[%s2040 + $0x108] sm:$0xf] %v2184
        %2186 = vst.msk [vmem:[%s2040 + $0x10c] sm:$0xf] %vm970, %v1755
        %v2187 = vld [vmem:[%s2040 + $0x110] sm:$0x1]
        %v2188 = vsel %vm987, %v1756, %v2187
        %2189 = vst [vmem:[%s2040 + $0x110] sm:$0x1] %v2188
        %v2190 = vld [vmem:[%s2040 + $0x114] sm:$0xf]
        %v2191 = vsel %vm2042, %v1763, %v2190
        %2192 = vst [vmem:[%s2040 + $0x114] sm:$0xf] %v2191
        %2193 = vst.msk [vmem:[%s2040 + $0x118] sm:$0xf] %vm970, %v1772
        %v2194 = vld [vmem:[%s2040 + $0x11c] sm:$0x1]
        %v2195 = vsel %vm987, %v1773, %v2194
        %2196 = vst [vmem:[%s2040 + $0x11c] sm:$0x1] %v2195
        %v2197 = vld [vmem:[%s2040 + $0x120] sm:$0xf]
        %v2198 = vsel %vm2042, %v1780, %v2197
        %2199 = vst [vmem:[%s2040 + $0x120] sm:$0xf] %v2198
        %2200 = vst.msk [vmem:[%s2040 + $0x124] sm:$0xf] %vm970, %v1789
        %v2201 = vld [vmem:[%s2040 + $0x128] sm:$0x1]
        %v2202 = vsel %vm987, %v1790, %v2201
        %2203 = vst [vmem:[%s2040 + $0x128] sm:$0x1] %v2202
        %v2204 = vld [vmem:[%s2040 + $0x12c] sm:$0xf]
        %v2205 = vsel %vm2042, %v1797, %v2204
        %2206 = vst [vmem:[%s2040 + $0x12c] sm:$0xf] %v2205
        %2207 = vst.msk [vmem:[%s2040 + $0x130] sm:$0xf] %vm970, %v1806
        %v2208 = vld [vmem:[%s2040 + $0x134] sm:$0x1]
        %v2209 = vsel %vm987, %v1807, %v2208
        %2210 = vst [vmem:[%s2040 + $0x134] sm:$0x1] %v2209
        %v2211 = vld [vmem:[%s2040 + $0x138] sm:$0xf]
        %v2212 = vsel %vm2042, %v1814, %v2211
        %2213 = vst [vmem:[%s2040 + $0x138] sm:$0xf] %v2212
        %2214 = vst.msk [vmem:[%s2040 + $0x13c] sm:$0xf] %vm970, %v1823
        %v2215 = vld [vmem:[%s2040 + $0x140] sm:$0x1]
        %v2216 = vsel %vm987, %v1824, %v2215
        %2217 = vst [vmem:[%s2040 + $0x140] sm:$0x1] %v2216
        %v2218 = vld [vmem:[%s2040 + $0x144] sm:$0xf]
        %v2219 = vsel %vm2042, %v1831, %v2218
        %2220 = vst [vmem:[%s2040 + $0x144] sm:$0xf] %v2219
        %2221 = vst.msk [vmem:[%s2040 + $0x148] sm:$0xf] %vm970, %v1840
        %v2222 = vld [vmem:[%s2040 + $0x14c] sm:$0x1]
        %v2223 = vsel %vm987, %v1841, %v2222
        %2224 = vst [vmem:[%s2040 + $0x14c] sm:$0x1] %v2223
        %v2225 = vld [vmem:[%s2040 + $0x150] sm:$0xf]
        %v2226 = vsel %vm2042, %v1848, %v2225
        %2227 = vst [vmem:[%s2040 + $0x150] sm:$0xf] %v2226
        %2228 = vst.msk [vmem:[%s2040 + $0x154] sm:$0xf] %vm970, %v1857
        %v2229 = vld [vmem:[%s2040 + $0x158] sm:$0x1]
        %v2230 = vsel %vm987, %v1858, %v2229
        %2231 = vst [vmem:[%s2040 + $0x158] sm:$0x1] %v2230
        %v2232 = vld [vmem:[%s2040 + $0x15c] sm:$0xf]
        %v2233 = vsel %vm2042, %v1865, %v2232
        %2234 = vst [vmem:[%s2040 + $0x15c] sm:$0xf] %v2233
        %2235 = vst.msk [vmem:[%s2040 + $0x160] sm:$0xf] %vm970, %v1874
        %v2236 = vld [vmem:[%s2040 + $0x164] sm:$0x1]
        %v2237 = vsel %vm987, %v1875, %v2236
        %2238 = vst [vmem:[%s2040 + $0x164] sm:$0x1] %v2237
        %v2239 = vld [vmem:[%s2040 + $0x168] sm:$0xf]
        %v2240 = vsel %vm2042, %v1882, %v2239
        %2241 = vst [vmem:[%s2040 + $0x168] sm:$0xf] %v2240
        %2242 = vst.msk [vmem:[%s2040 + $0x16c] sm:$0xf] %vm970, %v1891
        %v2243 = vld [vmem:[%s2040 + $0x170] sm:$0x1]
        %v2244 = vsel %vm987, %v1892, %v2243
        %2245 = vst [vmem:[%s2040 + $0x170] sm:$0x1] %v2244
        %v2246 = vld [vmem:[%s2040 + $0x174] sm:$0xf]
        %v2247 = vsel %vm2042, %v1899, %v2246
        %2248 = vst [vmem:[%s2040 + $0x174] sm:$0xf] %v2247
        %2249 = vst.msk [vmem:[%s2040 + $0x178] sm:$0xf] %vm970, %v1908
        %v2250 = vld [vmem:[%s2040 + $0x17c] sm:$0x1]
        %v2251 = vsel %vm987, %v1909, %v2250
        %2252 = vst [vmem:[%s2040 + $0x17c] sm:$0x1] %v2251
        %v2253 = vld [vmem:[%s2040 + $0x180] sm:$0xf]
        %v2254 = vsel %vm2042, %v1916, %v2253
        %2255 = vst [vmem:[%s2040 + $0x180] sm:$0xf] %v2254
        %2256 = vst.msk [vmem:[%s2040 + $0x184] sm:$0xf] %vm970, %v1925
        %v2257 = vld [vmem:[%s2040 + $0x188] sm:$0x1]
        %v2258 = vsel %vm987, %v1926, %v2257
        %2259 = vst [vmem:[%s2040 + $0x188] sm:$0x1] %v2258
        %v2260 = vld [vmem:[%s2040 + $0x18c] sm:$0xf]
        %v2261 = vsel %vm2042, %v1933, %v2260
        %2262 = vst [vmem:[%s2040 + $0x18c] sm:$0xf] %v2261
        %2263 = vst.msk [vmem:[%s2040 + $0x190] sm:$0xf] %vm970, %v1942
        %v2264 = vld [vmem:[%s2040 + $0x194] sm:$0x1]
        %v2265 = vsel %vm987, %v1943, %v2264
        %2266 = vst [vmem:[%s2040 + $0x194] sm:$0x1] %v2265
        %v2267 = vld [vmem:[#allocation2] sm:$0xf]
        %v2268 = vld [vmem:[#allocation2 + $0x4] sm:$0xf]
        %v2269 = vld [vmem:[#allocation2 + $0xc] sm:$0xf]
        %v2270 = vld [vmem:[#allocation2 + $0x10] sm:$0xf]
        %v2271 = vld [vmem:[#allocation2 + $0x18] sm:$0xf]
        %v2272 = vld [vmem:[#allocation2 + $0x1c] sm:$0xf]
        %v2273 = vld [vmem:[#allocation2 + $0x24] sm:$0xf]
        %v2274 = vld [vmem:[#allocation2 + $0x28] sm:$0xf]
        %v2275 = vld [vmem:[#allocation2 + $0x30] sm:$0xf]
        %v2276 = vld [vmem:[#allocation2 + $0x34] sm:$0xf]
        %v2277 = vld [vmem:[#allocation2 + $0x3c] sm:$0xf]
        %v2278 = vld [vmem:[#allocation2 + $0x40] sm:$0xf]
        %v2279 = vld [vmem:[#allocation2 + $0x48] sm:$0xf]
        %v2280 = vld [vmem:[#allocation2 + $0x4c] sm:$0xf]
        %v2281 = vld [vmem:[#allocation2 + $0x54] sm:$0xf]
        %v2282 = vld [vmem:[#allocation2 + $0x58] sm:$0xf]
        %v2283 = vld [vmem:[#allocation2 + $0x60] sm:$0xf]
        %v2284 = vld [vmem:[#allocation2 + $0x64] sm:$0xf]
        %v2285 = vld [vmem:[#allocation2 + $0x6c] sm:$0xf]
        %v2286 = vld [vmem:[#allocation2 + $0x70] sm:$0xf]
        %v2287 = vld [vmem:[#allocation2 + $0x78] sm:$0xf]
        %v2288 = vld [vmem:[#allocation2 + $0x7c] sm:$0xf]
        %v2289 = vld [vmem:[#allocation2 + $0x84] sm:$0xf]
        %v2290 = vld [vmem:[#allocation2 + $0x88] sm:$0xf]
        %v2291 = vld [vmem:[#allocation2 + $0x90] sm:$0xf]
        %v2292 = vld [vmem:[#allocation2 + $0x94] sm:$0xf]
        %v2293 = vld [vmem:[#allocation2 + $0x9c] sm:$0xf]
        %v2294 = vld [vmem:[#allocation2 + $0xa0] sm:$0xf]
        %v2295 = vld [vmem:[#allocation2 + $0xa8] sm:$0xf]
        %v2296 = vld [vmem:[#allocation2 + $0xac] sm:$0xf]
        %v2297 = vld [vmem:[#allocation2 + $0xb4] sm:$0xf]
        %v2298 = vld [vmem:[#allocation2 + $0xb8] sm:$0xf]
        %v2299 = vld [vmem:[#allocation2 + $0xd8] sm:$0xf]
        %v2300 = vld [vmem:[#allocation2 + $0xdc] sm:$0xf]
        %v2301 = vld [vmem:[#allocation2 + $0xe4] sm:$0xf]
        %v2302 = vld [vmem:[#allocation2 + $0xe8] sm:$0xf]
        %v2303 = vld [vmem:[#allocation2 + $0xf0] sm:$0xf]
        %v2304 = vld [vmem:[#allocation2 + $0xf4] sm:$0xf]
        %v2305 = vld [vmem:[#allocation2 + $0xfc] sm:$0xf]
        %v2306 = vld [vmem:[#allocation2 + $0x100] sm:$0xf]
        %v2307 = vld [vmem:[#allocation2 + $0x108] sm:$0xf]
        %v2308 = vld [vmem:[#allocation2 + $0x10c] sm:$0xf]
        %v2309 = vld [vmem:[#allocation2 + $0x114] sm:$0xf]
        %v2310 = vld [vmem:[#allocation2 + $0x118] sm:$0xf]
        %v2311 = vld [vmem:[#allocation2 + $0x120] sm:$0xf]
        %v2312 = vld [vmem:[#allocation2 + $0x124] sm:$0xf]
        %v2313 = vld [vmem:[#allocation2 + $0x12c] sm:$0xf]
        %v2314 = vld [vmem:[#allocation2 + $0x130] sm:$0xf]
        %v2315 = vld [vmem:[#allocation2 + $0x138] sm:$0xf]
        %v2316 = vld [vmem:[#allocation2 + $0x13c] sm:$0xf]
        %v2317 = vld [vmem:[#allocation2 + $0x144] sm:$0xf]
        %v2318 = vld [vmem:[#allocation2 + $0x148] sm:$0xf]
        %v2319 = vld [vmem:[#allocation2 + $0x150] sm:$0xf]
        %v2320 = vld [vmem:[#allocation2 + $0x154] sm:$0xf]
        %v2321 = vld [vmem:[#allocation2 + $0x15c] sm:$0xf]
        %v2322 = vld [vmem:[#allocation2 + $0x160] sm:$0xf]
        %v2323 = vld [vmem:[#allocation2 + $0x168] sm:$0xf]
        %v2324 = vld [vmem:[#allocation2 + $0x16c] sm:$0xf]
        %v2325 = vld [vmem:[#allocation2 + $0x174] sm:$0xf]
        %v2326 = vld [vmem:[#allocation2 + $0x178] sm:$0xf]
        %v2327 = vld [vmem:[#allocation2 + $0x180] sm:$0xf]
        %v2328 = vld [vmem:[#allocation2 + $0x184] sm:$0xf]
        %v2329 = vld [vmem:[#allocation2 + $0x18c] sm:$0xf]
        %v2330 = vld [vmem:[#allocation2 + $0x190] sm:$0xf]
        %v2331 = vld [vmem:[#allocation2 + $0x8] sm:$0x1]
        %v2332 = vld [vmem:[#allocation2 + $0x14] sm:$0x1]
        %v2333 = vld [vmem:[#allocation2 + $0x20] sm:$0x1]
        %v2334 = vld [vmem:[#allocation2 + $0x2c] sm:$0x1]
        %v2335 = vld [vmem:[#allocation2 + $0x38] sm:$0x1]
        %v2336 = vld [vmem:[#allocation2 + $0x44] sm:$0x1]
        %v2337 = vld [vmem:[#allocation2 + $0x50] sm:$0x1]
        %v2338 = vld [vmem:[#allocation2 + $0x5c] sm:$0x1]
        %v2339 = vld [vmem:[#allocation2 + $0x68] sm:$0x1]
        %v2340 = vld [vmem:[#allocation2 + $0x74] sm:$0x1]
        %v2341 = vld [vmem:[#allocation2 + $0x80] sm:$0x1]
        %v2342 = vld [vmem:[#allocation2 + $0x8c] sm:$0x1]
        %v2343 = vld [vmem:[#allocation2 + $0x98] sm:$0x1]
        %v2344 = vld [vmem:[#allocation2 + $0xa4] sm:$0x1]
        %v2345 = vld [vmem:[#allocation2 + $0xb0] sm:$0x1]
        %v2346 = vld [vmem:[#allocation2 + $0xbc] sm:$0x1]
        %v2347 = vld [vmem:[#allocation2 + $0xe0] sm:$0x1]
        %v2348 = vld [vmem:[#allocation2 + $0xec] sm:$0x1]
        %v2349 = vld [vmem:[#allocation2 + $0xf8] sm:$0x1]
        %v2350 = vld [vmem:[#allocation2 + $0x104] sm:$0x1]
        %v2351 = vld [vmem:[#allocation2 + $0x110] sm:$0x1]
        %v2352 = vld [vmem:[#allocation2 + $0x11c] sm:$0x1]
        %v2353 = vld [vmem:[#allocation2 + $0x128] sm:$0x1]
        %v2354 = vld [vmem:[#allocation2 + $0x134] sm:$0x1]
        %v2355 = vld [vmem:[#allocation2 + $0x140] sm:$0x1]
        %v2356 = vld [vmem:[#allocation2 + $0x14c] sm:$0x1]
        %v2357 = vld [vmem:[#allocation2 + $0x158] sm:$0x1]
        %v2358 = vld [vmem:[#allocation2 + $0x164] sm:$0x1]
        %v2359 = vld [vmem:[#allocation2 + $0x170] sm:$0x1]
        %v2360 = vld [vmem:[#allocation2 + $0x17c] sm:$0x1]
        %v2361 = vld [vmem:[#allocation2 + $0x188] sm:$0x1]
        %v2362 = vld [vmem:[#allocation2 + $0x194] sm:$0x1]
        %v2363 = vld [vmem:[#allocation2] sm:$0xe]
        %v2364 = vld [vmem:[#allocation2 + $0xc] sm:$0xe]
        %v2365 = vld [vmem:[#allocation2 + $0x18] sm:$0xe]
        %v2366 = vld [vmem:[#allocation2 + $0x24] sm:$0xe]
        %v2367 = vld [vmem:[#allocation2 + $0x30] sm:$0xe]
        %v2368 = vld [vmem:[#allocation2 + $0x3c] sm:$0xe]
        %v2369 = vld [vmem:[#allocation2 + $0x48] sm:$0xe]
        %v2370 = vld [vmem:[#allocation2 + $0x54] sm:$0xe]
        %v2371 = vld [vmem:[#allocation2 + $0x60] sm:$0xe]
        %v2372 = vld [vmem:[#allocation2 + $0x6c] sm:$0xe]
        %v2373 = vld [vmem:[#allocation2 + $0x78] sm:$0xe]
        %v2374 = vld [vmem:[#allocation2 + $0x84] sm:$0xe]
        %v2375 = vld [vmem:[#allocation2 + $0x90] sm:$0xe]
        %v2376 = vld [vmem:[#allocation2 + $0x9c] sm:$0xe]
        %v2377 = vld [vmem:[#allocation2 + $0xa8] sm:$0xe]
        %v2378 = vld [vmem:[#allocation2 + $0xb4] sm:$0xe]
        %v2379 = vld [vmem:[#allocation2 + $0xd8] sm:$0xe]
        %v2380 = vld [vmem:[#allocation2 + $0xe4] sm:$0xe]
        %v2381 = vld [vmem:[#allocation2 + $0xf0] sm:$0xe]
        %v2382 = vld [vmem:[#allocation2 + $0xfc] sm:$0xe]
        %v2383 = vld [vmem:[#allocation2 + $0x108] sm:$0xe]
        %v2384 = vld [vmem:[#allocation2 + $0x114] sm:$0xe]
        %v2385 = vld [vmem:[#allocation2 + $0x120] sm:$0xe]
        %v2386 = vld [vmem:[#allocation2 + $0x12c] sm:$0xe]
        %v2387 = vld [vmem:[#allocation2 + $0x138] sm:$0xe]
        %v2388 = vld [vmem:[#allocation2 + $0x144] sm:$0xe]
        %v2389 = vld [vmem:[#allocation2 + $0x150] sm:$0xe]
        %v2390 = vld [vmem:[#allocation2 + $0x15c] sm:$0xe]
        %v2391 = vld [vmem:[#allocation2 + $0x168] sm:$0xe]
        %v2392 = vld [vmem:[#allocation2 + $0x174] sm:$0xe]
        %v2393 = vld [vmem:[#allocation2 + $0x180] sm:$0xe]
        %v2394 = vld [vmem:[#allocation2 + $0x18c] sm:$0xe]
        %v2395 = vld [vmem:[%s2040] sm:$0xf]
        %v2396 = vld [vmem:[%s2040 + $0x4] sm:$0xf]
        %v2397 = vld [vmem:[%s2040 + $0xc] sm:$0xf]
        %v2398 = vld [vmem:[%s2040 + $0x10] sm:$0xf]
        %v2399 = vld [vmem:[%s2040 + $0x18] sm:$0xf]
        %v2400 = vld [vmem:[%s2040 + $0x1c] sm:$0xf]
        %v2401 = vld [vmem:[%s2040 + $0x24] sm:$0xf]
        %v2402 = vld [vmem:[%s2040 + $0x28] sm:$0xf]
        %v2403 = vld [vmem:[%s2040 + $0x30] sm:$0xf]
        %v2404 = vld [vmem:[%s2040 + $0x34] sm:$0xf]
        %v2405 = vld [vmem:[%s2040 + $0x3c] sm:$0xf]
        %v2406 = vld [vmem:[%s2040 + $0x40] sm:$0xf]
        %v2407 = vld [vmem:[%s2040 + $0x48] sm:$0xf]
        %v2408 = vld [vmem:[%s2040 + $0x4c] sm:$0xf]
        %v2409 = vld [vmem:[%s2040 + $0x54] sm:$0xf]
        %v2410 = vld [vmem:[%s2040 + $0x58] sm:$0xf]
        %v2411 = vld [vmem:[%s2040 + $0x60] sm:$0xf]
        %v2412 = vld [vmem:[%s2040 + $0x64] sm:$0xf]
        %v2413 = vld [vmem:[%s2040 + $0x6c] sm:$0xf]
        %v2414 = vld [vmem:[%s2040 + $0x70] sm:$0xf]
        %v2415 = vld [vmem:[%s2040 + $0x78] sm:$0xf]
        %v2416 = vld [vmem:[%s2040 + $0x7c] sm:$0xf]
        %v2417 = vld [vmem:[%s2040 + $0x84] sm:$0xf]
        %v2418 = vld [vmem:[%s2040 + $0x88] sm:$0xf]
        %v2419 = vld [vmem:[%s2040 + $0x90] sm:$0xf]
        %v2420 = vld [vmem:[%s2040 + $0x94] sm:$0xf]
        %v2421 = vld [vmem:[%s2040 + $0x9c] sm:$0xf]
        %v2422 = vld [vmem:[%s2040 + $0xa0] sm:$0xf]
        %v2423 = vld [vmem:[%s2040 + $0xa8] sm:$0xf]
        %v2424 = vld [vmem:[%s2040 + $0xac] sm:$0xf]
        %v2425 = vld [vmem:[%s2040 + $0xb4] sm:$0xf]
        %v2426 = vld [vmem:[%s2040 + $0xb8] sm:$0xf]
        %v2427 = vld [vmem:[%s2040 + $0xd8] sm:$0xf]
        %v2428 = vld [vmem:[%s2040 + $0xdc] sm:$0xf]
        %v2429 = vld [vmem:[%s2040 + $0xe4] sm:$0xf]
        %v2430 = vld [vmem:[%s2040 + $0xe8] sm:$0xf]
        %v2431 = vld [vmem:[%s2040 + $0xf0] sm:$0xf]
        %v2432 = vld [vmem:[%s2040 + $0xf4] sm:$0xf]
        %v2433 = vld [vmem:[%s2040 + $0xfc] sm:$0xf]
        %v2434 = vld [vmem:[%s2040 + $0x100] sm:$0xf]
        %v2435 = vld [vmem:[%s2040 + $0x108] sm:$0xf]
        %v2436 = vld [vmem:[%s2040 + $0x10c] sm:$0xf]
        %v2437 = vld [vmem:[%s2040 + $0x114] sm:$0xf]
        %v2438 = vld [vmem:[%s2040 + $0x118] sm:$0xf]
        %v2439 = vld [vmem:[%s2040 + $0x120] sm:$0xf]
        %v2440 = vld [vmem:[%s2040 + $0x124] sm:$0xf]
        %v2441 = vld [vmem:[%s2040 + $0x12c] sm:$0xf]
        %v2442 = vld [vmem:[%s2040 + $0x130] sm:$0xf]
        %v2443 = vld [vmem:[%s2040 + $0x138] sm:$0xf]
        %v2444 = vld [vmem:[%s2040 + $0x13c] sm:$0xf]
        %v2445 = vld [vmem:[%s2040 + $0x144] sm:$0xf]
        %v2446 = vld [vmem:[%s2040 + $0x148] sm:$0xf]
        %v2447 = vld [vmem:[%s2040 + $0x150] sm:$0xf]
        %v2448 = vld [vmem:[%s2040 + $0x154] sm:$0xf]
        %v2449 = vld [vmem:[%s2040 + $0x15c] sm:$0xf]
        %v2450 = vld [vmem:[%s2040 + $0x160] sm:$0xf]
        %v2451 = vld [vmem:[%s2040 + $0x168] sm:$0xf]
        %v2452 = vld [vmem:[%s2040 + $0x16c] sm:$0xf]
        %v2453 = vld [vmem:[%s2040 + $0x174] sm:$0xf]
        %v2454 = vld [vmem:[%s2040 + $0x178] sm:$0xf]
        %v2455 = vld [vmem:[%s2040 + $0x180] sm:$0xf]
        %v2456 = vld [vmem:[%s2040 + $0x184] sm:$0xf]
        %v2457 = vld [vmem:[%s2040 + $0x18c] sm:$0xf]
        %v2458 = vld [vmem:[%s2040 + $0x190] sm:$0xf]
        %v2459 = vld [vmem:[%s2040 + $0x8] sm:$0x1]
        %v2460 = vld [vmem:[%s2040 + $0x14] sm:$0x1]
        %v2461 = vld [vmem:[%s2040 + $0x20] sm:$0x1]
        %v2462 = vld [vmem:[%s2040 + $0x2c] sm:$0x1]
        %v2463 = vld [vmem:[%s2040 + $0x38] sm:$0x1]
        %v2464 = vld [vmem:[%s2040 + $0x44] sm:$0x1]
        %v2465 = vld [vmem:[%s2040 + $0x50] sm:$0x1]
        %v2466 = vld [vmem:[%s2040 + $0x5c] sm:$0x1]
        %v2467 = vld [vmem:[%s2040 + $0x68] sm:$0x1]
        %v2468 = vld [vmem:[%s2040 + $0x74] sm:$0x1]
        %v2469 = vld [vmem:[%s2040 + $0x80] sm:$0x1]
        %v2470 = vld [vmem:[%s2040 + $0x8c] sm:$0x1]
        %v2471 = vld [vmem:[%s2040 + $0x98] sm:$0x1]
        %v2472 = vld [vmem:[%s2040 + $0xa4] sm:$0x1]
        %v2473 = vld [vmem:[%s2040 + $0xb0] sm:$0x1]
        %v2474 = vld [vmem:[%s2040 + $0xbc] sm:$0x1]
        %v2475 = vld [vmem:[%s2040 + $0xe0] sm:$0x1]
        %v2476 = vld [vmem:[%s2040 + $0xec] sm:$0x1]
        %v2477 = vld [vmem:[%s2040 + $0xf8] sm:$0x1]
        %v2478 = vld [vmem:[%s2040 + $0x104] sm:$0x1]
        %v2479 = vld [vmem:[%s2040 + $0x110] sm:$0x1]
        %v2480 = vld [vmem:[%s2040 + $0x11c] sm:$0x1]
        %v2481 = vld [vmem:[%s2040 + $0x128] sm:$0x1]
        %v2482 = vld [vmem:[%s2040 + $0x134] sm:$0x1]
        %v2483 = vld [vmem:[%s2040 + $0x140] sm:$0x1]
        %v2484 = vld [vmem:[%s2040 + $0x14c] sm:$0x1]
        %v2485 = vld [vmem:[%s2040 + $0x158] sm:$0x1]
        %v2486 = vld [vmem:[%s2040 + $0x164] sm:$0x1]
        %v2487 = vld [vmem:[%s2040 + $0x170] sm:$0x1]
        %v2488 = vld [vmem:[%s2040 + $0x17c] sm:$0x1]
        %v2489 = vld [vmem:[%s2040 + $0x188] sm:$0x1]
        %v2490 = vld [vmem:[%s2040 + $0x194] sm:$0x1]
        %v2491 = vld [vmem:[%s2040] sm:$0xe]
        %v2492 = vld [vmem:[%s2040 + $0xc] sm:$0xe]
        %v2493 = vld [vmem:[%s2040 + $0x18] sm:$0xe]
        %v2494 = vld [vmem:[%s2040 + $0x24] sm:$0xe]
        %v2495 = vld [vmem:[%s2040 + $0x30] sm:$0xe]
        %v2496 = vld [vmem:[%s2040 + $0x3c] sm:$0xe]
        %v2497 = vld [vmem:[%s2040 + $0x48] sm:$0xe]
        %v2498 = vld [vmem:[%s2040 + $0x54] sm:$0xe]
        %v2499 = vld [vmem:[%s2040 + $0x60] sm:$0xe]
        %v2500 = vld [vmem:[%s2040 + $0x6c] sm:$0xe]
        %v2501 = vld [vmem:[%s2040 + $0x78] sm:$0xe]
        %v2502 = vld [vmem:[%s2040 + $0x84] sm:$0xe]
        %v2503 = vld [vmem:[%s2040 + $0x90] sm:$0xe]
        %v2504 = vld [vmem:[%s2040 + $0x9c] sm:$0xe]
        %v2505 = vld [vmem:[%s2040 + $0xa8] sm:$0xe]
        %v2506 = vld [vmem:[%s2040 + $0xb4] sm:$0xe]
        %v2507 = vld [vmem:[%s2040 + $0xd8] sm:$0xe]
        %v2508 = vld [vmem:[%s2040 + $0xe4] sm:$0xe]
        %v2509 = vld [vmem:[%s2040 + $0xf0] sm:$0xe]
        %v2510 = vld [vmem:[%s2040 + $0xfc] sm:$0xe]
        %v2511 = vld [vmem:[%s2040 + $0x108] sm:$0xe]
        %v2512 = vld [vmem:[%s2040 + $0x114] sm:$0xe]
        %v2513 = vld [vmem:[%s2040 + $0x120] sm:$0xe]
        %v2514 = vld [vmem:[%s2040 + $0x12c] sm:$0xe]
        %v2515 = vld [vmem:[%s2040 + $0x138] sm:$0xe]
        %v2516 = vld [vmem:[%s2040 + $0x144] sm:$0xe]
        %v2517 = vld [vmem:[%s2040 + $0x150] sm:$0xe]
        %v2518 = vld [vmem:[%s2040 + $0x15c] sm:$0xe]
        %v2519 = vld [vmem:[%s2040 + $0x168] sm:$0xe]
        %v2520 = vld [vmem:[%s2040 + $0x174] sm:$0xe]
        %v2521 = vld [vmem:[%s2040 + $0x180] sm:$0xe]
        %v2522 = vld [vmem:[%s2040 + $0x18c] sm:$0xe]
        %s2523 = scalar_lea.vmem [#allocation2], 24
        %v2524 = vld [vmem:[%s2523] sm:$0xf]
        %v2525 = vld [vmem:[%s2523 + $0x4] sm:$0xf]
        %v2526 = vld [vmem:[%s2523 + $0xc] sm:$0xf]
        %v2527 = vld [vmem:[%s2523 + $0x10] sm:$0xf]
        %v2528 = vld [vmem:[%s2523 + $0x18] sm:$0xf]
        %v2529 = vld [vmem:[%s2523 + $0x1c] sm:$0xf]
        %v2530 = vld [vmem:[%s2523 + $0x24] sm:$0xf]
        %v2531 = vld [vmem:[%s2523 + $0x28] sm:$0xf]
        %v2532 = vld [vmem:[%s2523 + $0x30] sm:$0xf]
        %v2533 = vld [vmem:[%s2523 + $0x34] sm:$0xf]
        %v2534 = vld [vmem:[%s2523 + $0x3c] sm:$0xf]
        %v2535 = vld [vmem:[%s2523 + $0x40] sm:$0xf]
        %v2536 = vld [vmem:[%s2523 + $0x48] sm:$0xf]
        %v2537 = vld [vmem:[%s2523 + $0x4c] sm:$0xf]
        %v2538 = vld [vmem:[%s2523 + $0x54] sm:$0xf]
        %v2539 = vld [vmem:[%s2523 + $0x58] sm:$0xf]
        %v2540 = vld [vmem:[%s2523 + $0x60] sm:$0xf]
        %v2541 = vld [vmem:[%s2523 + $0x64] sm:$0xf]
        %v2542 = vld [vmem:[%s2523 + $0x6c] sm:$0xf]
        %v2543 = vld [vmem:[%s2523 + $0x70] sm:$0xf]
        %v2544 = vld [vmem:[%s2523 + $0x78] sm:$0xf]
        %v2545 = vld [vmem:[%s2523 + $0x7c] sm:$0xf]
        %v2546 = vld [vmem:[%s2523 + $0x84] sm:$0xf]
        %v2547 = vld [vmem:[%s2523 + $0x88] sm:$0xf]
        %v2548 = vld [vmem:[%s2523 + $0x90] sm:$0xf]
        %v2549 = vld [vmem:[%s2523 + $0x94] sm:$0xf]
        %v2550 = vld [vmem:[%s2523 + $0x9c] sm:$0xf]
        %v2551 = vld [vmem:[%s2523 + $0xa0] sm:$0xf]
        %v2552 = vld [vmem:[%s2523 + $0xa8] sm:$0xf]
        %v2553 = vld [vmem:[%s2523 + $0xac] sm:$0xf]
        %v2554 = vld [vmem:[%s2523 + $0xb4] sm:$0xf]
        %v2555 = vld [vmem:[%s2523 + $0xb8] sm:$0xf]
        %v2556 = vld [vmem:[%s2523 + $0xd8] sm:$0xf]
        %v2557 = vld [vmem:[%s2523 + $0xdc] sm:$0xf]
        %v2558 = vld [vmem:[%s2523 + $0xe4] sm:$0xf]
        %v2559 = vld [vmem:[%s2523 + $0xe8] sm:$0xf]
        %v2560 = vld [vmem:[%s2523 + $0xf0] sm:$0xf]
        %v2561 = vld [vmem:[%s2523 + $0xf4] sm:$0xf]
        %v2562 = vld [vmem:[%s2523 + $0xfc] sm:$0xf]
        %v2563 = vld [vmem:[%s2523 + $0x100] sm:$0xf]
        %v2564 = vld [vmem:[%s2523 + $0x108] sm:$0xf]
        %v2565 = vld [vmem:[%s2523 + $0x10c] sm:$0xf]
        %v2566 = vld [vmem:[%s2523 + $0x114] sm:$0xf]
        %v2567 = vld [vmem:[%s2523 + $0x118] sm:$0xf]
        %v2568 = vld [vmem:[%s2523 + $0x120] sm:$0xf]
        %v2569 = vld [vmem:[%s2523 + $0x124] sm:$0xf]
        %v2570 = vld [vmem:[%s2523 + $0x12c] sm:$0xf]
        %v2571 = vld [vmem:[%s2523 + $0x130] sm:$0xf]
        %v2572 = vld [vmem:[%s2523 + $0x138] sm:$0xf]
        %v2573 = vld [vmem:[%s2523 + $0x13c] sm:$0xf]
        %v2574 = vld [vmem:[%s2523 + $0x144] sm:$0xf]
        %v2575 = vld [vmem:[%s2523 + $0x148] sm:$0xf]
        %v2576 = vld [vmem:[%s2523 + $0x150] sm:$0xf]
        %v2577 = vld [vmem:[%s2523 + $0x154] sm:$0xf]
        %v2578 = vld [vmem:[%s2523 + $0x15c] sm:$0xf]
        %v2579 = vld [vmem:[%s2523 + $0x160] sm:$0xf]
        %v2580 = vld [vmem:[%s2523 + $0x168] sm:$0xf]
        %v2581 = vld [vmem:[%s2523 + $0x16c] sm:$0xf]
        %v2582 = vld [vmem:[%s2523 + $0x174] sm:$0xf]
        %v2583 = vld [vmem:[%s2523 + $0x178] sm:$0xf]
        %v2584 = vld [vmem:[%s2523 + $0x180] sm:$0xf]
        %v2585 = vld [vmem:[%s2523 + $0x184] sm:$0xf]
        %v2586 = vld [vmem:[%s2523 + $0x18c] sm:$0xf]
        %v2587 = vld [vmem:[%s2523 + $0x190] sm:$0xf]
        %v2588 = vld [vmem:[%s2523 + $0x8] sm:$0x1]
        %v2589 = vld [vmem:[%s2523 + $0x14] sm:$0x1]
        %v2590 = vld [vmem:[%s2523 + $0x20] sm:$0x1]
        %v2591 = vld [vmem:[%s2523 + $0x2c] sm:$0x1]
        %v2592 = vld [vmem:[%s2523 + $0x38] sm:$0x1]
        %v2593 = vld [vmem:[%s2523 + $0x44] sm:$0x1]
        %v2594 = vld [vmem:[%s2523 + $0x50] sm:$0x1]
        %v2595 = vld [vmem:[%s2523 + $0x5c] sm:$0x1]
        %v2596 = vld [vmem:[%s2523 + $0x68] sm:$0x1]
        %v2597 = vld [vmem:[%s2523 + $0x74] sm:$0x1]
        %v2598 = vld [vmem:[%s2523 + $0x80] sm:$0x1]
        %v2599 = vld [vmem:[%s2523 + $0x8c] sm:$0x1]
        %v2600 = vld [vmem:[%s2523 + $0x98] sm:$0x1]
        %v2601 = vld [vmem:[%s2523 + $0xa4] sm:$0x1]
        %v2602 = vld [vmem:[%s2523 + $0xb0] sm:$0x1]
        %v2603 = vld [vmem:[%s2523 + $0xbc] sm:$0x1]
        %v2604 = vld [vmem:[%s2523 + $0xe0] sm:$0x1]
        %v2605 = vld [vmem:[%s2523 + $0xec] sm:$0x1]
        %v2606 = vld [vmem:[%s2523 + $0xf8] sm:$0x1]
        %v2607 = vld [vmem:[%s2523 + $0x104] sm:$0x1]
        %v2608 = vld [vmem:[%s2523 + $0x110] sm:$0x1]
        %v2609 = vld [vmem:[%s2523 + $0x11c] sm:$0x1]
        %v2610 = vld [vmem:[%s2523 + $0x128] sm:$0x1]
        %v2611 = vld [vmem:[%s2523 + $0x134] sm:$0x1]
        %v2612 = vld [vmem:[%s2523 + $0x140] sm:$0x1]
        %v2613 = vld [vmem:[%s2523 + $0x14c] sm:$0x1]
        %v2614 = vld [vmem:[%s2523 + $0x158] sm:$0x1]
        %v2615 = vld [vmem:[%s2523 + $0x164] sm:$0x1]
        %v2616 = vld [vmem:[%s2523 + $0x170] sm:$0x1]
        %v2617 = vld [vmem:[%s2523 + $0x17c] sm:$0x1]
        %v2618 = vld [vmem:[%s2523 + $0x188] sm:$0x1]
        %v2619 = vld [vmem:[%s2523 + $0x194] sm:$0x1]
        %v2620 = vld [vmem:[%s2523] sm:$0xe]
        %v2621 = vld [vmem:[%s2523 + $0xc] sm:$0xe]
        %v2622 = vld [vmem:[%s2523 + $0x18] sm:$0xe]
        %v2623 = vld [vmem:[%s2523 + $0x24] sm:$0xe]
        %v2624 = vld [vmem:[%s2523 + $0x30] sm:$0xe]
        %v2625 = vld [vmem:[%s2523 + $0x3c] sm:$0xe]
        %v2626 = vld [vmem:[%s2523 + $0x48] sm:$0xe]
        %v2627 = vld [vmem:[%s2523 + $0x54] sm:$0xe]
        %v2628 = vld [vmem:[%s2523 + $0x60] sm:$0xe]
        %v2629 = vld [vmem:[%s2523 + $0x6c] sm:$0xe]
        %v2630 = vld [vmem:[%s2523 + $0x78] sm:$0xe]
        %v2631 = vld [vmem:[%s2523 + $0x84] sm:$0xe]
        %v2632 = vld [vmem:[%s2523 + $0x90] sm:$0xe]
        %v2633 = vld [vmem:[%s2523 + $0x9c] sm:$0xe]
        %v2634 = vld [vmem:[%s2523 + $0xa8] sm:$0xe]
        %v2635 = vld [vmem:[%s2523 + $0xb4] sm:$0xe]
        %v2636 = vld [vmem:[%s2523 + $0xd8] sm:$0xe]
        %v2637 = vld [vmem:[%s2523 + $0xe4] sm:$0xe]
        %v2638 = vld [vmem:[%s2523 + $0xf0] sm:$0xe]
        %v2639 = vld [vmem:[%s2523 + $0xfc] sm:$0xe]
        %v2640 = vld [vmem:[%s2523 + $0x108] sm:$0xe]
        %v2641 = vld [vmem:[%s2523 + $0x114] sm:$0xe]
        %v2642 = vld [vmem:[%s2523 + $0x120] sm:$0xe]
        %v2643 = vld [vmem:[%s2523 + $0x12c] sm:$0xe]
        %v2644 = vld [vmem:[%s2523 + $0x138] sm:$0xe]
        %v2645 = vld [vmem:[%s2523 + $0x144] sm:$0xe]
        %v2646 = vld [vmem:[%s2523 + $0x150] sm:$0xe]
        %v2647 = vld [vmem:[%s2523 + $0x15c] sm:$0xe]
        %v2648 = vld [vmem:[%s2523 + $0x168] sm:$0xe]
        %v2649 = vld [vmem:[%s2523 + $0x174] sm:$0xe]
        %v2650 = vld [vmem:[%s2523 + $0x180] sm:$0xe]
        %v2651 = vld [vmem:[%s2523 + $0x18c] sm:$0xe]
        %v2716 = vunpack.c.l.b16 %v2267
        %v2717 = vunpack.c.l.b16 %v2268
        %v2718 = vunpack.c.l.b16 %v2269
        %v2719 = vunpack.c.l.b16 %v2270
        %v2720 = vunpack.c.l.b16 %v2271
        %v2721 = vunpack.c.l.b16 %v2272
        %v2722 = vunpack.c.l.b16 %v2273
        %v2723 = vunpack.c.l.b16 %v2274
        %v2724 = vunpack.c.l.b16 %v2275
        %v2725 = vunpack.c.l.b16 %v2276
        %v2726 = vunpack.c.l.b16 %v2277
        %v2727 = vunpack.c.l.b16 %v2278
        %v2728 = vunpack.c.l.b16 %v2279
        %v2729 = vunpack.c.l.b16 %v2280
        %v2730 = vunpack.c.l.b16 %v2281
        %v2731 = vunpack.c.l.b16 %v2282
        %v2732 = vunpack.c.l.b16 %v2283
        %v2733 = vunpack.c.l.b16 %v2284
        %v2734 = vunpack.c.l.b16 %v2285
        %v2735 = vunpack.c.l.b16 %v2286
        %v2736 = vunpack.c.l.b16 %v2287
        %v2737 = vunpack.c.l.b16 %v2288
        %v2738 = vunpack.c.l.b16 %v2289
        %v2739 = vunpack.c.l.b16 %v2290
        %v2740 = vunpack.c.l.b16 %v2291
        %v2741 = vunpack.c.l.b16 %v2292
        %v2742 = vunpack.c.l.b16 %v2293
        %v2743 = vunpack.c.l.b16 %v2294
        %v2744 = vunpack.c.l.b16 %v2295
        %v2745 = vunpack.c.l.b16 %v2296
        %v2746 = vunpack.c.l.b16 %v2297
        %v2747 = vunpack.c.l.b16 %v2298
        %v2748 = vunpack.c.l.b16 %v2299
        %v2749 = vunpack.c.l.b16 %v2300
        %v2750 = vunpack.c.l.b16 %v2301
        %v2751 = vunpack.c.l.b16 %v2302
        %v2752 = vunpack.c.l.b16 %v2303
        %v2753 = vunpack.c.l.b16 %v2304
        %v2754 = vunpack.c.l.b16 %v2305
        %v2755 = vunpack.c.l.b16 %v2306
        %v2756 = vunpack.c.l.b16 %v2307
        %v2757 = vunpack.c.l.b16 %v2308
        %v2758 = vunpack.c.l.b16 %v2309
        %v2759 = vunpack.c.l.b16 %v2310
        %v2760 = vunpack.c.l.b16 %v2311
        %v2761 = vunpack.c.l.b16 %v2312
        %v2762 = vunpack.c.l.b16 %v2313
        %v2763 = vunpack.c.l.b16 %v2314
        %v2764 = vunpack.c.l.b16 %v2315
        %v2765 = vunpack.c.l.b16 %v2316
        %v2766 = vunpack.c.l.b16 %v2317
        %v2767 = vunpack.c.l.b16 %v2318
        %v2768 = vunpack.c.l.b16 %v2319
        %v2769 = vunpack.c.l.b16 %v2320
        %v2770 = vunpack.c.l.b16 %v2321
        %v2771 = vunpack.c.l.b16 %v2322
        %v2772 = vunpack.c.l.b16 %v2323
        %v2773 = vunpack.c.l.b16 %v2324
        %v2774 = vunpack.c.l.b16 %v2325
        %v2775 = vunpack.c.l.b16 %v2326
        %v2776 = vunpack.c.l.b16 %v2327
        %v2777 = vunpack.c.l.b16 %v2328
        %v2778 = vunpack.c.l.b16 %v2329
        %v2779 = vunpack.c.l.b16 %v2330
        %v2780 = vpack.c.b16 %v2717, %v2716
        %v2781 = vpack.c.b16 %v2719, %v2718
        %v2782 = vpack.c.b16 %v2721, %v2720
        %v2783 = vpack.c.b16 %v2723, %v2722
        %v2784 = vpack.c.b16 %v2725, %v2724
        %v2785 = vpack.c.b16 %v2727, %v2726
        %v2786 = vpack.c.b16 %v2729, %v2728
        %v2787 = vpack.c.b16 %v2731, %v2730
        %v2788 = vpack.c.b16 %v2733, %v2732
        %v2789 = vpack.c.b16 %v2735, %v2734
        %v2790 = vpack.c.b16 %v2737, %v2736
        %v2791 = vpack.c.b16 %v2739, %v2738
        %v2792 = vpack.c.b16 %v2741, %v2740
        %v2793 = vpack.c.b16 %v2743, %v2742
        %v2794 = vpack.c.b16 %v2745, %v2744
        %v2795 = vpack.c.b16 %v2747, %v2746
        %v2796 = vpack.c.b16 %v2749, %v2748
        %v2797 = vpack.c.b16 %v2751, %v2750
        %v2798 = vpack.c.b16 %v2753, %v2752
        %v2799 = vpack.c.b16 %v2755, %v2754
        %v2800 = vpack.c.b16 %v2757, %v2756
        %v2801 = vpack.c.b16 %v2759, %v2758
        %v2802 = vpack.c.b16 %v2761, %v2760
        %v2803 = vpack.c.b16 %v2763, %v2762
        %v2804 = vpack.c.b16 %v2765, %v2764
        %v2805 = vpack.c.b16 %v2767, %v2766
        %v2806 = vpack.c.b16 %v2769, %v2768
        %v2807 = vpack.c.b16 %v2771, %v2770
        %v2808 = vpack.c.b16 %v2773, %v2772
        %v2809 = vpack.c.b16 %v2775, %v2774
        %v2810 = vpack.c.b16 %v2777, %v2776
        %v2811 = vpack.c.b16 %v2779, %v2778
        %v2844 = vunpack.c.l.b16 %v2331
        %v2845 = vunpack.c.l.b16 %v2332
        %v2846 = vunpack.c.l.b16 %v2333
        %v2847 = vunpack.c.l.b16 %v2334
        %v2848 = vunpack.c.l.b16 %v2335
        %v2849 = vunpack.c.l.b16 %v2336
        %v2850 = vunpack.c.l.b16 %v2337
        %v2851 = vunpack.c.l.b16 %v2338
        %v2852 = vunpack.c.l.b16 %v2339
        %v2853 = vunpack.c.l.b16 %v2340
        %v2854 = vunpack.c.l.b16 %v2341
        %v2855 = vunpack.c.l.b16 %v2342
        %v2856 = vunpack.c.l.b16 %v2343
        %v2857 = vunpack.c.l.b16 %v2344
        %v2858 = vunpack.c.l.b16 %v2345
        %v2859 = vunpack.c.l.b16 %v2346
        %v2860 = vunpack.c.l.b16 %v2347
        %v2861 = vunpack.c.l.b16 %v2348
        %v2862 = vunpack.c.l.b16 %v2349
        %v2863 = vunpack.c.l.b16 %v2350
        %v2864 = vunpack.c.l.b16 %v2351
        %v2865 = vunpack.c.l.b16 %v2352
        %v2866 = vunpack.c.l.b16 %v2353
        %v2867 = vunpack.c.l.b16 %v2354
        %v2868 = vunpack.c.l.b16 %v2355
        %v2869 = vunpack.c.l.b16 %v2356
        %v2870 = vunpack.c.l.b16 %v2357
        %v2871 = vunpack.c.l.b16 %v2358
        %v2872 = vunpack.c.l.b16 %v2359
        %v2873 = vunpack.c.l.b16 %v2360
        %v2874 = vunpack.c.l.b16 %v2361
        %v2875 = vunpack.c.l.b16 %v2362
        %v2876 = vpack.c.b16 %v2844, %v2844
        %v2877 = vpack.c.b16 %v2845, %v2845
        %v2878 = vpack.c.b16 %v2846, %v2846
        %v2879 = vpack.c.b16 %v2847, %v2847
        %v2880 = vpack.c.b16 %v2848, %v2848
        %v2881 = vpack.c.b16 %v2849, %v2849
        %v2882 = vpack.c.b16 %v2850, %v2850
        %v2883 = vpack.c.b16 %v2851, %v2851
        %v2884 = vpack.c.b16 %v2852, %v2852
        %v2885 = vpack.c.b16 %v2853, %v2853
        %v2886 = vpack.c.b16 %v2854, %v2854
        %v2887 = vpack.c.b16 %v2855, %v2855
        %v2888 = vpack.c.b16 %v2856, %v2856
        %v2889 = vpack.c.b16 %v2857, %v2857
        %v2890 = vpack.c.b16 %v2858, %v2858
        %v2891 = vpack.c.b16 %v2859, %v2859
        %v2892 = vpack.c.b16 %v2860, %v2860
        %v2893 = vpack.c.b16 %v2861, %v2861
        %v2894 = vpack.c.b16 %v2862, %v2862
        %v2895 = vpack.c.b16 %v2863, %v2863
        %v2896 = vpack.c.b16 %v2864, %v2864
        %v2897 = vpack.c.b16 %v2865, %v2865
        %v2898 = vpack.c.b16 %v2866, %v2866
        %v2899 = vpack.c.b16 %v2867, %v2867
        %v2900 = vpack.c.b16 %v2868, %v2868
        %v2901 = vpack.c.b16 %v2869, %v2869
        %v2902 = vpack.c.b16 %v2870, %v2870
        %v2903 = vpack.c.b16 %v2871, %v2871
        %v2904 = vpack.c.b16 %v2872, %v2872
        %v2905 = vpack.c.b16 %v2873, %v2873
        %v2906 = vpack.c.b16 %v2874, %v2874
        %v2907 = vpack.c.b16 %v2875, %v2875
        %vm2908 = vsmask.f32 7424
        %v2910 = vshrl.u32 %v2780, 16
        %v2912 = vshll.u32 %v2780, 16
        %v2914 = vrot.slane %v2912, 1
        %v2915 = vor.u32 %v2910, %v2914
        %v2917 = vshll.u32 %v2876, 16
        %v2919 = vrot.slane %v2917, 1
        %v2920 = vsel %vm2908, %v2915, %v2919
        %v2922 = vshrl.u32 %v2781, 16
        %v2924 = vshll.u32 %v2781, 16
        %v2926 = vrot.slane %v2924, 1
        %v2927 = vor.u32 %v2922, %v2926
        %v2929 = vshll.u32 %v2877, 16
        %v2931 = vrot.slane %v2929, 1
        %v2932 = vsel %vm2908, %v2927, %v2931
        %v2934 = vshrl.u32 %v2782, 16
        %v2936 = vshll.u32 %v2782, 16
        %v2938 = vrot.slane %v2936, 1
        %v2939 = vor.u32 %v2934, %v2938
        %v2941 = vshll.u32 %v2878, 16
        %v2943 = vrot.slane %v2941, 1
        %v2944 = vsel %vm2908, %v2939, %v2943
        %v2946 = vshrl.u32 %v2783, 16
        %v2948 = vshll.u32 %v2783, 16
        %v2950 = vrot.slane %v2948, 1
        %v2951 = vor.u32 %v2946, %v2950
        %v2953 = vshll.u32 %v2879, 16
        %v2955 = vrot.slane %v2953, 1
        %v2956 = vsel %vm2908, %v2951, %v2955
        %v2958 = vshrl.u32 %v2784, 16
        %v2960 = vshll.u32 %v2784, 16
        %v2962 = vrot.slane %v2960, 1
        %v2963 = vor.u32 %v2958, %v2962
        %v2965 = vshll.u32 %v2880, 16
        %v2967 = vrot.slane %v2965, 1
        %v2968 = vsel %vm2908, %v2963, %v2967
        %v2970 = vshrl.u32 %v2785, 16
        %v2972 = vshll.u32 %v2785, 16
        %v2974 = vrot.slane %v2972, 1
        %v2975 = vor.u32 %v2970, %v2974
        %v2977 = vshll.u32 %v2881, 16
        %v2979 = vrot.slane %v2977, 1
        %v2980 = vsel %vm2908, %v2975, %v2979
        %v2982 = vshrl.u32 %v2786, 16
        %v2984 = vshll.u32 %v2786, 16
        %v2986 = vrot.slane %v2984, 1
        %v2987 = vor.u32 %v2982, %v2986
        %v2989 = vshll.u32 %v2882, 16
        %v2991 = vrot.slane %v2989, 1
        %v2992 = vsel %vm2908, %v2987, %v2991
        %v2994 = vshrl.u32 %v2787, 16
        %v2996 = vshll.u32 %v2787, 16
        %v2998 = vrot.slane %v2996, 1
        %v2999 = vor.u32 %v2994, %v2998
        %v3001 = vshll.u32 %v2883, 16
        %v3003 = vrot.slane %v3001, 1
        %v3004 = vsel %vm2908, %v2999, %v3003
        %v3006 = vshrl.u32 %v2788, 16
        %v3008 = vshll.u32 %v2788, 16
        %v3010 = vrot.slane %v3008, 1
        %v3011 = vor.u32 %v3006, %v3010
        %v3013 = vshll.u32 %v2884, 16
        %v3015 = vrot.slane %v3013, 1
        %v3016 = vsel %vm2908, %v3011, %v3015
        %v3018 = vshrl.u32 %v2789, 16
        %v3020 = vshll.u32 %v2789, 16
        %v3022 = vrot.slane %v3020, 1
        %v3023 = vor.u32 %v3018, %v3022
        %v3025 = vshll.u32 %v2885, 16
        %v3027 = vrot.slane %v3025, 1
        %v3028 = vsel %vm2908, %v3023, %v3027
        %v3030 = vshrl.u32 %v2790, 16
        %v3032 = vshll.u32 %v2790, 16
        %v3034 = vrot.slane %v3032, 1
        %v3035 = vor.u32 %v3030, %v3034
        %v3037 = vshll.u32 %v2886, 16
        %v3039 = vrot.slane %v3037, 1
        %v3040 = vsel %vm2908, %v3035, %v3039
        %v3042 = vshrl.u32 %v2791, 16
        %v3044 = vshll.u32 %v2791, 16
        %v3046 = vrot.slane %v3044, 1
        %v3047 = vor.u32 %v3042, %v3046
        %v3049 = vshll.u32 %v2887, 16
        %v3051 = vrot.slane %v3049, 1
        %v3052 = vsel %vm2908, %v3047, %v3051
        %v3054 = vshrl.u32 %v2792, 16
        %v3056 = vshll.u32 %v2792, 16
        %v3058 = vrot.slane %v3056, 1
        %v3059 = vor.u32 %v3054, %v3058
        %v3061 = vshll.u32 %v2888, 16
        %v3063 = vrot.slane %v3061, 1
        %v3064 = vsel %vm2908, %v3059, %v3063
        %v3066 = vshrl.u32 %v2793, 16
        %v3068 = vshll.u32 %v2793, 16
        %v3070 = vrot.slane %v3068, 1
        %v3071 = vor.u32 %v3066, %v3070
        %v3073 = vshll.u32 %v2889, 16
        %v3075 = vrot.slane %v3073, 1
        %v3076 = vsel %vm2908, %v3071, %v3075
        %v3078 = vshrl.u32 %v2794, 16
        %v3080 = vshll.u32 %v2794, 16
        %v3082 = vrot.slane %v3080, 1
        %v3083 = vor.u32 %v3078, %v3082
        %v3085 = vshll.u32 %v2890, 16
        %v3087 = vrot.slane %v3085, 1
        %v3088 = vsel %vm2908, %v3083, %v3087
        %v3090 = vshrl.u32 %v2795, 16
        %v3092 = vshll.u32 %v2795, 16
        %v3094 = vrot.slane %v3092, 1
        %v3095 = vor.u32 %v3090, %v3094
        %v3097 = vshll.u32 %v2891, 16
        %v3099 = vrot.slane %v3097, 1
        %v3100 = vsel %vm2908, %v3095, %v3099
        %v3102 = vshrl.u32 %v2796, 16
        %v3104 = vshll.u32 %v2796, 16
        %v3106 = vrot.slane %v3104, 1
        %v3107 = vor.u32 %v3102, %v3106
        %v3109 = vshll.u32 %v2892, 16
        %v3111 = vrot.slane %v3109, 1
        %v3112 = vsel %vm2908, %v3107, %v3111
        %v3114 = vshrl.u32 %v2797, 16
        %v3116 = vshll.u32 %v2797, 16
        %v3118 = vrot.slane %v3116, 1
        %v3119 = vor.u32 %v3114, %v3118
        %v3121 = vshll.u32 %v2893, 16
        %v3123 = vrot.slane %v3121, 1
        %v3124 = vsel %vm2908, %v3119, %v3123
        %v3126 = vshrl.u32 %v2798, 16
        %v3128 = vshll.u32 %v2798, 16
        %v3130 = vrot.slane %v3128, 1
        %v3131 = vor.u32 %v3126, %v3130
        %v3133 = vshll.u32 %v2894, 16
        %v3135 = vrot.slane %v3133, 1
        %v3136 = vsel %vm2908, %v3131, %v3135
        %v3138 = vshrl.u32 %v2799, 16
        %v3140 = vshll.u32 %v2799, 16
        %v3142 = vrot.slane %v3140, 1
        %v3143 = vor.u32 %v3138, %v3142
        %v3145 = vshll.u32 %v2895, 16
        %v3147 = vrot.slane %v3145, 1
        %v3148 = vsel %vm2908, %v3143, %v3147
        %v3150 = vshrl.u32 %v2800, 16
        %v3152 = vshll.u32 %v2800, 16
        %v3154 = vrot.slane %v3152, 1
        %v3155 = vor.u32 %v3150, %v3154
        %v3157 = vshll.u32 %v2896, 16
        %v3159 = vrot.slane %v3157, 1
        %v3160 = vsel %vm2908, %v3155, %v3159
        %v3162 = vshrl.u32 %v2801, 16
        %v3164 = vshll.u32 %v2801, 16
        %v3166 = vrot.slane %v3164, 1
        %v3167 = vor.u32 %v3162, %v3166
        %v3169 = vshll.u32 %v2897, 16
        %v3171 = vrot.slane %v3169, 1
        %v3172 = vsel %vm2908, %v3167, %v3171
        %v3174 = vshrl.u32 %v2802, 16
        %v3176 = vshll.u32 %v2802, 16
        %v3178 = vrot.slane %v3176, 1
        %v3179 = vor.u32 %v3174, %v3178
        %v3181 = vshll.u32 %v2898, 16
        %v3183 = vrot.slane %v3181, 1
        %v3184 = vsel %vm2908, %v3179, %v3183
        %v3186 = vshrl.u32 %v2803, 16
        %v3188 = vshll.u32 %v2803, 16
        %v3190 = vrot.slane %v3188, 1
        %v3191 = vor.u32 %v3186, %v3190
        %v3193 = vshll.u32 %v2899, 16
        %v3195 = vrot.slane %v3193, 1
        %v3196 = vsel %vm2908, %v3191, %v3195
        %v3198 = vshrl.u32 %v2804, 16
        %v3200 = vshll.u32 %v2804, 16
        %v3202 = vrot.slane %v3200, 1
        %v3203 = vor.u32 %v3198, %v3202
        %v3205 = vshll.u32 %v2900, 16
        %v3207 = vrot.slane %v3205, 1
        %v3208 = vsel %vm2908, %v3203, %v3207
        %v3210 = vshrl.u32 %v2805, 16
        %v3212 = vshll.u32 %v2805, 16
        %v3214 = vrot.slane %v3212, 1
        %v3215 = vor.u32 %v3210, %v3214
        %v3217 = vshll.u32 %v2901, 16
        %v3219 = vrot.slane %v3217, 1
        %v3220 = vsel %vm2908, %v3215, %v3219
        %v3222 = vshrl.u32 %v2806, 16
        %v3224 = vshll.u32 %v2806, 16
        %v3226 = vrot.slane %v3224, 1
        %v3227 = vor.u32 %v3222, %v3226
        %v3229 = vshll.u32 %v2902, 16
        %v3231 = vrot.slane %v3229, 1
        %v3232 = vsel %vm2908, %v3227, %v3231
        %v3234 = vshrl.u32 %v2807, 16
        %v3236 = vshll.u32 %v2807, 16
        %v3238 = vrot.slane %v3236, 1
        %v3239 = vor.u32 %v3234, %v3238
        %v3241 = vshll.u32 %v2903, 16
        %v3243 = vrot.slane %v3241, 1
        %v3244 = vsel %vm2908, %v3239, %v3243
        %v3246 = vshrl.u32 %v2808, 16
        %v3248 = vshll.u32 %v2808, 16
        %v3250 = vrot.slane %v3248, 1
        %v3251 = vor.u32 %v3246, %v3250
        %v3253 = vshll.u32 %v2904, 16
        %v3255 = vrot.slane %v3253, 1
        %v3256 = vsel %vm2908, %v3251, %v3255
        %v3258 = vshrl.u32 %v2809, 16
        %v3260 = vshll.u32 %v2809, 16
        %v3262 = vrot.slane %v3260, 1
        %v3263 = vor.u32 %v3258, %v3262
        %v3265 = vshll.u32 %v2905, 16
        %v3267 = vrot.slane %v3265, 1
        %v3268 = vsel %vm2908, %v3263, %v3267
        %v3270 = vshrl.u32 %v2810, 16
        %v3272 = vshll.u32 %v2810, 16
        %v3274 = vrot.slane %v3272, 1
        %v3275 = vor.u32 %v3270, %v3274
        %v3277 = vshll.u32 %v2906, 16
        %v3279 = vrot.slane %v3277, 1
        %v3280 = vsel %vm2908, %v3275, %v3279
        %v3282 = vshrl.u32 %v2811, 16
        %v3284 = vshll.u32 %v2811, 16
        %v3286 = vrot.slane %v3284, 1
        %v3287 = vor.u32 %v3282, %v3286
        %v3289 = vshll.u32 %v2907, 16
        %v3291 = vrot.slane %v3289, 1
        %v3292 = vsel %vm2908, %v3287, %v3291
        %3293 = vrot.lane.b32.xlu0 %v2920, 4
        %v3294 = vpop.permute.xlu0 %3293
        %3295 = vrot.lane.b32.xlu0 %v2932, 4
        %v3296 = vpop.permute.xlu0 %3295
        %3297 = vrot.lane.b32.xlu0 %v2944, 4
        %v3298 = vpop.permute.xlu0 %3297
        %3299 = vrot.lane.b32.xlu0 %v2956, 4
        %v3300 = vpop.permute.xlu0 %3299
        %3301 = vrot.lane.b32.xlu0 %v2968, 4
        %v3302 = vpop.permute.xlu0 %3301
        %3303 = vrot.lane.b32.xlu0 %v2980, 4
        %v3304 = vpop.permute.xlu0 %3303
        %3305 = vrot.lane.b32.xlu0 %v2992, 4
        %v3306 = vpop.permute.xlu0 %3305
        %3307 = vrot.lane.b32.xlu0 %v3004, 4
        %v3308 = vpop.permute.xlu0 %3307
        %3309 = vrot.lane.b32.xlu0 %v3016, 4
        %v3310 = vpop.permute.xlu0 %3309
        %3311 = vrot.lane.b32.xlu0 %v3028, 4
        %v3312 = vpop.permute.xlu0 %3311
        %3313 = vrot.lane.b32.xlu0 %v3040, 4
        %v3314 = vpop.permute.xlu0 %3313
        %3315 = vrot.lane.b32.xlu0 %v3052, 4
        %v3316 = vpop.permute.xlu0 %3315
        %3317 = vrot.lane.b32.xlu0 %v3064, 4
        %v3318 = vpop.permute.xlu0 %3317
        %3319 = vrot.lane.b32.xlu0 %v3076, 4
        %v3320 = vpop.permute.xlu0 %3319
        %3321 = vrot.lane.b32.xlu0 %v3088, 4
        %v3322 = vpop.permute.xlu0 %3321
        %3323 = vrot.lane.b32.xlu0 %v3100, 4
        %v3324 = vpop.permute.xlu0 %3323
        %3325 = vrot.lane.b32.xlu0 %v3112, 4
        %v3326 = vpop.permute.xlu0 %3325
        %3327 = vrot.lane.b32.xlu0 %v3124, 4
        %v3328 = vpop.permute.xlu0 %3327
        %3329 = vrot.lane.b32.xlu0 %v3136, 4
        %v3330 = vpop.permute.xlu0 %3329
        %3331 = vrot.lane.b32.xlu0 %v3148, 4
        %v3332 = vpop.permute.xlu0 %3331
        %3333 = vrot.lane.b32.xlu0 %v3160, 4
        %v3334 = vpop.permute.xlu0 %3333
        %3335 = vrot.lane.b32.xlu0 %v3172, 4
        %v3336 = vpop.permute.xlu0 %3335
        %3337 = vrot.lane.b32.xlu0 %v3184, 4
        %v3338 = vpop.permute.xlu0 %3337
        %3339 = vrot.lane.b32.xlu0 %v3196, 4
        %v3340 = vpop.permute.xlu0 %3339
        %3341 = vrot.lane.b32.xlu0 %v3208, 4
        %v3342 = vpop.permute.xlu0 %3341
        %3343 = vrot.lane.b32.xlu0 %v3220, 4
        %v3344 = vpop.permute.xlu0 %3343
        %3345 = vrot.lane.b32.xlu0 %v3232, 4
        %v3346 = vpop.permute.xlu0 %3345
        %3347 = vrot.lane.b32.xlu0 %v3244, 4
        %v3348 = vpop.permute.xlu0 %3347
        %3349 = vrot.lane.b32.xlu0 %v3256, 4
        %v3350 = vpop.permute.xlu0 %3349
        %3351 = vrot.lane.b32.xlu0 %v3268, 4
        %v3352 = vpop.permute.xlu0 %3351
        %3353 = vrot.lane.b32.xlu0 %v3280, 4
        %v3354 = vpop.permute.xlu0 %3353
        %3355 = vrot.lane.b32.xlu0 %v3292, 4
        %v3356 = vpop.permute.xlu0 %3355
        %v3389 = vunpack.c.l.b16 %v2363
        %v3390 = vunpack.c.l.b16 %v2364
        %v3391 = vunpack.c.l.b16 %v2365
        %v3392 = vunpack.c.l.b16 %v2366
        %v3393 = vunpack.c.l.b16 %v2367
        %v3394 = vunpack.c.l.b16 %v2368
        %v3395 = vunpack.c.l.b16 %v2369
        %v3396 = vunpack.c.l.b16 %v2370
        %v3397 = vunpack.c.l.b16 %v2371
        %v3398 = vunpack.c.l.b16 %v2372
        %v3399 = vunpack.c.l.b16 %v2373
        %v3400 = vunpack.c.l.b16 %v2374
        %v3401 = vunpack.c.l.b16 %v2375
        %v3402 = vunpack.c.l.b16 %v2376
        %v3403 = vunpack.c.l.b16 %v2377
        %v3404 = vunpack.c.l.b16 %v2378
        %v3405 = vunpack.c.l.b16 %v2379
        %v3406 = vunpack.c.l.b16 %v2380
        %v3407 = vunpack.c.l.b16 %v2381
        %v3408 = vunpack.c.l.b16 %v2382
        %v3409 = vunpack.c.l.b16 %v2383
        %v3410 = vunpack.c.l.b16 %v2384
        %v3411 = vunpack.c.l.b16 %v2385
        %v3412 = vunpack.c.l.b16 %v2386
        %v3413 = vunpack.c.l.b16 %v2387
        %v3414 = vunpack.c.l.b16 %v2388
        %v3415 = vunpack.c.l.b16 %v2389
        %v3416 = vunpack.c.l.b16 %v2390
        %v3417 = vunpack.c.l.b16 %v2391
        %v3418 = vunpack.c.l.b16 %v2392
        %v3419 = vunpack.c.l.b16 %v2393
        %v3420 = vunpack.c.l.b16 %v2394
        %v3421 = vpack.c.b16 %v2717, %v3389
        %v3422 = vpack.c.b16 %v2719, %v3390
        %v3423 = vpack.c.b16 %v2721, %v3391
        %v3424 = vpack.c.b16 %v2723, %v3392
        %v3425 = vpack.c.b16 %v2725, %v3393
        %v3426 = vpack.c.b16 %v2727, %v3394
        %v3427 = vpack.c.b16 %v2729, %v3395
        %v3428 = vpack.c.b16 %v2731, %v3396
        %v3429 = vpack.c.b16 %v2733, %v3397
        %v3430 = vpack.c.b16 %v2735, %v3398
        %v3431 = vpack.c.b16 %v2737, %v3399
        %v3432 = vpack.c.b16 %v2739, %v3400
        %v3433 = vpack.c.b16 %v2741, %v3401
        %v3434 = vpack.c.b16 %v2743, %v3402
        %v3435 = vpack.c.b16 %v2745, %v3403
        %v3436 = vpack.c.b16 %v2747, %v3404
        %v3437 = vpack.c.b16 %v2749, %v3405
        %v3438 = vpack.c.b16 %v2751, %v3406
        %v3439 = vpack.c.b16 %v2753, %v3407
        %v3440 = vpack.c.b16 %v2755, %v3408
        %v3441 = vpack.c.b16 %v2757, %v3409
        %v3442 = vpack.c.b16 %v2759, %v3410
        %v3443 = vpack.c.b16 %v2761, %v3411
        %v3444 = vpack.c.b16 %v2763, %v3412
        %v3445 = vpack.c.b16 %v2765, %v3413
        %v3446 = vpack.c.b16 %v2767, %v3414
        %v3447 = vpack.c.b16 %v2769, %v3415
        %v3448 = vpack.c.b16 %v2771, %v3416
        %v3449 = vpack.c.b16 %v2773, %v3417
        %v3450 = vpack.c.b16 %v2775, %v3418
        %v3451 = vpack.c.b16 %v2777, %v3419
        %v3452 = vpack.c.b16 %v2779, %v3420
        %vm3453 = vcmask 1046528
        %v3454 = vrot.slane %v3421, 1
        %v3455 = vrot.slane %v2876, 1
        %v3456 = vsel %vm3453, %v3454, %v3455
        %v3457 = vrot.slane %v3422, 1
        %v3458 = vrot.slane %v2877, 1
        %v3459 = vsel %vm3453, %v3457, %v3458
        %v3460 = vrot.slane %v3423, 1
        %v3461 = vrot.slane %v2878, 1
        %v3462 = vsel %vm3453, %v3460, %v3461
        %v3463 = vrot.slane %v3424, 1
        %v3464 = vrot.slane %v2879, 1
        %v3465 = vsel %vm3453, %v3463, %v3464
        %v3466 = vrot.slane %v3425, 1
        %v3467 = vrot.slane %v2880, 1
        %v3468 = vsel %vm3453, %v3466, %v3467
        %v3469 = vrot.slane %v3426, 1
        %v3470 = vrot.slane %v2881, 1
        %v3471 = vsel %vm3453, %v3469, %v3470
        %v3472 = vrot.slane %v3427, 1
        %v3473 = vrot.slane %v2882, 1
        %v3474 = vsel %vm3453, %v3472, %v3473
        %v3475 = vrot.slane %v3428, 1
        %v3476 = vrot.slane %v2883, 1
        %v3477 = vsel %vm3453, %v3475, %v3476
        %v3478 = vrot.slane %v3429, 1
        %v3479 = vrot.slane %v2884, 1
        %v3480 = vsel %vm3453, %v3478, %v3479
        %v3481 = vrot.slane %v3430, 1
        %v3482 = vrot.slane %v2885, 1
        %v3483 = vsel %vm3453, %v3481, %v3482
        %v3484 = vrot.slane %v3431, 1
        %v3485 = vrot.slane %v2886, 1
        %v3486 = vsel %vm3453, %v3484, %v3485
        %v3487 = vrot.slane %v3432, 1
        %v3488 = vrot.slane %v2887, 1
        %v3489 = vsel %vm3453, %v3487, %v3488
        %v3490 = vrot.slane %v3433, 1
        %v3491 = vrot.slane %v2888, 1
        %v3492 = vsel %vm3453, %v3490, %v3491
        %v3493 = vrot.slane %v3434, 1
        %v3494 = vrot.slane %v2889, 1
        %v3495 = vsel %vm3453, %v3493, %v3494
        %v3496 = vrot.slane %v3435, 1
        %v3497 = vrot.slane %v2890, 1
        %v3498 = vsel %vm3453, %v3496, %v3497
        %v3499 = vrot.slane %v3436, 1
        %v3500 = vrot.slane %v2891, 1
        %v3501 = vsel %vm3453, %v3499, %v3500
        %v3502 = vrot.slane %v3437, 1
        %v3503 = vrot.slane %v2892, 1
        %v3504 = vsel %vm3453, %v3502, %v3503
        %v3505 = vrot.slane %v3438, 1
        %v3506 = vrot.slane %v2893, 1
        %v3507 = vsel %vm3453, %v3505, %v3506
        %v3508 = vrot.slane %v3439, 1
        %v3509 = vrot.slane %v2894, 1
        %v3510 = vsel %vm3453, %v3508, %v3509
        %v3511 = vrot.slane %v3440, 1
        %v3512 = vrot.slane %v2895, 1
        %v3513 = vsel %vm3453, %v3511, %v3512
        %v3514 = vrot.slane %v3441, 1
        %v3515 = vrot.slane %v2896, 1
        %v3516 = vsel %vm3453, %v3514, %v3515
        %v3517 = vrot.slane %v3442, 1
        %v3518 = vrot.slane %v2897, 1
        %v3519 = vsel %vm3453, %v3517, %v3518
        %v3520 = vrot.slane %v3443, 1
        %v3521 = vrot.slane %v2898, 1
        %v3522 = vsel %vm3453, %v3520, %v3521
        %v3523 = vrot.slane %v3444, 1
        %v3524 = vrot.slane %v2899, 1
        %v3525 = vsel %vm3453, %v3523, %v3524
        %v3526 = vrot.slane %v3445, 1
        %v3527 = vrot.slane %v2900, 1
        %v3528 = vsel %vm3453, %v3526, %v3527
        %v3529 = vrot.slane %v3446, 1
        %v3530 = vrot.slane %v2901, 1
        %v3531 = vsel %vm3453, %v3529, %v3530
        %v3532 = vrot.slane %v3447, 1
        %v3533 = vrot.slane %v2902, 1
        %v3534 = vsel %vm3453, %v3532, %v3533
        %v3535 = vrot.slane %v3448, 1
        %v3536 = vrot.slane %v2903, 1
        %v3537 = vsel %vm3453, %v3535, %v3536
        %v3538 = vrot.slane %v3449, 1
        %v3539 = vrot.slane %v2904, 1
        %v3540 = vsel %vm3453, %v3538, %v3539
        %v3541 = vrot.slane %v3450, 1
        %v3542 = vrot.slane %v2905, 1
        %v3543 = vsel %vm3453, %v3541, %v3542
        %v3544 = vrot.slane %v3451, 1
        %v3545 = vrot.slane %v2906, 1
        %v3546 = vsel %vm3453, %v3544, %v3545
        %v3547 = vrot.slane %v3452, 1
        %v3548 = vrot.slane %v2907, 1
        %v3549 = vsel %vm3453, %v3547, %v3548
        %3550 = vrot.lane.b32.xlu0 %v3456, 8
        %v3551 = vpop.permute.xlu0 %3550
        %3552 = vrot.lane.b32.xlu0 %v3459, 8
        %v3553 = vpop.permute.xlu0 %3552
        %3554 = vrot.lane.b32.xlu0 %v3462, 8
        %v3555 = vpop.permute.xlu0 %3554
        %3556 = vrot.lane.b32.xlu0 %v3465, 8
        %v3557 = vpop.permute.xlu0 %3556
        %3558 = vrot.lane.b32.xlu0 %v3468, 8
        %v3559 = vpop.permute.xlu0 %3558
        %3560 = vrot.lane.b32.xlu0 %v3471, 8
        %v3561 = vpop.permute.xlu0 %3560
        %3562 = vrot.lane.b32.xlu0 %v3474, 8
        %v3563 = vpop.permute.xlu0 %3562
        %3564 = vrot.lane.b32.xlu0 %v3477, 8
        %v3565 = vpop.permute.xlu0 %3564
        %3566 = vrot.lane.b32.xlu0 %v3480, 8
        %v3567 = vpop.permute.xlu0 %3566
        %3568 = vrot.lane.b32.xlu0 %v3483, 8
        %v3569 = vpop.permute.xlu0 %3568
        %3570 = vrot.lane.b32.xlu0 %v3486, 8
        %v3571 = vpop.permute.xlu0 %3570
        %3572 = vrot.lane.b32.xlu0 %v3489, 8
        %v3573 = vpop.permute.xlu0 %3572
        %3574 = vrot.lane.b32.xlu0 %v3492, 8
        %v3575 = vpop.permute.xlu0 %3574
        %3576 = vrot.lane.b32.xlu0 %v3495, 8
        %v3577 = vpop.permute.xlu0 %3576
        %3578 = vrot.lane.b32.xlu0 %v3498, 8
        %v3579 = vpop.permute.xlu0 %3578
        %3580 = vrot.lane.b32.xlu0 %v3501, 8
        %v3581 = vpop.permute.xlu0 %3580
        %3582 = vrot.lane.b32.xlu0 %v3504, 8
        %v3583 = vpop.permute.xlu0 %3582
        %3584 = vrot.lane.b32.xlu0 %v3507, 8
        %v3585 = vpop.permute.xlu0 %3584
        %3586 = vrot.lane.b32.xlu0 %v3510, 8
        %v3587 = vpop.permute.xlu0 %3586
        %3588 = vrot.lane.b32.xlu0 %v3513, 8
        %v3589 = vpop.permute.xlu0 %3588
        %3590 = vrot.lane.b32.xlu0 %v3516, 8
        %v3591 = vpop.permute.xlu0 %3590
        %3592 = vrot.lane.b32.xlu0 %v3519, 8
        %v3593 = vpop.permute.xlu0 %3592
        %3594 = vrot.lane.b32.xlu0 %v3522, 8
        %v3595 = vpop.permute.xlu0 %3594
        %3596 = vrot.lane.b32.xlu0 %v3525, 8
        %v3597 = vpop.permute.xlu0 %3596
        %3598 = vrot.lane.b32.xlu0 %v3528, 8
        %v3599 = vpop.permute.xlu0 %3598
        %3600 = vrot.lane.b32.xlu0 %v3531, 8
        %v3601 = vpop.permute.xlu0 %3600
        %3602 = vrot.lane.b32.xlu0 %v3534, 8
        %v3603 = vpop.permute.xlu0 %3602
        %3604 = vrot.lane.b32.xlu0 %v3537, 8
        %v3605 = vpop.permute.xlu0 %3604
        %3606 = vrot.lane.b32.xlu0 %v3540, 8
        %v3607 = vpop.permute.xlu0 %3606
        %3608 = vrot.lane.b32.xlu0 %v3543, 8
        %v3609 = vpop.permute.xlu0 %3608
        %3610 = vrot.lane.b32.xlu0 %v3546, 8
        %v3611 = vpop.permute.xlu0 %3610
        %3612 = vrot.lane.b32.xlu0 %v3549, 8
        %v3613 = vpop.permute.xlu0 %3612
        %v3678 = vunpack.c.l.b16 %v2395
        %v3679 = vunpack.c.l.b16 %v2396
        %v3680 = vunpack.c.l.b16 %v2397
        %v3681 = vunpack.c.l.b16 %v2398
        %v3682 = vunpack.c.l.b16 %v2399
        %v3683 = vunpack.c.l.b16 %v2400
        %v3684 = vunpack.c.l.b16 %v2401
        %v3685 = vunpack.c.l.b16 %v2402
        %v3686 = vunpack.c.l.b16 %v2403
        %v3687 = vunpack.c.l.b16 %v2404
        %v3688 = vunpack.c.l.b16 %v2405
        %v3689 = vunpack.c.l.b16 %v2406
        %v3690 = vunpack.c.l.b16 %v2407
        %v3691 = vunpack.c.l.b16 %v2408
        %v3692 = vunpack.c.l.b16 %v2409
        %v3693 = vunpack.c.l.b16 %v2410
        %v3694 = vunpack.c.l.b16 %v2411
        %v3695 = vunpack.c.l.b16 %v2412
        %v3696 = vunpack.c.l.b16 %v2413
        %v3697 = vunpack.c.l.b16 %v2414
        %v3698 = vunpack.c.l.b16 %v2415
        %v3699 = vunpack.c.l.b16 %v2416
        %v3700 = vunpack.c.l.b16 %v2417
        %v3701 = vunpack.c.l.b16 %v2418
        %v3702 = vunpack.c.l.b16 %v2419
        %v3703 = vunpack.c.l.b16 %v2420
        %v3704 = vunpack.c.l.b16 %v2421
        %v3705 = vunpack.c.l.b16 %v2422
        %v3706 = vunpack.c.l.b16 %v2423
        %v3707 = vunpack.c.l.b16 %v2424
        %v3708 = vunpack.c.l.b16 %v2425
        %v3709 = vunpack.c.l.b16 %v2426
        %v3710 = vunpack.c.l.b16 %v2427
        %v3711 = vunpack.c.l.b16 %v2428
        %v3712 = vunpack.c.l.b16 %v2429
        %v3713 = vunpack.c.l.b16 %v2430
        %v3714 = vunpack.c.l.b16 %v2431
        %v3715 = vunpack.c.l.b16 %v2432
        %v3716 = vunpack.c.l.b16 %v2433
        %v3717 = vunpack.c.l.b16 %v2434
        %v3718 = vunpack.c.l.b16 %v2435
        %v3719 = vunpack.c.l.b16 %v2436
        %v3720 = vunpack.c.l.b16 %v2437
        %v3721 = vunpack.c.l.b16 %v2438
        %v3722 = vunpack.c.l.b16 %v2439
        %v3723 = vunpack.c.l.b16 %v2440
        %v3724 = vunpack.c.l.b16 %v2441
        %v3725 = vunpack.c.l.b16 %v2442
        %v3726 = vunpack.c.l.b16 %v2443
        %v3727 = vunpack.c.l.b16 %v2444
        %v3728 = vunpack.c.l.b16 %v2445
        %v3729 = vunpack.c.l.b16 %v2446
        %v3730 = vunpack.c.l.b16 %v2447
        %v3731 = vunpack.c.l.b16 %v2448
        %v3732 = vunpack.c.l.b16 %v2449
        %v3733 = vunpack.c.l.b16 %v2450
        %v3734 = vunpack.c.l.b16 %v2451
        %v3735 = vunpack.c.l.b16 %v2452
        %v3736 = vunpack.c.l.b16 %v2453
        %v3737 = vunpack.c.l.b16 %v2454
        %v3738 = vunpack.c.l.b16 %v2455
        %v3739 = vunpack.c.l.b16 %v2456
        %v3740 = vunpack.c.l.b16 %v2457
        %v3741 = vunpack.c.l.b16 %v2458
        %v3742 = vpack.c.b16 %v3679, %v3678
        %v3743 = vpack.c.b16 %v3681, %v3680
        %v3744 = vpack.c.b16 %v3683, %v3682
        %v3745 = vpack.c.b16 %v3685, %v3684
        %v3746 = vpack.c.b16 %v3687, %v3686
        %v3747 = vpack.c.b16 %v3689, %v3688
        %v3748 = vpack.c.b16 %v3691, %v3690
        %v3749 = vpack.c.b16 %v3693, %v3692
        %v3750 = vpack.c.b16 %v3695, %v3694
        %v3751 = vpack.c.b16 %v3697, %v3696
        %v3752 = vpack.c.b16 %v3699, %v3698
        %v3753 = vpack.c.b16 %v3701, %v3700
        %v3754 = vpack.c.b16 %v3703, %v3702
        %v3755 = vpack.c.b16 %v3705, %v3704
        %v3756 = vpack.c.b16 %v3707, %v3706
        %v3757 = vpack.c.b16 %v3709, %v3708
        %v3758 = vpack.c.b16 %v3711, %v3710
        %v3759 = vpack.c.b16 %v3713, %v3712
        %v3760 = vpack.c.b16 %v3715, %v3714
        %v3761 = vpack.c.b16 %v3717, %v3716
        %v3762 = vpack.c.b16 %v3719, %v3718
        %v3763 = vpack.c.b16 %v3721, %v3720
        %v3764 = vpack.c.b16 %v3723, %v3722
        %v3765 = vpack.c.b16 %v3725, %v3724
        %v3766 = vpack.c.b16 %v3727, %v3726
        %v3767 = vpack.c.b16 %v3729, %v3728
        %v3768 = vpack.c.b16 %v3731, %v3730
        %v3769 = vpack.c.b16 %v3733, %v3732
        %v3770 = vpack.c.b16 %v3735, %v3734
        %v3771 = vpack.c.b16 %v3737, %v3736
        %v3772 = vpack.c.b16 %v3739, %v3738
        %v3773 = vpack.c.b16 %v3741, %v3740
        %3774 = vrot.lane.b32.xlu0 %v3742, 12
        %v3775 = vpop.permute.xlu0 %3774
        %3776 = vrot.lane.b32.xlu0 %v3743, 12
        %v3777 = vpop.permute.xlu0 %3776
        %3778 = vrot.lane.b32.xlu0 %v3744, 12
        %v3779 = vpop.permute.xlu0 %3778
        %3780 = vrot.lane.b32.xlu0 %v3745, 12
        %v3781 = vpop.permute.xlu0 %3780
        %3782 = vrot.lane.b32.xlu0 %v3746, 12
        %v3783 = vpop.permute.xlu0 %3782
        %3784 = vrot.lane.b32.xlu0 %v3747, 12
        %v3785 = vpop.permute.xlu0 %3784
        %3786 = vrot.lane.b32.xlu0 %v3748, 12
        %v3787 = vpop.permute.xlu0 %3786
        %3788 = vrot.lane.b32.xlu0 %v3749, 12
        %v3789 = vpop.permute.xlu0 %3788
        %3790 = vrot.lane.b32.xlu0 %v3750, 12
        %v3791 = vpop.permute.xlu0 %3790
        %3792 = vrot.lane.b32.xlu0 %v3751, 12
        %v3793 = vpop.permute.xlu0 %3792
        %3794 = vrot.lane.b32.xlu0 %v3752, 12
        %v3795 = vpop.permute.xlu0 %3794
        %3796 = vrot.lane.b32.xlu0 %v3753, 12
        %v3797 = vpop.permute.xlu0 %3796
        %3798 = vrot.lane.b32.xlu0 %v3754, 12
        %v3799 = vpop.permute.xlu0 %3798
        %3800 = vrot.lane.b32.xlu0 %v3755, 12
        %v3801 = vpop.permute.xlu0 %3800
        %3802 = vrot.lane.b32.xlu0 %v3756, 12
        %v3803 = vpop.permute.xlu0 %3802
        %3804 = vrot.lane.b32.xlu0 %v3757, 12
        %v3805 = vpop.permute.xlu0 %3804
        %3806 = vrot.lane.b32.xlu0 %v3758, 12
        %v3807 = vpop.permute.xlu0 %3806
        %3808 = vrot.lane.b32.xlu0 %v3759, 12
        %v3809 = vpop.permute.xlu0 %3808
        %3810 = vrot.lane.b32.xlu0 %v3760, 12
        %v3811 = vpop.permute.xlu0 %3810
        %3812 = vrot.lane.b32.xlu0 %v3761, 12
        %v3813 = vpop.permute.xlu0 %3812
        %3814 = vrot.lane.b32.xlu0 %v3762, 12
        %v3815 = vpop.permute.xlu0 %3814
        %3816 = vrot.lane.b32.xlu0 %v3763, 12
        %v3817 = vpop.permute.xlu0 %3816
        %3818 = vrot.lane.b32.xlu0 %v3764, 12
        %v3819 = vpop.permute.xlu0 %3818
        %3820 = vrot.lane.b32.xlu0 %v3765, 12
        %v3821 = vpop.permute.xlu0 %3820
        %3822 = vrot.lane.b32.xlu0 %v3766, 12
        %v3823 = vpop.permute.xlu0 %3822
        %3824 = vrot.lane.b32.xlu0 %v3767, 12
        %v3825 = vpop.permute.xlu0 %3824
        %3826 = vrot.lane.b32.xlu0 %v3768, 12
        %v3827 = vpop.permute.xlu0 %3826
        %3828 = vrot.lane.b32.xlu0 %v3769, 12
        %v3829 = vpop.permute.xlu0 %3828
        %3830 = vrot.lane.b32.xlu0 %v3770, 12
        %v3831 = vpop.permute.xlu0 %3830
        %3832 = vrot.lane.b32.xlu0 %v3771, 12
        %v3833 = vpop.permute.xlu0 %3832
        %3834 = vrot.lane.b32.xlu0 %v3772, 12
        %v3835 = vpop.permute.xlu0 %3834
        %3836 = vrot.lane.b32.xlu0 %v3773, 12
        %v3837 = vpop.permute.xlu0 %3836
        %v3870 = vunpack.c.l.b16 %v2459
        %v3871 = vunpack.c.l.b16 %v2460
        %v3872 = vunpack.c.l.b16 %v2461
        %v3873 = vunpack.c.l.b16 %v2462
        %v3874 = vunpack.c.l.b16 %v2463
        %v3875 = vunpack.c.l.b16 %v2464
        %v3876 = vunpack.c.l.b16 %v2465
        %v3877 = vunpack.c.l.b16 %v2466
        %v3878 = vunpack.c.l.b16 %v2467
        %v3879 = vunpack.c.l.b16 %v2468
        %v3880 = vunpack.c.l.b16 %v2469
        %v3881 = vunpack.c.l.b16 %v2470
        %v3882 = vunpack.c.l.b16 %v2471
        %v3883 = vunpack.c.l.b16 %v2472
        %v3884 = vunpack.c.l.b16 %v2473
        %v3885 = vunpack.c.l.b16 %v2474
        %v3886 = vunpack.c.l.b16 %v2475
        %v3887 = vunpack.c.l.b16 %v2476
        %v3888 = vunpack.c.l.b16 %v2477
        %v3889 = vunpack.c.l.b16 %v2478
        %v3890 = vunpack.c.l.b16 %v2479
        %v3891 = vunpack.c.l.b16 %v2480
        %v3892 = vunpack.c.l.b16 %v2481
        %v3893 = vunpack.c.l.b16 %v2482
        %v3894 = vunpack.c.l.b16 %v2483
        %v3895 = vunpack.c.l.b16 %v2484
        %v3896 = vunpack.c.l.b16 %v2485
        %v3897 = vunpack.c.l.b16 %v2486
        %v3898 = vunpack.c.l.b16 %v2487
        %v3899 = vunpack.c.l.b16 %v2488
        %v3900 = vunpack.c.l.b16 %v2489
        %v3901 = vunpack.c.l.b16 %v2490
        %v3902 = vpack.c.b16 %v3870, %v3870
        %v3903 = vpack.c.b16 %v3871, %v3871
        %v3904 = vpack.c.b16 %v3872, %v3872
        %v3905 = vpack.c.b16 %v3873, %v3873
        %v3906 = vpack.c.b16 %v3874, %v3874
        %v3907 = vpack.c.b16 %v3875, %v3875
        %v3908 = vpack.c.b16 %v3876, %v3876
        %v3909 = vpack.c.b16 %v3877, %v3877
        %v3910 = vpack.c.b16 %v3878, %v3878
        %v3911 = vpack.c.b16 %v3879, %v3879
        %v3912 = vpack.c.b16 %v3880, %v3880
        %v3913 = vpack.c.b16 %v3881, %v3881
        %v3914 = vpack.c.b16 %v3882, %v3882
        %v3915 = vpack.c.b16 %v3883, %v3883
        %v3916 = vpack.c.b16 %v3884, %v3884
        %v3917 = vpack.c.b16 %v3885, %v3885
        %v3918 = vpack.c.b16 %v3886, %v3886
        %v3919 = vpack.c.b16 %v3887, %v3887
        %v3920 = vpack.c.b16 %v3888, %v3888
        %v3921 = vpack.c.b16 %v3889, %v3889
        %v3922 = vpack.c.b16 %v3890, %v3890
        %v3923 = vpack.c.b16 %v3891, %v3891
        %v3924 = vpack.c.b16 %v3892, %v3892
        %v3925 = vpack.c.b16 %v3893, %v3893
        %v3926 = vpack.c.b16 %v3894, %v3894
        %v3927 = vpack.c.b16 %v3895, %v3895
        %v3928 = vpack.c.b16 %v3896, %v3896
        %v3929 = vpack.c.b16 %v3897, %v3897
        %v3930 = vpack.c.b16 %v3898, %v3898
        %v3931 = vpack.c.b16 %v3899, %v3899
        %v3932 = vpack.c.b16 %v3900, %v3900
        %v3933 = vpack.c.b16 %v3901, %v3901
        %v3935 = vshrl.u32 %v3742, 16
        %v3937 = vshll.u32 %v3742, 16
        %v3939 = vrot.slane %v3937, 1
        %v3940 = vor.u32 %v3935, %v3939
        %v3942 = vshll.u32 %v3902, 16
        %v3944 = vrot.slane %v3942, 1
        %v3945 = vsel %vm2908, %v3940, %v3944
        %v3947 = vshrl.u32 %v3743, 16
        %v3949 = vshll.u32 %v3743, 16
        %v3951 = vrot.slane %v3949, 1
        %v3952 = vor.u32 %v3947, %v3951
        %v3954 = vshll.u32 %v3903, 16
        %v3956 = vrot.slane %v3954, 1
        %v3957 = vsel %vm2908, %v3952, %v3956
        %v3959 = vshrl.u32 %v3744, 16
        %v3961 = vshll.u32 %v3744, 16
        %v3963 = vrot.slane %v3961, 1
        %v3964 = vor.u32 %v3959, %v3963
        %v3966 = vshll.u32 %v3904, 16
        %v3968 = vrot.slane %v3966, 1
        %v3969 = vsel %vm2908, %v3964, %v3968
        %v3971 = vshrl.u32 %v3745, 16
        %v3973 = vshll.u32 %v3745, 16
        %v3975 = vrot.slane %v3973, 1
        %v3976 = vor.u32 %v3971, %v3975
        %v3978 = vshll.u32 %v3905, 16
        %v3980 = vrot.slane %v3978, 1
        %v3981 = vsel %vm2908, %v3976, %v3980
        %v3983 = vshrl.u32 %v3746, 16
        %v3985 = vshll.u32 %v3746, 16
        %v3987 = vrot.slane %v3985, 1
        %v3988 = vor.u32 %v3983, %v3987
        %v3990 = vshll.u32 %v3906, 16
        %v3992 = vrot.slane %v3990, 1
        %v3993 = vsel %vm2908, %v3988, %v3992
        %v3995 = vshrl.u32 %v3747, 16
        %v3997 = vshll.u32 %v3747, 16
        %v3999 = vrot.slane %v3997, 1
        %v4000 = vor.u32 %v3995, %v3999
        %v4002 = vshll.u32 %v3907, 16
        %v4004 = vrot.slane %v4002, 1
        %v4005 = vsel %vm2908, %v4000, %v4004
        %v4007 = vshrl.u32 %v3748, 16
        %v4009 = vshll.u32 %v3748, 16
        %v4011 = vrot.slane %v4009, 1
        %v4012 = vor.u32 %v4007, %v4011
        %v4014 = vshll.u32 %v3908, 16
        %v4016 = vrot.slane %v4014, 1
        %v4017 = vsel %vm2908, %v4012, %v4016
        %v4019 = vshrl.u32 %v3749, 16
        %v4021 = vshll.u32 %v3749, 16
        %v4023 = vrot.slane %v4021, 1
        %v4024 = vor.u32 %v4019, %v4023
        %v4026 = vshll.u32 %v3909, 16
        %v4028 = vrot.slane %v4026, 1
        %v4029 = vsel %vm2908, %v4024, %v4028
        %v4031 = vshrl.u32 %v3750, 16
        %v4033 = vshll.u32 %v3750, 16
        %v4035 = vrot.slane %v4033, 1
        %v4036 = vor.u32 %v4031, %v4035
        %v4038 = vshll.u32 %v3910, 16
        %v4040 = vrot.slane %v4038, 1
        %v4041 = vsel %vm2908, %v4036, %v4040
        %v4043 = vshrl.u32 %v3751, 16
        %v4045 = vshll.u32 %v3751, 16
        %v4047 = vrot.slane %v4045, 1
        %v4048 = vor.u32 %v4043, %v4047
        %v4050 = vshll.u32 %v3911, 16
        %v4052 = vrot.slane %v4050, 1
        %v4053 = vsel %vm2908, %v4048, %v4052
        %v4055 = vshrl.u32 %v3752, 16
        %v4057 = vshll.u32 %v3752, 16
        %v4059 = vrot.slane %v4057, 1
        %v4060 = vor.u32 %v4055, %v4059
        %v4062 = vshll.u32 %v3912, 16
        %v4064 = vrot.slane %v4062, 1
        %v4065 = vsel %vm2908, %v4060, %v4064
        %v4067 = vshrl.u32 %v3753, 16
        %v4069 = vshll.u32 %v3753, 16
        %v4071 = vrot.slane %v4069, 1
        %v4072 = vor.u32 %v4067, %v4071
        %v4074 = vshll.u32 %v3913, 16
        %v4076 = vrot.slane %v4074, 1
        %v4077 = vsel %vm2908, %v4072, %v4076
        %v4079 = vshrl.u32 %v3754, 16
        %v4081 = vshll.u32 %v3754, 16
        %v4083 = vrot.slane %v4081, 1
        %v4084 = vor.u32 %v4079, %v4083
        %v4086 = vshll.u32 %v3914, 16
        %v4088 = vrot.slane %v4086, 1
        %v4089 = vsel %vm2908, %v4084, %v4088
        %v4091 = vshrl.u32 %v3755, 16
        %v4093 = vshll.u32 %v3755, 16
        %v4095 = vrot.slane %v4093, 1
        %v4096 = vor.u32 %v4091, %v4095
        %v4098 = vshll.u32 %v3915, 16
        %v4100 = vrot.slane %v4098, 1
        %v4101 = vsel %vm2908, %v4096, %v4100
        %v4103 = vshrl.u32 %v3756, 16
        %v4105 = vshll.u32 %v3756, 16
        %v4107 = vrot.slane %v4105, 1
        %v4108 = vor.u32 %v4103, %v4107
        %v4110 = vshll.u32 %v3916, 16
        %v4112 = vrot.slane %v4110, 1
        %v4113 = vsel %vm2908, %v4108, %v4112
        %v4115 = vshrl.u32 %v3757, 16
        %v4117 = vshll.u32 %v3757, 16
        %v4119 = vrot.slane %v4117, 1
        %v4120 = vor.u32 %v4115, %v4119
        %v4122 = vshll.u32 %v3917, 16
        %v4124 = vrot.slane %v4122, 1
        %v4125 = vsel %vm2908, %v4120, %v4124
        %v4127 = vshrl.u32 %v3758, 16
        %v4129 = vshll.u32 %v3758, 16
        %v4131 = vrot.slane %v4129, 1
        %v4132 = vor.u32 %v4127, %v4131
        %v4134 = vshll.u32 %v3918, 16
        %v4136 = vrot.slane %v4134, 1
        %v4137 = vsel %vm2908, %v4132, %v4136
        %v4139 = vshrl.u32 %v3759, 16
        %v4141 = vshll.u32 %v3759, 16
        %v4143 = vrot.slane %v4141, 1
        %v4144 = vor.u32 %v4139, %v4143
        %v4146 = vshll.u32 %v3919, 16
        %v4148 = vrot.slane %v4146, 1
        %v4149 = vsel %vm2908, %v4144, %v4148
        %v4151 = vshrl.u32 %v3760, 16
        %v4153 = vshll.u32 %v3760, 16
        %v4155 = vrot.slane %v4153, 1
        %v4156 = vor.u32 %v4151, %v4155
        %v4158 = vshll.u32 %v3920, 16
        %v4160 = vrot.slane %v4158, 1
        %v4161 = vsel %vm2908, %v4156, %v4160
        %v4163 = vshrl.u32 %v3761, 16
        %v4165 = vshll.u32 %v3761, 16
        %v4167 = vrot.slane %v4165, 1
        %v4168 = vor.u32 %v4163, %v4167
        %v4170 = vshll.u32 %v3921, 16
        %v4172 = vrot.slane %v4170, 1
        %v4173 = vsel %vm2908, %v4168, %v4172
        %v4175 = vshrl.u32 %v3762, 16
        %v4177 = vshll.u32 %v3762, 16
        %v4179 = vrot.slane %v4177, 1
        %v4180 = vor.u32 %v4175, %v4179
        %v4182 = vshll.u32 %v3922, 16
        %v4184 = vrot.slane %v4182, 1
        %v4185 = vsel %vm2908, %v4180, %v4184
        %v4187 = vshrl.u32 %v3763, 16
        %v4189 = vshll.u32 %v3763, 16
        %v4191 = vrot.slane %v4189, 1
        %v4192 = vor.u32 %v4187, %v4191
        %v4194 = vshll.u32 %v3923, 16
        %v4196 = vrot.slane %v4194, 1
        %v4197 = vsel %vm2908, %v4192, %v4196
        %v4199 = vshrl.u32 %v3764, 16
        %v4201 = vshll.u32 %v3764, 16
        %v4203 = vrot.slane %v4201, 1
        %v4204 = vor.u32 %v4199, %v4203
        %v4206 = vshll.u32 %v3924, 16
        %v4208 = vrot.slane %v4206, 1
        %v4209 = vsel %vm2908, %v4204, %v4208
        %v4211 = vshrl.u32 %v3765, 16
        %v4213 = vshll.u32 %v3765, 16
        %v4215 = vrot.slane %v4213, 1
        %v4216 = vor.u32 %v4211, %v4215
        %v4218 = vshll.u32 %v3925, 16
        %v4220 = vrot.slane %v4218, 1
        %v4221 = vsel %vm2908, %v4216, %v4220
        %v4223 = vshrl.u32 %v3766, 16
        %v4225 = vshll.u32 %v3766, 16
        %v4227 = vrot.slane %v4225, 1
        %v4228 = vor.u32 %v4223, %v4227
        %v4230 = vshll.u32 %v3926, 16
        %v4232 = vrot.slane %v4230, 1
        %v4233 = vsel %vm2908, %v4228, %v4232
        %v4235 = vshrl.u32 %v3767, 16
        %v4237 = vshll.u32 %v3767, 16
        %v4239 = vrot.slane %v4237, 1
        %v4240 = vor.u32 %v4235, %v4239
        %v4242 = vshll.u32 %v3927, 16
        %v4244 = vrot.slane %v4242, 1
        %v4245 = vsel %vm2908, %v4240, %v4244
        %v4247 = vshrl.u32 %v3768, 16
        %v4249 = vshll.u32 %v3768, 16
        %v4251 = vrot.slane %v4249, 1
        %v4252 = vor.u32 %v4247, %v4251
        %v4254 = vshll.u32 %v3928, 16
        %v4256 = vrot.slane %v4254, 1
        %v4257 = vsel %vm2908, %v4252, %v4256
        %v4259 = vshrl.u32 %v3769, 16
        %v4261 = vshll.u32 %v3769, 16
        %v4263 = vrot.slane %v4261, 1
        %v4264 = vor.u32 %v4259, %v4263
        %v4266 = vshll.u32 %v3929, 16
        %v4268 = vrot.slane %v4266, 1
        %v4269 = vsel %vm2908, %v4264, %v4268
        %v4271 = vshrl.u32 %v3770, 16
        %v4273 = vshll.u32 %v3770, 16
        %v4275 = vrot.slane %v4273, 1
        %v4276 = vor.u32 %v4271, %v4275
        %v4278 = vshll.u32 %v3930, 16
        %v4280 = vrot.slane %v4278, 1
        %v4281 = vsel %vm2908, %v4276, %v4280
        %v4283 = vshrl.u32 %v3771, 16
        %v4285 = vshll.u32 %v3771, 16
        %v4287 = vrot.slane %v4285, 1
        %v4288 = vor.u32 %v4283, %v4287
        %v4290 = vshll.u32 %v3931, 16
        %v4292 = vrot.slane %v4290, 1
        %v4293 = vsel %vm2908, %v4288, %v4292
        %v4295 = vshrl.u32 %v3772, 16
        %v4297 = vshll.u32 %v3772, 16
        %v4299 = vrot.slane %v4297, 1
        %v4300 = vor.u32 %v4295, %v4299
        %v4302 = vshll.u32 %v3932, 16
        %v4304 = vrot.slane %v4302, 1
        %v4305 = vsel %vm2908, %v4300, %v4304
        %v4307 = vshrl.u32 %v3773, 16
        %v4309 = vshll.u32 %v3773, 16
        %v4311 = vrot.slane %v4309, 1
        %v4312 = vor.u32 %v4307, %v4311
        %v4314 = vshll.u32 %v3933, 16
        %v4316 = vrot.slane %v4314, 1
        %v4317 = vsel %vm2908, %v4312, %v4316
        %4318 = vrot.lane.b32.xlu0 %v3945, 16
        %v4319 = vpop.permute.xlu0 %4318
        %4320 = vrot.lane.b32.xlu0 %v3957, 16
        %v4321 = vpop.permute.xlu0 %4320
        %4322 = vrot.lane.b32.xlu0 %v3969, 16
        %v4323 = vpop.permute.xlu0 %4322
        %4324 = vrot.lane.b32.xlu0 %v3981, 16
        %v4325 = vpop.permute.xlu0 %4324
        %4326 = vrot.lane.b32.xlu0 %v3993, 16
        %v4327 = vpop.permute.xlu0 %4326
        %4328 = vrot.lane.b32.xlu0 %v4005, 16
        %v4329 = vpop.permute.xlu0 %4328
        %4330 = vrot.lane.b32.xlu0 %v4017, 16
        %v4331 = vpop.permute.xlu0 %4330
        %4332 = vrot.lane.b32.xlu0 %v4029, 16
        %v4333 = vpop.permute.xlu0 %4332
        %4334 = vrot.lane.b32.xlu0 %v4041, 16
        %v4335 = vpop.permute.xlu0 %4334
        %4336 = vrot.lane.b32.xlu0 %v4053, 16
        %v4337 = vpop.permute.xlu0 %4336
        %4338 = vrot.lane.b32.xlu0 %v4065, 16
        %v4339 = vpop.permute.xlu0 %4338
        %4340 = vrot.lane.b32.xlu0 %v4077, 16
        %v4341 = vpop.permute.xlu0 %4340
        %4342 = vrot.lane.b32.xlu0 %v4089, 16
        %v4343 = vpop.permute.xlu0 %4342
        %4344 = vrot.lane.b32.xlu0 %v4101, 16
        %v4345 = vpop.permute.xlu0 %4344
        %4346 = vrot.lane.b32.xlu0 %v4113, 16
        %v4347 = vpop.permute.xlu0 %4346
        %4348 = vrot.lane.b32.xlu0 %v4125, 16
        %v4349 = vpop.permute.xlu0 %4348
        %4350 = vrot.lane.b32.xlu0 %v4137, 16
        %v4351 = vpop.permute.xlu0 %4350
        %4352 = vrot.lane.b32.xlu0 %v4149, 16
        %v4353 = vpop.permute.xlu0 %4352
        %4354 = vrot.lane.b32.xlu0 %v4161, 16
        %v4355 = vpop.permute.xlu0 %4354
        %4356 = vrot.lane.b32.xlu0 %v4173, 16
        %v4357 = vpop.permute.xlu0 %4356
        %4358 = vrot.lane.b32.xlu0 %v4185, 16
        %v4359 = vpop.permute.xlu0 %4358
        %4360 = vrot.lane.b32.xlu0 %v4197, 16
        %v4361 = vpop.permute.xlu0 %4360
        %4362 = vrot.lane.b32.xlu0 %v4209, 16
        %v4363 = vpop.permute.xlu0 %4362
        %4364 = vrot.lane.b32.xlu0 %v4221, 16
        %v4365 = vpop.permute.xlu0 %4364
        %4366 = vrot.lane.b32.xlu0 %v4233, 16
        %v4367 = vpop.permute.xlu0 %4366
        %4368 = vrot.lane.b32.xlu0 %v4245, 16
        %v4369 = vpop.permute.xlu0 %4368
        %4370 = vrot.lane.b32.xlu0 %v4257, 16
        %v4371 = vpop.permute.xlu0 %4370
        %4372 = vrot.lane.b32.xlu0 %v4269, 16
        %v4373 = vpop.permute.xlu0 %4372
        %4374 = vrot.lane.b32.xlu0 %v4281, 16
        %v4375 = vpop.permute.xlu0 %4374
        %4376 = vrot.lane.b32.xlu0 %v4293, 16
        %v4377 = vpop.permute.xlu0 %4376
        %4378 = vrot.lane.b32.xlu0 %v4305, 16
        %v4379 = vpop.permute.xlu0 %4378
        %4380 = vrot.lane.b32.xlu0 %v4317, 16
        %v4381 = vpop.permute.xlu0 %4380
        %v4414 = vunpack.c.l.b16 %v2491
        %v4415 = vunpack.c.l.b16 %v2492
        %v4416 = vunpack.c.l.b16 %v2493
        %v4417 = vunpack.c.l.b16 %v2494
        %v4418 = vunpack.c.l.b16 %v2495
        %v4419 = vunpack.c.l.b16 %v2496
        %v4420 = vunpack.c.l.b16 %v2497
        %v4421 = vunpack.c.l.b16 %v2498
        %v4422 = vunpack.c.l.b16 %v2499
        %v4423 = vunpack.c.l.b16 %v2500
        %v4424 = vunpack.c.l.b16 %v2501
        %v4425 = vunpack.c.l.b16 %v2502
        %v4426 = vunpack.c.l.b16 %v2503
        %v4427 = vunpack.c.l.b16 %v2504
        %v4428 = vunpack.c.l.b16 %v2505
        %v4429 = vunpack.c.l.b16 %v2506
        %v4430 = vunpack.c.l.b16 %v2507
        %v4431 = vunpack.c.l.b16 %v2508
        %v4432 = vunpack.c.l.b16 %v2509
        %v4433 = vunpack.c.l.b16 %v2510
        %v4434 = vunpack.c.l.b16 %v2511
        %v4435 = vunpack.c.l.b16 %v2512
        %v4436 = vunpack.c.l.b16 %v2513
        %v4437 = vunpack.c.l.b16 %v2514
        %v4438 = vunpack.c.l.b16 %v2515
        %v4439 = vunpack.c.l.b16 %v2516
        %v4440 = vunpack.c.l.b16 %v2517
        %v4441 = vunpack.c.l.b16 %v2518
        %v4442 = vunpack.c.l.b16 %v2519
        %v4443 = vunpack.c.l.b16 %v2520
        %v4444 = vunpack.c.l.b16 %v2521
        %v4445 = vunpack.c.l.b16 %v2522
        %v4446 = vpack.c.b16 %v3679, %v4414
        %v4447 = vpack.c.b16 %v3681, %v4415
        %v4448 = vpack.c.b16 %v3683, %v4416
        %v4449 = vpack.c.b16 %v3685, %v4417
        %v4450 = vpack.c.b16 %v3687, %v4418
        %v4451 = vpack.c.b16 %v3689, %v4419
        %v4452 = vpack.c.b16 %v3691, %v4420
        %v4453 = vpack.c.b16 %v3693, %v4421
        %v4454 = vpack.c.b16 %v3695, %v4422
        %v4455 = vpack.c.b16 %v3697, %v4423
        %v4456 = vpack.c.b16 %v3699, %v4424
        %v4457 = vpack.c.b16 %v3701, %v4425
        %v4458 = vpack.c.b16 %v3703, %v4426
        %v4459 = vpack.c.b16 %v3705, %v4427
        %v4460 = vpack.c.b16 %v3707, %v4428
        %v4461 = vpack.c.b16 %v3709, %v4429
        %v4462 = vpack.c.b16 %v3711, %v4430
        %v4463 = vpack.c.b16 %v3713, %v4431
        %v4464 = vpack.c.b16 %v3715, %v4432
        %v4465 = vpack.c.b16 %v3717, %v4433
        %v4466 = vpack.c.b16 %v3719, %v4434
        %v4467 = vpack.c.b16 %v3721, %v4435
        %v4468 = vpack.c.b16 %v3723, %v4436
        %v4469 = vpack.c.b16 %v3725, %v4437
        %v4470 = vpack.c.b16 %v3727, %v4438
        %v4471 = vpack.c.b16 %v3729, %v4439
        %v4472 = vpack.c.b16 %v3731, %v4440
        %v4473 = vpack.c.b16 %v3733, %v4441
        %v4474 = vpack.c.b16 %v3735, %v4442
        %v4475 = vpack.c.b16 %v3737, %v4443
        %v4476 = vpack.c.b16 %v3739, %v4444
        %v4477 = vpack.c.b16 %v3741, %v4445
        %v4478 = vrot.slane %v4446, 1
        %v4479 = vrot.slane %v3902, 1
        %v4480 = vsel %vm3453, %v4478, %v4479
        %v4481 = vrot.slane %v4447, 1
        %v4482 = vrot.slane %v3903, 1
        %v4483 = vsel %vm3453, %v4481, %v4482
        %v4484 = vrot.slane %v4448, 1
        %v4485 = vrot.slane %v3904, 1
        %v4486 = vsel %vm3453, %v4484, %v4485
        %v4487 = vrot.slane %v4449, 1
        %v4488 = vrot.slane %v3905, 1
        %v4489 = vsel %vm3453, %v4487, %v4488
        %v4490 = vrot.slane %v4450, 1
        %v4491 = vrot.slane %v3906, 1
        %v4492 = vsel %vm3453, %v4490, %v4491
        %v4493 = vrot.slane %v4451, 1
        %v4494 = vrot.slane %v3907, 1
        %v4495 = vsel %vm3453, %v4493, %v4494
        %v4496 = vrot.slane %v4452, 1
        %v4497 = vrot.slane %v3908, 1
        %v4498 = vsel %vm3453, %v4496, %v4497
        %v4499 = vrot.slane %v4453, 1
        %v4500 = vrot.slane %v3909, 1
        %v4501 = vsel %vm3453, %v4499, %v4500
        %v4502 = vrot.slane %v4454, 1
        %v4503 = vrot.slane %v3910, 1
        %v4504 = vsel %vm3453, %v4502, %v4503
        %v4505 = vrot.slane %v4455, 1
        %v4506 = vrot.slane %v3911, 1
        %v4507 = vsel %vm3453, %v4505, %v4506
        %v4508 = vrot.slane %v4456, 1
        %v4509 = vrot.slane %v3912, 1
        %v4510 = vsel %vm3453, %v4508, %v4509
        %v4511 = vrot.slane %v4457, 1
        %v4512 = vrot.slane %v3913, 1
        %v4513 = vsel %vm3453, %v4511, %v4512
        %v4514 = vrot.slane %v4458, 1
        %v4515 = vrot.slane %v3914, 1
        %v4516 = vsel %vm3453, %v4514, %v4515
        %v4517 = vrot.slane %v4459, 1
        %v4518 = vrot.slane %v3915, 1
        %v4519 = vsel %vm3453, %v4517, %v4518
        %v4520 = vrot.slane %v4460, 1
        %v4521 = vrot.slane %v3916, 1
        %v4522 = vsel %vm3453, %v4520, %v4521
        %v4523 = vrot.slane %v4461, 1
        %v4524 = vrot.slane %v3917, 1
        %v4525 = vsel %vm3453, %v4523, %v4524
        %v4526 = vrot.slane %v4462, 1
        %v4527 = vrot.slane %v3918, 1
        %v4528 = vsel %vm3453, %v4526, %v4527
        %v4529 = vrot.slane %v4463, 1
        %v4530 = vrot.slane %v3919, 1
        %v4531 = vsel %vm3453, %v4529, %v4530
        %v4532 = vrot.slane %v4464, 1
        %v4533 = vrot.slane %v3920, 1
        %v4534 = vsel %vm3453, %v4532, %v4533
        %v4535 = vrot.slane %v4465, 1
        %v4536 = vrot.slane %v3921, 1
        %v4537 = vsel %vm3453, %v4535, %v4536
        %v4538 = vrot.slane %v4466, 1
        %v4539 = vrot.slane %v3922, 1
        %v4540 = vsel %vm3453, %v4538, %v4539
        %v4541 = vrot.slane %v4467, 1
        %v4542 = vrot.slane %v3923, 1
        %v4543 = vsel %vm3453, %v4541, %v4542
        %v4544 = vrot.slane %v4468, 1
        %v4545 = vrot.slane %v3924, 1
        %v4546 = vsel %vm3453, %v4544, %v4545
        %v4547 = vrot.slane %v4469, 1
        %v4548 = vrot.slane %v3925, 1
        %v4549 = vsel %vm3453, %v4547, %v4548
        %v4550 = vrot.slane %v4470, 1
        %v4551 = vrot.slane %v3926, 1
        %v4552 = vsel %vm3453, %v4550, %v4551
        %v4553 = vrot.slane %v4471, 1
        %v4554 = vrot.slane %v3927, 1
        %v4555 = vsel %vm3453, %v4553, %v4554
        %v4556 = vrot.slane %v4472, 1
        %v4557 = vrot.slane %v3928, 1
        %v4558 = vsel %vm3453, %v4556, %v4557
        %v4559 = vrot.slane %v4473, 1
        %v4560 = vrot.slane %v3929, 1
        %v4561 = vsel %vm3453, %v4559, %v4560
        %v4562 = vrot.slane %v4474, 1
        %v4563 = vrot.slane %v3930, 1
        %v4564 = vsel %vm3453, %v4562, %v4563
        %v4565 = vrot.slane %v4475, 1
        %v4566 = vrot.slane %v3931, 1
        %v4567 = vsel %vm3453, %v4565, %v4566
        %v4568 = vrot.slane %v4476, 1
        %v4569 = vrot.slane %v3932, 1
        %v4570 = vsel %vm3453, %v4568, %v4569
        %v4571 = vrot.slane %v4477, 1
        %v4572 = vrot.slane %v3933, 1
        %v4573 = vsel %vm3453, %v4571, %v4572
        %4574 = vrot.lane.b32.xlu0 %v4480, 20
        %v4575 = vpop.permute.xlu0 %4574
        %4576 = vrot.lane.b32.xlu0 %v4483, 20
        %v4577 = vpop.permute.xlu0 %4576
        %4578 = vrot.lane.b32.xlu0 %v4486, 20
        %v4579 = vpop.permute.xlu0 %4578
        %4580 = vrot.lane.b32.xlu0 %v4489, 20
        %v4581 = vpop.permute.xlu0 %4580
        %4582 = vrot.lane.b32.xlu0 %v4492, 20
        %v4583 = vpop.permute.xlu0 %4582
        %4584 = vrot.lane.b32.xlu0 %v4495, 20
        %v4585 = vpop.permute.xlu0 %4584
        %4586 = vrot.lane.b32.xlu0 %v4498, 20
        %v4587 = vpop.permute.xlu0 %4586
        %4588 = vrot.lane.b32.xlu0 %v4501, 20
        %v4589 = vpop.permute.xlu0 %4588
        %4590 = vrot.lane.b32.xlu0 %v4504, 20
        %v4591 = vpop.permute.xlu0 %4590
        %4592 = vrot.lane.b32.xlu0 %v4507, 20
        %v4593 = vpop.permute.xlu0 %4592
        %4594 = vrot.lane.b32.xlu0 %v4510, 20
        %v4595 = vpop.permute.xlu0 %4594
        %4596 = vrot.lane.b32.xlu0 %v4513, 20
        %v4597 = vpop.permute.xlu0 %4596
        %4598 = vrot.lane.b32.xlu0 %v4516, 20
        %v4599 = vpop.permute.xlu0 %4598
        %4600 = vrot.lane.b32.xlu0 %v4519, 20
        %v4601 = vpop.permute.xlu0 %4600
        %4602 = vrot.lane.b32.xlu0 %v4522, 20
        %v4603 = vpop.permute.xlu0 %4602
        %4604 = vrot.lane.b32.xlu0 %v4525, 20
        %v4605 = vpop.permute.xlu0 %4604
        %4606 = vrot.lane.b32.xlu0 %v4528, 20
        %v4607 = vpop.permute.xlu0 %4606
        %4608 = vrot.lane.b32.xlu0 %v4531, 20
        %v4609 = vpop.permute.xlu0 %4608
        %4610 = vrot.lane.b32.xlu0 %v4534, 20
        %v4611 = vpop.permute.xlu0 %4610
        %4612 = vrot.lane.b32.xlu0 %v4537, 20
        %v4613 = vpop.permute.xlu0 %4612
        %4614 = vrot.lane.b32.xlu0 %v4540, 20
        %v4615 = vpop.permute.xlu0 %4614
        %4616 = vrot.lane.b32.xlu0 %v4543, 20
        %v4617 = vpop.permute.xlu0 %4616
        %4618 = vrot.lane.b32.xlu0 %v4546, 20
        %v4619 = vpop.permute.xlu0 %4618
        %4620 = vrot.lane.b32.xlu0 %v4549, 20
        %v4621 = vpop.permute.xlu0 %4620
        %4622 = vrot.lane.b32.xlu0 %v4552, 20
        %v4623 = vpop.permute.xlu0 %4622
        %4624 = vrot.lane.b32.xlu0 %v4555, 20
        %v4625 = vpop.permute.xlu0 %4624
        %4626 = vrot.lane.b32.xlu0 %v4558, 20
        %v4627 = vpop.permute.xlu0 %4626
        %4628 = vrot.lane.b32.xlu0 %v4561, 20
        %v4629 = vpop.permute.xlu0 %4628
        %4630 = vrot.lane.b32.xlu0 %v4564, 20
        %v4631 = vpop.permute.xlu0 %4630
        %4632 = vrot.lane.b32.xlu0 %v4567, 20
        %v4633 = vpop.permute.xlu0 %4632
        %4634 = vrot.lane.b32.xlu0 %v4570, 20
        %v4635 = vpop.permute.xlu0 %4634
        %4636 = vrot.lane.b32.xlu0 %v4573, 20
        %v4637 = vpop.permute.xlu0 %4636
        %v4702 = vunpack.c.l.b16 %v2524
        %v4703 = vunpack.c.l.b16 %v2525
        %v4704 = vunpack.c.l.b16 %v2526
        %v4705 = vunpack.c.l.b16 %v2527
        %v4706 = vunpack.c.l.b16 %v2528
        %v4707 = vunpack.c.l.b16 %v2529
        %v4708 = vunpack.c.l.b16 %v2530
        %v4709 = vunpack.c.l.b16 %v2531
        %v4710 = vunpack.c.l.b16 %v2532
        %v4711 = vunpack.c.l.b16 %v2533
        %v4712 = vunpack.c.l.b16 %v2534
        %v4713 = vunpack.c.l.b16 %v2535
        %v4714 = vunpack.c.l.b16 %v2536
        %v4715 = vunpack.c.l.b16 %v2537
        %v4716 = vunpack.c.l.b16 %v2538
        %v4717 = vunpack.c.l.b16 %v2539
        %v4718 = vunpack.c.l.b16 %v2540
        %v4719 = vunpack.c.l.b16 %v2541
        %v4720 = vunpack.c.l.b16 %v2542
        %v4721 = vunpack.c.l.b16 %v2543
        %v4722 = vunpack.c.l.b16 %v2544
        %v4723 = vunpack.c.l.b16 %v2545
        %v4724 = vunpack.c.l.b16 %v2546
        %v4725 = vunpack.c.l.b16 %v2547
        %v4726 = vunpack.c.l.b16 %v2548
        %v4727 = vunpack.c.l.b16 %v2549
        %v4728 = vunpack.c.l.b16 %v2550
        %v4729 = vunpack.c.l.b16 %v2551
        %v4730 = vunpack.c.l.b16 %v2552
        %v4731 = vunpack.c.l.b16 %v2553
        %v4732 = vunpack.c.l.b16 %v2554
        %v4733 = vunpack.c.l.b16 %v2555
        %v4734 = vunpack.c.l.b16 %v2556
        %v4735 = vunpack.c.l.b16 %v2557
        %v4736 = vunpack.c.l.b16 %v2558
        %v4737 = vunpack.c.l.b16 %v2559
        %v4738 = vunpack.c.l.b16 %v2560
        %v4739 = vunpack.c.l.b16 %v2561
        %v4740 = vunpack.c.l.b16 %v2562
        %v4741 = vunpack.c.l.b16 %v2563
        %v4742 = vunpack.c.l.b16 %v2564
        %v4743 = vunpack.c.l.b16 %v2565
        %v4744 = vunpack.c.l.b16 %v2566
        %v4745 = vunpack.c.l.b16 %v2567
        %v4746 = vunpack.c.l.b16 %v2568
        %v4747 = vunpack.c.l.b16 %v2569
        %v4748 = vunpack.c.l.b16 %v2570
        %v4749 = vunpack.c.l.b16 %v2571
        %v4750 = vunpack.c.l.b16 %v2572
        %v4751 = vunpack.c.l.b16 %v2573
        %v4752 = vunpack.c.l.b16 %v2574
        %v4753 = vunpack.c.l.b16 %v2575
        %v4754 = vunpack.c.l.b16 %v2576
        %v4755 = vunpack.c.l.b16 %v2577
        %v4756 = vunpack.c.l.b16 %v2578
        %v4757 = vunpack.c.l.b16 %v2579
        %v4758 = vunpack.c.l.b16 %v2580
        %v4759 = vunpack.c.l.b16 %v2581
        %v4760 = vunpack.c.l.b16 %v2582
        %v4761 = vunpack.c.l.b16 %v2583
        %v4762 = vunpack.c.l.b16 %v2584
        %v4763 = vunpack.c.l.b16 %v2585
        %v4764 = vunpack.c.l.b16 %v2586
        %v4765 = vunpack.c.l.b16 %v2587
        %v4766 = vpack.c.b16 %v4703, %v4702
        %v4767 = vpack.c.b16 %v4705, %v4704
        %v4768 = vpack.c.b16 %v4707, %v4706
        %v4769 = vpack.c.b16 %v4709, %v4708
        %v4770 = vpack.c.b16 %v4711, %v4710
        %v4771 = vpack.c.b16 %v4713, %v4712
        %v4772 = vpack.c.b16 %v4715, %v4714
        %v4773 = vpack.c.b16 %v4717, %v4716
        %v4774 = vpack.c.b16 %v4719, %v4718
        %v4775 = vpack.c.b16 %v4721, %v4720
        %v4776 = vpack.c.b16 %v4723, %v4722
        %v4777 = vpack.c.b16 %v4725, %v4724
        %v4778 = vpack.c.b16 %v4727, %v4726
        %v4779 = vpack.c.b16 %v4729, %v4728
        %v4780 = vpack.c.b16 %v4731, %v4730
        %v4781 = vpack.c.b16 %v4733, %v4732
        %v4782 = vpack.c.b16 %v4735, %v4734
        %v4783 = vpack.c.b16 %v4737, %v4736
        %v4784 = vpack.c.b16 %v4739, %v4738
        %v4785 = vpack.c.b16 %v4741, %v4740
        %v4786 = vpack.c.b16 %v4743, %v4742
        %v4787 = vpack.c.b16 %v4745, %v4744
        %v4788 = vpack.c.b16 %v4747, %v4746
        %v4789 = vpack.c.b16 %v4749, %v4748
        %v4790 = vpack.c.b16 %v4751, %v4750
        %v4791 = vpack.c.b16 %v4753, %v4752
        %v4792 = vpack.c.b16 %v4755, %v4754
        %v4793 = vpack.c.b16 %v4757, %v4756
        %v4794 = vpack.c.b16 %v4759, %v4758
        %v4795 = vpack.c.b16 %v4761, %v4760
        %v4796 = vpack.c.b16 %v4763, %v4762
        %v4797 = vpack.c.b16 %v4765, %v4764
        %4798 = vrot.lane.b32.xlu0 %v4766, 24
        %v4799 = vpop.permute.xlu0 %4798
        %4800 = vrot.lane.b32.xlu0 %v4767, 24
        %v4801 = vpop.permute.xlu0 %4800
        %4802 = vrot.lane.b32.xlu0 %v4768, 24
        %v4803 = vpop.permute.xlu0 %4802
        %4804 = vrot.lane.b32.xlu0 %v4769, 24
        %v4805 = vpop.permute.xlu0 %4804
        %4806 = vrot.lane.b32.xlu0 %v4770, 24
        %v4807 = vpop.permute.xlu0 %4806
        %4808 = vrot.lane.b32.xlu0 %v4771, 24
        %v4809 = vpop.permute.xlu0 %4808
        %4810 = vrot.lane.b32.xlu0 %v4772, 24
        %v4811 = vpop.permute.xlu0 %4810
        %4812 = vrot.lane.b32.xlu0 %v4773, 24
        %v4813 = vpop.permute.xlu0 %4812
        %4814 = vrot.lane.b32.xlu0 %v4774, 24
        %v4815 = vpop.permute.xlu0 %4814
        %4816 = vrot.lane.b32.xlu0 %v4775, 24
        %v4817 = vpop.permute.xlu0 %4816
        %4818 = vrot.lane.b32.xlu0 %v4776, 24
        %v4819 = vpop.permute.xlu0 %4818
        %4820 = vrot.lane.b32.xlu0 %v4777, 24
        %v4821 = vpop.permute.xlu0 %4820
        %4822 = vrot.lane.b32.xlu0 %v4778, 24
        %v4823 = vpop.permute.xlu0 %4822
        %4824 = vrot.lane.b32.xlu0 %v4779, 24
        %v4825 = vpop.permute.xlu0 %4824
        %4826 = vrot.lane.b32.xlu0 %v4780, 24
        %v4827 = vpop.permute.xlu0 %4826
        %4828 = vrot.lane.b32.xlu0 %v4781, 24
        %v4829 = vpop.permute.xlu0 %4828
        %4830 = vrot.lane.b32.xlu0 %v4782, 24
        %v4831 = vpop.permute.xlu0 %4830
        %4832 = vrot.lane.b32.xlu0 %v4783, 24
        %v4833 = vpop.permute.xlu0 %4832
        %4834 = vrot.lane.b32.xlu0 %v4784, 24
        %v4835 = vpop.permute.xlu0 %4834
        %4836 = vrot.lane.b32.xlu0 %v4785, 24
        %v4837 = vpop.permute.xlu0 %4836
        %4838 = vrot.lane.b32.xlu0 %v4786, 24
        %v4839 = vpop.permute.xlu0 %4838
        %4840 = vrot.lane.b32.xlu0 %v4787, 24
        %v4841 = vpop.permute.xlu0 %4840
        %4842 = vrot.lane.b32.xlu0 %v4788, 24
        %v4843 = vpop.permute.xlu0 %4842
        %4844 = vrot.lane.b32.xlu0 %v4789, 24
        %v4845 = vpop.permute.xlu0 %4844
        %4846 = vrot.lane.b32.xlu0 %v4790, 24
        %v4847 = vpop.permute.xlu0 %4846
        %4848 = vrot.lane.b32.xlu0 %v4791, 24
        %v4849 = vpop.permute.xlu0 %4848
        %4850 = vrot.lane.b32.xlu0 %v4792, 24
        %v4851 = vpop.permute.xlu0 %4850
        %4852 = vrot.lane.b32.xlu0 %v4793, 24
        %v4853 = vpop.permute.xlu0 %4852
        %4854 = vrot.lane.b32.xlu0 %v4794, 24
        %v4855 = vpop.permute.xlu0 %4854
        %4856 = vrot.lane.b32.xlu0 %v4795, 24
        %v4857 = vpop.permute.xlu0 %4856
        %4858 = vrot.lane.b32.xlu0 %v4796, 24
        %v4859 = vpop.permute.xlu0 %4858
        %4860 = vrot.lane.b32.xlu0 %v4797, 24
        %v4861 = vpop.permute.xlu0 %4860
        %v4894 = vunpack.c.l.b16 %v2588
        %v4895 = vunpack.c.l.b16 %v2589
        %v4896 = vunpack.c.l.b16 %v2590
        %v4897 = vunpack.c.l.b16 %v2591
        %v4898 = vunpack.c.l.b16 %v2592
        %v4899 = vunpack.c.l.b16 %v2593
        %v4900 = vunpack.c.l.b16 %v2594
        %v4901 = vunpack.c.l.b16 %v2595
        %v4902 = vunpack.c.l.b16 %v2596
        %v4903 = vunpack.c.l.b16 %v2597
        %v4904 = vunpack.c.l.b16 %v2598
        %v4905 = vunpack.c.l.b16 %v2599
        %v4906 = vunpack.c.l.b16 %v2600
        %v4907 = vunpack.c.l.b16 %v2601
        %v4908 = vunpack.c.l.b16 %v2602
        %v4909 = vunpack.c.l.b16 %v2603
        %v4910 = vunpack.c.l.b16 %v2604
        %v4911 = vunpack.c.l.b16 %v2605
        %v4912 = vunpack.c.l.b16 %v2606
        %v4913 = vunpack.c.l.b16 %v2607
        %v4914 = vunpack.c.l.b16 %v2608
        %v4915 = vunpack.c.l.b16 %v2609
        %v4916 = vunpack.c.l.b16 %v2610
        %v4917 = vunpack.c.l.b16 %v2611
        %v4918 = vunpack.c.l.b16 %v2612
        %v4919 = vunpack.c.l.b16 %v2613
        %v4920 = vunpack.c.l.b16 %v2614
        %v4921 = vunpack.c.l.b16 %v2615
        %v4922 = vunpack.c.l.b16 %v2616
        %v4923 = vunpack.c.l.b16 %v2617
        %v4924 = vunpack.c.l.b16 %v2618
        %v4925 = vunpack.c.l.b16 %v2619
        %v4926 = vpack.c.b16 %v4894, %v4894
        %v4927 = vpack.c.b16 %v4895, %v4895
        %v4928 = vpack.c.b16 %v4896, %v4896
        %v4929 = vpack.c.b16 %v4897, %v4897
        %v4930 = vpack.c.b16 %v4898, %v4898
        %v4931 = vpack.c.b16 %v4899, %v4899
        %v4932 = vpack.c.b16 %v4900, %v4900
        %v4933 = vpack.c.b16 %v4901, %v4901
        %v4934 = vpack.c.b16 %v4902, %v4902
        %v4935 = vpack.c.b16 %v4903, %v4903
        %v4936 = vpack.c.b16 %v4904, %v4904
        %v4937 = vpack.c.b16 %v4905, %v4905
        %v4938 = vpack.c.b16 %v4906, %v4906
        %v4939 = vpack.c.b16 %v4907, %v4907
        %v4940 = vpack.c.b16 %v4908, %v4908
        %v4941 = vpack.c.b16 %v4909, %v4909
        %v4942 = vpack.c.b16 %v4910, %v4910
        %v4943 = vpack.c.b16 %v4911, %v4911
        %v4944 = vpack.c.b16 %v4912, %v4912
        %v4945 = vpack.c.b16 %v4913, %v4913
        %v4946 = vpack.c.b16 %v4914, %v4914
        %v4947 = vpack.c.b16 %v4915, %v4915
        %v4948 = vpack.c.b16 %v4916, %v4916
        %v4949 = vpack.c.b16 %v4917, %v4917
        %v4950 = vpack.c.b16 %v4918, %v4918
        %v4951 = vpack.c.b16 %v4919, %v4919
        %v4952 = vpack.c.b16 %v4920, %v4920
        %v4953 = vpack.c.b16 %v4921, %v4921
        %v4954 = vpack.c.b16 %v4922, %v4922
        %v4955 = vpack.c.b16 %v4923, %v4923
        %v4956 = vpack.c.b16 %v4924, %v4924
        %v4957 = vpack.c.b16 %v4925, %v4925
        %v4959 = vshrl.u32 %v4766, 16
        %v4961 = vshll.u32 %v4766, 16
        %v4963 = vrot.slane %v4961, 1
        %v4964 = vor.u32 %v4959, %v4963
        %v4966 = vshll.u32 %v4926, 16
        %v4968 = vrot.slane %v4966, 1
        %v4969 = vsel %vm2908, %v4964, %v4968
        %v4971 = vshrl.u32 %v4767, 16
        %v4973 = vshll.u32 %v4767, 16
        %v4975 = vrot.slane %v4973, 1
        %v4976 = vor.u32 %v4971, %v4975
        %v4978 = vshll.u32 %v4927, 16
        %v4980 = vrot.slane %v4978, 1
        %v4981 = vsel %vm2908, %v4976, %v4980
        %v4983 = vshrl.u32 %v4768, 16
        %v4985 = vshll.u32 %v4768, 16
        %v4987 = vrot.slane %v4985, 1
        %v4988 = vor.u32 %v4983, %v4987
        %v4990 = vshll.u32 %v4928, 16
        %v4992 = vrot.slane %v4990, 1
        %v4993 = vsel %vm2908, %v4988, %v4992
        %v4995 = vshrl.u32 %v4769, 16
        %v4997 = vshll.u32 %v4769, 16
        %v4999 = vrot.slane %v4997, 1
        %v5000 = vor.u32 %v4995, %v4999
        %v5002 = vshll.u32 %v4929, 16
        %v5004 = vrot.slane %v5002, 1
        %v5005 = vsel %vm2908, %v5000, %v5004
        %v5007 = vshrl.u32 %v4770, 16
        %v5009 = vshll.u32 %v4770, 16
        %v5011 = vrot.slane %v5009, 1
        %v5012 = vor.u32 %v5007, %v5011
        %v5014 = vshll.u32 %v4930, 16
        %v5016 = vrot.slane %v5014, 1
        %v5017 = vsel %vm2908, %v5012, %v5016
        %v5019 = vshrl.u32 %v4771, 16
        %v5021 = vshll.u32 %v4771, 16
        %v5023 = vrot.slane %v5021, 1
        %v5024 = vor.u32 %v5019, %v5023
        %v5026 = vshll.u32 %v4931, 16
        %v5028 = vrot.slane %v5026, 1
        %v5029 = vsel %vm2908, %v5024, %v5028
        %v5031 = vshrl.u32 %v4772, 16
        %v5033 = vshll.u32 %v4772, 16
        %v5035 = vrot.slane %v5033, 1
        %v5036 = vor.u32 %v5031, %v5035
        %v5038 = vshll.u32 %v4932, 16
        %v5040 = vrot.slane %v5038, 1
        %v5041 = vsel %vm2908, %v5036, %v5040
        %v5043 = vshrl.u32 %v4773, 16
        %v5045 = vshll.u32 %v4773, 16
        %v5047 = vrot.slane %v5045, 1
        %v5048 = vor.u32 %v5043, %v5047
        %v5050 = vshll.u32 %v4933, 16
        %v5052 = vrot.slane %v5050, 1
        %v5053 = vsel %vm2908, %v5048, %v5052
        %v5055 = vshrl.u32 %v4774, 16
        %v5057 = vshll.u32 %v4774, 16
        %v5059 = vrot.slane %v5057, 1
        %v5060 = vor.u32 %v5055, %v5059
        %v5062 = vshll.u32 %v4934, 16
        %v5064 = vrot.slane %v5062, 1
        %v5065 = vsel %vm2908, %v5060, %v5064
        %v5067 = vshrl.u32 %v4775, 16
        %v5069 = vshll.u32 %v4775, 16
        %v5071 = vrot.slane %v5069, 1
        %v5072 = vor.u32 %v5067, %v5071
        %v5074 = vshll.u32 %v4935, 16
        %v5076 = vrot.slane %v5074, 1
        %v5077 = vsel %vm2908, %v5072, %v5076
        %v5079 = vshrl.u32 %v4776, 16
        %v5081 = vshll.u32 %v4776, 16
        %v5083 = vrot.slane %v5081, 1
        %v5084 = vor.u32 %v5079, %v5083
        %v5086 = vshll.u32 %v4936, 16
        %v5088 = vrot.slane %v5086, 1
        %v5089 = vsel %vm2908, %v5084, %v5088
        %v5091 = vshrl.u32 %v4777, 16
        %v5093 = vshll.u32 %v4777, 16
        %v5095 = vrot.slane %v5093, 1
        %v5096 = vor.u32 %v5091, %v5095
        %v5098 = vshll.u32 %v4937, 16
        %v5100 = vrot.slane %v5098, 1
        %v5101 = vsel %vm2908, %v5096, %v5100
        %v5103 = vshrl.u32 %v4778, 16
        %v5105 = vshll.u32 %v4778, 16
        %v5107 = vrot.slane %v5105, 1
        %v5108 = vor.u32 %v5103, %v5107
        %v5110 = vshll.u32 %v4938, 16
        %v5112 = vrot.slane %v5110, 1
        %v5113 = vsel %vm2908, %v5108, %v5112
        %v5115 = vshrl.u32 %v4779, 16
        %v5117 = vshll.u32 %v4779, 16
        %v5119 = vrot.slane %v5117, 1
        %v5120 = vor.u32 %v5115, %v5119
        %v5122 = vshll.u32 %v4939, 16
        %v5124 = vrot.slane %v5122, 1
        %v5125 = vsel %vm2908, %v5120, %v5124
        %v5127 = vshrl.u32 %v4780, 16
        %v5129 = vshll.u32 %v4780, 16
        %v5131 = vrot.slane %v5129, 1
        %v5132 = vor.u32 %v5127, %v5131
        %v5134 = vshll.u32 %v4940, 16
        %v5136 = vrot.slane %v5134, 1
        %v5137 = vsel %vm2908, %v5132, %v5136
        %v5139 = vshrl.u32 %v4781, 16
        %v5141 = vshll.u32 %v4781, 16
        %v5143 = vrot.slane %v5141, 1
        %v5144 = vor.u32 %v5139, %v5143
        %v5146 = vshll.u32 %v4941, 16
        %v5148 = vrot.slane %v5146, 1
        %v5149 = vsel %vm2908, %v5144, %v5148
        %v5151 = vshrl.u32 %v4782, 16
        %v5153 = vshll.u32 %v4782, 16
        %v5155 = vrot.slane %v5153, 1
        %v5156 = vor.u32 %v5151, %v5155
        %v5158 = vshll.u32 %v4942, 16
        %v5160 = vrot.slane %v5158, 1
        %v5161 = vsel %vm2908, %v5156, %v5160
        %v5163 = vshrl.u32 %v4783, 16
        %v5165 = vshll.u32 %v4783, 16
        %v5167 = vrot.slane %v5165, 1
        %v5168 = vor.u32 %v5163, %v5167
        %v5170 = vshll.u32 %v4943, 16
        %v5172 = vrot.slane %v5170, 1
        %v5173 = vsel %vm2908, %v5168, %v5172
        %v5175 = vshrl.u32 %v4784, 16
        %v5177 = vshll.u32 %v4784, 16
        %v5179 = vrot.slane %v5177, 1
        %v5180 = vor.u32 %v5175, %v5179
        %v5182 = vshll.u32 %v4944, 16
        %v5184 = vrot.slane %v5182, 1
        %v5185 = vsel %vm2908, %v5180, %v5184
        %v5187 = vshrl.u32 %v4785, 16
        %v5189 = vshll.u32 %v4785, 16
        %v5191 = vrot.slane %v5189, 1
        %v5192 = vor.u32 %v5187, %v5191
        %v5194 = vshll.u32 %v4945, 16
        %v5196 = vrot.slane %v5194, 1
        %v5197 = vsel %vm2908, %v5192, %v5196
        %v5199 = vshrl.u32 %v4786, 16
        %v5201 = vshll.u32 %v4786, 16
        %v5203 = vrot.slane %v5201, 1
        %v5204 = vor.u32 %v5199, %v5203
        %v5206 = vshll.u32 %v4946, 16
        %v5208 = vrot.slane %v5206, 1
        %v5209 = vsel %vm2908, %v5204, %v5208
        %v5211 = vshrl.u32 %v4787, 16
        %v5213 = vshll.u32 %v4787, 16
        %v5215 = vrot.slane %v5213, 1
        %v5216 = vor.u32 %v5211, %v5215
        %v5218 = vshll.u32 %v4947, 16
        %v5220 = vrot.slane %v5218, 1
        %v5221 = vsel %vm2908, %v5216, %v5220
        %v5223 = vshrl.u32 %v4788, 16
        %v5225 = vshll.u32 %v4788, 16
        %v5227 = vrot.slane %v5225, 1
        %v5228 = vor.u32 %v5223, %v5227
        %v5230 = vshll.u32 %v4948, 16
        %v5232 = vrot.slane %v5230, 1
        %v5233 = vsel %vm2908, %v5228, %v5232
        %v5235 = vshrl.u32 %v4789, 16
        %v5237 = vshll.u32 %v4789, 16
        %v5239 = vrot.slane %v5237, 1
        %v5240 = vor.u32 %v5235, %v5239
        %v5242 = vshll.u32 %v4949, 16
        %v5244 = vrot.slane %v5242, 1
        %v5245 = vsel %vm2908, %v5240, %v5244
        %v5247 = vshrl.u32 %v4790, 16
        %v5249 = vshll.u32 %v4790, 16
        %v5251 = vrot.slane %v5249, 1
        %v5252 = vor.u32 %v5247, %v5251
        %v5254 = vshll.u32 %v4950, 16
        %v5256 = vrot.slane %v5254, 1
        %v5257 = vsel %vm2908, %v5252, %v5256
        %v5259 = vshrl.u32 %v4791, 16
        %v5261 = vshll.u32 %v4791, 16
        %v5263 = vrot.slane %v5261, 1
        %v5264 = vor.u32 %v5259, %v5263
        %v5266 = vshll.u32 %v4951, 16
        %v5268 = vrot.slane %v5266, 1
        %v5269 = vsel %vm2908, %v5264, %v5268
        %v5271 = vshrl.u32 %v4792, 16
        %v5273 = vshll.u32 %v4792, 16
        %v5275 = vrot.slane %v5273, 1
        %v5276 = vor.u32 %v5271, %v5275
        %v5278 = vshll.u32 %v4952, 16
        %v5280 = vrot.slane %v5278, 1
        %v5281 = vsel %vm2908, %v5276, %v5280
        %v5283 = vshrl.u32 %v4793, 16
        %v5285 = vshll.u32 %v4793, 16
        %v5287 = vrot.slane %v5285, 1
        %v5288 = vor.u32 %v5283, %v5287
        %v5290 = vshll.u32 %v4953, 16
        %v5292 = vrot.slane %v5290, 1
        %v5293 = vsel %vm2908, %v5288, %v5292
        %v5295 = vshrl.u32 %v4794, 16
        %v5297 = vshll.u32 %v4794, 16
        %v5299 = vrot.slane %v5297, 1
        %v5300 = vor.u32 %v5295, %v5299
        %v5302 = vshll.u32 %v4954, 16
        %v5304 = vrot.slane %v5302, 1
        %v5305 = vsel %vm2908, %v5300, %v5304
        %v5307 = vshrl.u32 %v4795, 16
        %v5309 = vshll.u32 %v4795, 16
        %v5311 = vrot.slane %v5309, 1
        %v5312 = vor.u32 %v5307, %v5311
        %v5314 = vshll.u32 %v4955, 16
        %v5316 = vrot.slane %v5314, 1
        %v5317 = vsel %vm2908, %v5312, %v5316
        %v5319 = vshrl.u32 %v4796, 16
        %v5321 = vshll.u32 %v4796, 16
        %v5323 = vrot.slane %v5321, 1
        %v5324 = vor.u32 %v5319, %v5323
        %v5326 = vshll.u32 %v4956, 16
        %v5328 = vrot.slane %v5326, 1
        %v5329 = vsel %vm2908, %v5324, %v5328
        %v5331 = vshrl.u32 %v4797, 16
        %v5333 = vshll.u32 %v4797, 16
        %v5335 = vrot.slane %v5333, 1
        %v5336 = vor.u32 %v5331, %v5335
        %v5338 = vshll.u32 %v4957, 16
        %v5340 = vrot.slane %v5338, 1
        %v5341 = vsel %vm2908, %v5336, %v5340
        %5342 = vrot.lane.b32.xlu0 %v4969, 28
        %v5343 = vpop.permute.xlu0 %5342
        %5344 = vrot.lane.b32.xlu0 %v4981, 28
        %v5345 = vpop.permute.xlu0 %5344
        %5346 = vrot.lane.b32.xlu0 %v4993, 28
        %v5347 = vpop.permute.xlu0 %5346
        %5348 = vrot.lane.b32.xlu0 %v5005, 28
        %v5349 = vpop.permute.xlu0 %5348
        %5350 = vrot.lane.b32.xlu0 %v5017, 28
        %v5351 = vpop.permute.xlu0 %5350
        %5352 = vrot.lane.b32.xlu0 %v5029, 28
        %v5353 = vpop.permute.xlu0 %5352
        %5354 = vrot.lane.b32.xlu0 %v5041, 28
        %v5355 = vpop.permute.xlu0 %5354
        %5356 = vrot.lane.b32.xlu0 %v5053, 28
        %v5357 = vpop.permute.xlu0 %5356
        %5358 = vrot.lane.b32.xlu0 %v5065, 28
        %v5359 = vpop.permute.xlu0 %5358
        %5360 = vrot.lane.b32.xlu0 %v5077, 28
        %v5361 = vpop.permute.xlu0 %5360
        %5362 = vrot.lane.b32.xlu0 %v5089, 28
        %v5363 = vpop.permute.xlu0 %5362
        %5364 = vrot.lane.b32.xlu0 %v5101, 28
        %v5365 = vpop.permute.xlu0 %5364
        %5366 = vrot.lane.b32.xlu0 %v5113, 28
        %v5367 = vpop.permute.xlu0 %5366
        %5368 = vrot.lane.b32.xlu0 %v5125, 28
        %v5369 = vpop.permute.xlu0 %5368
        %5370 = vrot.lane.b32.xlu0 %v5137, 28
        %v5371 = vpop.permute.xlu0 %5370
        %5372 = vrot.lane.b32.xlu0 %v5149, 28
        %v5373 = vpop.permute.xlu0 %5372
        %5374 = vrot.lane.b32.xlu0 %v5161, 28
        %v5375 = vpop.permute.xlu0 %5374
        %5376 = vrot.lane.b32.xlu0 %v5173, 28
        %v5377 = vpop.permute.xlu0 %5376
        %5378 = vrot.lane.b32.xlu0 %v5185, 28
        %v5379 = vpop.permute.xlu0 %5378
        %5380 = vrot.lane.b32.xlu0 %v5197, 28
        %v5381 = vpop.permute.xlu0 %5380
        %5382 = vrot.lane.b32.xlu0 %v5209, 28
        %v5383 = vpop.permute.xlu0 %5382
        %5384 = vrot.lane.b32.xlu0 %v5221, 28
        %v5385 = vpop.permute.xlu0 %5384
        %5386 = vrot.lane.b32.xlu0 %v5233, 28
        %v5387 = vpop.permute.xlu0 %5386
        %5388 = vrot.lane.b32.xlu0 %v5245, 28
        %v5389 = vpop.permute.xlu0 %5388
        %5390 = vrot.lane.b32.xlu0 %v5257, 28
        %v5391 = vpop.permute.xlu0 %5390
        %5392 = vrot.lane.b32.xlu0 %v5269, 28
        %v5393 = vpop.permute.xlu0 %5392
        %5394 = vrot.lane.b32.xlu0 %v5281, 28
        %v5395 = vpop.permute.xlu0 %5394
        %5396 = vrot.lane.b32.xlu0 %v5293, 28
        %v5397 = vpop.permute.xlu0 %5396
        %5398 = vrot.lane.b32.xlu0 %v5305, 28
        %v5399 = vpop.permute.xlu0 %5398
        %5400 = vrot.lane.b32.xlu0 %v5317, 28
        %v5401 = vpop.permute.xlu0 %5400
        %5402 = vrot.lane.b32.xlu0 %v5329, 28
        %v5403 = vpop.permute.xlu0 %5402
        %5404 = vrot.lane.b32.xlu0 %v5341, 28
        %v5405 = vpop.permute.xlu0 %5404
        %v5438 = vunpack.c.l.b16 %v2620
        %v5439 = vunpack.c.l.b16 %v2621
        %v5440 = vunpack.c.l.b16 %v2622
        %v5441 = vunpack.c.l.b16 %v2623
        %v5442 = vunpack.c.l.b16 %v2624
        %v5443 = vunpack.c.l.b16 %v2625
        %v5444 = vunpack.c.l.b16 %v2626
        %v5445 = vunpack.c.l.b16 %v2627
        %v5446 = vunpack.c.l.b16 %v2628
        %v5447 = vunpack.c.l.b16 %v2629
        %v5448 = vunpack.c.l.b16 %v2630
        %v5449 = vunpack.c.l.b16 %v2631
        %v5450 = vunpack.c.l.b16 %v2632
        %v5451 = vunpack.c.l.b16 %v2633
        %v5452 = vunpack.c.l.b16 %v2634
        %v5453 = vunpack.c.l.b16 %v2635
        %v5454 = vunpack.c.l.b16 %v2636
        %v5455 = vunpack.c.l.b16 %v2637
        %v5456 = vunpack.c.l.b16 %v2638
        %v5457 = vunpack.c.l.b16 %v2639
        %v5458 = vunpack.c.l.b16 %v2640
        %v5459 = vunpack.c.l.b16 %v2641
        %v5460 = vunpack.c.l.b16 %v2642
        %v5461 = vunpack.c.l.b16 %v2643
        %v5462 = vunpack.c.l.b16 %v2644
        %v5463 = vunpack.c.l.b16 %v2645
        %v5464 = vunpack.c.l.b16 %v2646
        %v5465 = vunpack.c.l.b16 %v2647
        %v5466 = vunpack.c.l.b16 %v2648
        %v5467 = vunpack.c.l.b16 %v2649
        %v5468 = vunpack.c.l.b16 %v2650
        %v5469 = vunpack.c.l.b16 %v2651
        %v5470 = vpack.c.b16 %v4703, %v5438
        %v5471 = vpack.c.b16 %v4705, %v5439
        %v5472 = vpack.c.b16 %v4707, %v5440
        %v5473 = vpack.c.b16 %v4709, %v5441
        %v5474 = vpack.c.b16 %v4711, %v5442
        %v5475 = vpack.c.b16 %v4713, %v5443
        %v5476 = vpack.c.b16 %v4715, %v5444
        %v5477 = vpack.c.b16 %v4717, %v5445
        %v5478 = vpack.c.b16 %v4719, %v5446
        %v5479 = vpack.c.b16 %v4721, %v5447
        %v5480 = vpack.c.b16 %v4723, %v5448
        %v5481 = vpack.c.b16 %v4725, %v5449
        %v5482 = vpack.c.b16 %v4727, %v5450
        %v5483 = vpack.c.b16 %v4729, %v5451
        %v5484 = vpack.c.b16 %v4731, %v5452
        %v5485 = vpack.c.b16 %v4733, %v5453
        %v5486 = vpack.c.b16 %v4735, %v5454
        %v5487 = vpack.c.b16 %v4737, %v5455
        %v5488 = vpack.c.b16 %v4739, %v5456
        %v5489 = vpack.c.b16 %v4741, %v5457
        %v5490 = vpack.c.b16 %v4743, %v5458
        %v5491 = vpack.c.b16 %v4745, %v5459
        %v5492 = vpack.c.b16 %v4747, %v5460
        %v5493 = vpack.c.b16 %v4749, %v5461
        %v5494 = vpack.c.b16 %v4751, %v5462
        %v5495 = vpack.c.b16 %v4753, %v5463
        %v5496 = vpack.c.b16 %v4755, %v5464
        %v5497 = vpack.c.b16 %v4757, %v5465
        %v5498 = vpack.c.b16 %v4759, %v5466
        %v5499 = vpack.c.b16 %v4761, %v5467
        %v5500 = vpack.c.b16 %v4763, %v5468
        %v5501 = vpack.c.b16 %v4765, %v5469
        %v5502 = vrot.slane %v5470, 1
        %v5503 = vrot.slane %v4926, 1
        %v5504 = vsel %vm3453, %v5502, %v5503
        %v5505 = vrot.slane %v5471, 1
        %v5506 = vrot.slane %v4927, 1
        %v5507 = vsel %vm3453, %v5505, %v5506
        %v5508 = vrot.slane %v5472, 1
        %v5509 = vrot.slane %v4928, 1
        %v5510 = vsel %vm3453, %v5508, %v5509
        %v5511 = vrot.slane %v5473, 1
        %v5512 = vrot.slane %v4929, 1
        %v5513 = vsel %vm3453, %v5511, %v5512
        %v5514 = vrot.slane %v5474, 1
        %v5515 = vrot.slane %v4930, 1
        %v5516 = vsel %vm3453, %v5514, %v5515
        %v5517 = vrot.slane %v5475, 1
        %v5518 = vrot.slane %v4931, 1
        %v5519 = vsel %vm3453, %v5517, %v5518
        %v5520 = vrot.slane %v5476, 1
        %v5521 = vrot.slane %v4932, 1
        %v5522 = vsel %vm3453, %v5520, %v5521
        %v5523 = vrot.slane %v5477, 1
        %v5524 = vrot.slane %v4933, 1
        %v5525 = vsel %vm3453, %v5523, %v5524
        %v5526 = vrot.slane %v5478, 1
        %v5527 = vrot.slane %v4934, 1
        %v5528 = vsel %vm3453, %v5526, %v5527
        %v5529 = vrot.slane %v5479, 1
        %v5530 = vrot.slane %v4935, 1
        %v5531 = vsel %vm3453, %v5529, %v5530
        %v5532 = vrot.slane %v5480, 1
        %v5533 = vrot.slane %v4936, 1
        %v5534 = vsel %vm3453, %v5532, %v5533
        %v5535 = vrot.slane %v5481, 1
        %v5536 = vrot.slane %v4937, 1
        %v5537 = vsel %vm3453, %v5535, %v5536
        %v5538 = vrot.slane %v5482, 1
        %v5539 = vrot.slane %v4938, 1
        %v5540 = vsel %vm3453, %v5538, %v5539
        %v5541 = vrot.slane %v5483, 1
        %v5542 = vrot.slane %v4939, 1
        %v5543 = vsel %vm3453, %v5541, %v5542
        %v5544 = vrot.slane %v5484, 1
        %v5545 = vrot.slane %v4940, 1
        %v5546 = vsel %vm3453, %v5544, %v5545
        %v5547 = vrot.slane %v5485, 1
        %v5548 = vrot.slane %v4941, 1
        %v5549 = vsel %vm3453, %v5547, %v5548
        %v5550 = vrot.slane %v5486, 1
        %v5551 = vrot.slane %v4942, 1
        %v5552 = vsel %vm3453, %v5550, %v5551
        %v5553 = vrot.slane %v5487, 1
        %v5554 = vrot.slane %v4943, 1
        %v5555 = vsel %vm3453, %v5553, %v5554
        %v5556 = vrot.slane %v5488, 1
        %v5557 = vrot.slane %v4944, 1
        %v5558 = vsel %vm3453, %v5556, %v5557
        %v5559 = vrot.slane %v5489, 1
        %v5560 = vrot.slane %v4945, 1
        %v5561 = vsel %vm3453, %v5559, %v5560
        %v5562 = vrot.slane %v5490, 1
        %v5563 = vrot.slane %v4946, 1
        %v5564 = vsel %vm3453, %v5562, %v5563
        %v5565 = vrot.slane %v5491, 1
        %v5566 = vrot.slane %v4947, 1
        %v5567 = vsel %vm3453, %v5565, %v5566
        %v5568 = vrot.slane %v5492, 1
        %v5569 = vrot.slane %v4948, 1
        %v5570 = vsel %vm3453, %v5568, %v5569
        %v5571 = vrot.slane %v5493, 1
        %v5572 = vrot.slane %v4949, 1
        %v5573 = vsel %vm3453, %v5571, %v5572
        %v5574 = vrot.slane %v5494, 1
        %v5575 = vrot.slane %v4950, 1
        %v5576 = vsel %vm3453, %v5574, %v5575
        %v5577 = vrot.slane %v5495, 1
        %v5578 = vrot.slane %v4951, 1
        %v5579 = vsel %vm3453, %v5577, %v5578
        %v5580 = vrot.slane %v5496, 1
        %v5581 = vrot.slane %v4952, 1
        %v5582 = vsel %vm3453, %v5580, %v5581
        %v5583 = vrot.slane %v5497, 1
        %v5584 = vrot.slane %v4953, 1
        %v5585 = vsel %vm3453, %v5583, %v5584
        %v5586 = vrot.slane %v5498, 1
        %v5587 = vrot.slane %v4954, 1
        %v5588 = vsel %vm3453, %v5586, %v5587
        %v5589 = vrot.slane %v5499, 1
        %v5590 = vrot.slane %v4955, 1
        %v5591 = vsel %vm3453, %v5589, %v5590
        %v5592 = vrot.slane %v5500, 1
        %v5593 = vrot.slane %v4956, 1
        %v5594 = vsel %vm3453, %v5592, %v5593
        %v5595 = vrot.slane %v5501, 1
        %v5596 = vrot.slane %v4957, 1
        %v5597 = vsel %vm3453, %v5595, %v5596
        %5598 = vrot.lane.b32.xlu0 %v5504, 32
        %v5599 = vpop.permute.xlu0 %5598
        %5600 = vrot.lane.b32.xlu0 %v5507, 32
        %v5601 = vpop.permute.xlu0 %5600
        %5602 = vrot.lane.b32.xlu0 %v5510, 32
        %v5603 = vpop.permute.xlu0 %5602
        %5604 = vrot.lane.b32.xlu0 %v5513, 32
        %v5605 = vpop.permute.xlu0 %5604
        %5606 = vrot.lane.b32.xlu0 %v5516, 32
        %v5607 = vpop.permute.xlu0 %5606
        %5608 = vrot.lane.b32.xlu0 %v5519, 32
        %v5609 = vpop.permute.xlu0 %5608
        %5610 = vrot.lane.b32.xlu0 %v5522, 32
        %v5611 = vpop.permute.xlu0 %5610
        %5612 = vrot.lane.b32.xlu0 %v5525, 32
        %v5613 = vpop.permute.xlu0 %5612
        %5614 = vrot.lane.b32.xlu0 %v5528, 32
        %v5615 = vpop.permute.xlu0 %5614
        %5616 = vrot.lane.b32.xlu0 %v5531, 32
        %v5617 = vpop.permute.xlu0 %5616
        %5618 = vrot.lane.b32.xlu0 %v5534, 32
        %v5619 = vpop.permute.xlu0 %5618
        %5620 = vrot.lane.b32.xlu0 %v5537, 32
        %v5621 = vpop.permute.xlu0 %5620
        %5622 = vrot.lane.b32.xlu0 %v5540, 32
        %v5623 = vpop.permute.xlu0 %5622
        %5624 = vrot.lane.b32.xlu0 %v5543, 32
        %v5625 = vpop.permute.xlu0 %5624
        %5626 = vrot.lane.b32.xlu0 %v5546, 32
        %v5627 = vpop.permute.xlu0 %5626
        %5628 = vrot.lane.b32.xlu0 %v5549, 32
        %v5629 = vpop.permute.xlu0 %5628
        %5630 = vrot.lane.b32.xlu0 %v5552, 32
        %v5631 = vpop.permute.xlu0 %5630
        %5632 = vrot.lane.b32.xlu0 %v5555, 32
        %v5633 = vpop.permute.xlu0 %5632
        %5634 = vrot.lane.b32.xlu0 %v5558, 32
        %v5635 = vpop.permute.xlu0 %5634
        %5636 = vrot.lane.b32.xlu0 %v5561, 32
        %v5637 = vpop.permute.xlu0 %5636
        %5638 = vrot.lane.b32.xlu0 %v5564, 32
        %v5639 = vpop.permute.xlu0 %5638
        %5640 = vrot.lane.b32.xlu0 %v5567, 32
        %v5641 = vpop.permute.xlu0 %5640
        %5642 = vrot.lane.b32.xlu0 %v5570, 32
        %v5643 = vpop.permute.xlu0 %5642
        %5644 = vrot.lane.b32.xlu0 %v5573, 32
        %v5645 = vpop.permute.xlu0 %5644
        %5646 = vrot.lane.b32.xlu0 %v5576, 32
        %v5647 = vpop.permute.xlu0 %5646
        %5648 = vrot.lane.b32.xlu0 %v5579, 32
        %v5649 = vpop.permute.xlu0 %5648
        %5650 = vrot.lane.b32.xlu0 %v5582, 32
        %v5651 = vpop.permute.xlu0 %5650
        %5652 = vrot.lane.b32.xlu0 %v5585, 32
        %v5653 = vpop.permute.xlu0 %5652
        %5654 = vrot.lane.b32.xlu0 %v5588, 32
        %v5655 = vpop.permute.xlu0 %5654
        %5656 = vrot.lane.b32.xlu0 %v5591, 32
        %v5657 = vpop.permute.xlu0 %5656
        %5658 = vrot.lane.b32.xlu0 %v5594, 32
        %v5659 = vpop.permute.xlu0 %5658
        %5660 = vrot.lane.b32.xlu0 %v5597, 32
        %v5661 = vpop.permute.xlu0 %5660
        %v5663 = vsel %vm516, %v2780, %v3294
        %v5665 = vsel %vm516, %v2781, %v3296
        %v5667 = vsel %vm516, %v2782, %v3298
        %v5669 = vsel %vm516, %v2783, %v3300
        %v5671 = vsel %vm516, %v2784, %v3302
        %v5673 = vsel %vm516, %v2785, %v3304
        %v5675 = vsel %vm516, %v2786, %v3306
        %v5677 = vsel %vm516, %v2787, %v3308
        %v5679 = vsel %vm516, %v2788, %v3310
        %v5681 = vsel %vm516, %v2789, %v3312
        %v5683 = vsel %vm516, %v2790, %v3314
        %v5685 = vsel %vm516, %v2791, %v3316
        %v5687 = vsel %vm516, %v2792, %v3318
        %v5689 = vsel %vm516, %v2793, %v3320
        %v5691 = vsel %vm516, %v2794, %v3322
        %v5693 = vsel %vm516, %v2795, %v3324
        %v5695 = vsel %vm516, %v2796, %v3326
        %v5697 = vsel %vm516, %v2797, %v3328
        %v5699 = vsel %vm516, %v2798, %v3330
        %v5701 = vsel %vm516, %v2799, %v3332
        %v5703 = vsel %vm516, %v2800, %v3334
        %v5705 = vsel %vm516, %v2801, %v3336
        %v5707 = vsel %vm516, %v2802, %v3338
        %v5709 = vsel %vm516, %v2803, %v3340
        %v5711 = vsel %vm516, %v2804, %v3342
        %v5713 = vsel %vm516, %v2805, %v3344
        %v5715 = vsel %vm516, %v2806, %v3346
        %v5717 = vsel %vm516, %v2807, %v3348
        %v5719 = vsel %vm516, %v2808, %v3350
        %v5721 = vsel %vm516, %v2809, %v3352
        %v5723 = vsel %vm516, %v2810, %v3354
        %v5725 = vsel %vm516, %v2811, %v3356
        %vm5726 = vcmask 64512
        %v5728 = vsel %vm5726, %v5663, %v3551
        %v5730 = vsel %vm5726, %v5665, %v3553
        %v5732 = vsel %vm5726, %v5667, %v3555
        %v5734 = vsel %vm5726, %v5669, %v3557
        %v5736 = vsel %vm5726, %v5671, %v3559
        %v5738 = vsel %vm5726, %v5673, %v3561
        %v5740 = vsel %vm5726, %v5675, %v3563
        %v5742 = vsel %vm5726, %v5677, %v3565
        %v5744 = vsel %vm5726, %v5679, %v3567
        %v5746 = vsel %vm5726, %v5681, %v3569
        %v5748 = vsel %vm5726, %v5683, %v3571
        %v5750 = vsel %vm5726, %v5685, %v3573
        %v5752 = vsel %vm5726, %v5687, %v3575
        %v5754 = vsel %vm5726, %v5689, %v3577
        %v5756 = vsel %vm5726, %v5691, %v3579
        %v5758 = vsel %vm5726, %v5693, %v3581
        %v5760 = vsel %vm5726, %v5695, %v3583
        %v5762 = vsel %vm5726, %v5697, %v3585
        %v5764 = vsel %vm5726, %v5699, %v3587
        %v5766 = vsel %vm5726, %v5701, %v3589
        %v5768 = vsel %vm5726, %v5703, %v3591
        %v5770 = vsel %vm5726, %v5705, %v3593
        %v5772 = vsel %vm5726, %v5707, %v3595
        %v5774 = vsel %vm5726, %v5709, %v3597
        %v5776 = vsel %vm5726, %v5711, %v3599
        %v5778 = vsel %vm5726, %v5713, %v3601
        %v5780 = vsel %vm5726, %v5715, %v3603
        %v5782 = vsel %vm5726, %v5717, %v3605
        %v5784 = vsel %vm5726, %v5719, %v3607
        %v5786 = vsel %vm5726, %v5721, %v3609
        %v5788 = vsel %vm5726, %v5723, %v3611
        %v5790 = vsel %vm5726, %v5725, %v3613
        %vm5791 = vcmask 97280
        %v5793 = vsel %vm5791, %v5728, %v3775
        %v5795 = vsel %vm5791, %v5730, %v3777
        %v5797 = vsel %vm5791, %v5732, %v3779
        %v5799 = vsel %vm5791, %v5734, %v3781
        %v5801 = vsel %vm5791, %v5736, %v3783
        %v5803 = vsel %vm5791, %v5738, %v3785
        %v5805 = vsel %vm5791, %v5740, %v3787
        %v5807 = vsel %vm5791, %v5742, %v3789
        %v5809 = vsel %vm5791, %v5744, %v3791
        %v5811 = vsel %vm5791, %v5746, %v3793
        %v5813 = vsel %vm5791, %v5748, %v3795
        %v5815 = vsel %vm5791, %v5750, %v3797
        %v5817 = vsel %vm5791, %v5752, %v3799
        %v5819 = vsel %vm5791, %v5754, %v3801
        %v5821 = vsel %vm5791, %v5756, %v3803
        %v5823 = vsel %vm5791, %v5758, %v3805
        %v5825 = vsel %vm5791, %v5760, %v3807
        %v5827 = vsel %vm5791, %v5762, %v3809
        %v5829 = vsel %vm5791, %v5764, %v3811
        %v5831 = vsel %vm5791, %v5766, %v3813
        %v5833 = vsel %vm5791, %v5768, %v3815
        %v5835 = vsel %vm5791, %v5770, %v3817
        %v5837 = vsel %vm5791, %v5772, %v3819
        %v5839 = vsel %vm5791, %v5774, %v3821
        %v5841 = vsel %vm5791, %v5776, %v3823
        %v5843 = vsel %vm5791, %v5778, %v3825
        %v5845 = vsel %vm5791, %v5780, %v3827
        %v5847 = vsel %vm5791, %v5782, %v3829
        %v5849 = vsel %vm5791, %v5784, %v3831
        %v5851 = vsel %vm5791, %v5786, %v3833
        %v5853 = vsel %vm5791, %v5788, %v3835
        %v5855 = vsel %vm5791, %v5790, %v3837
        %vm5856 = vcmask 130048
        %v5858 = vsel %vm5856, %v5793, %v4319
        %v5860 = vsel %vm5856, %v5795, %v4321
        %v5862 = vsel %vm5856, %v5797, %v4323
        %v5864 = vsel %vm5856, %v5799, %v4325
        %v5866 = vsel %vm5856, %v5801, %v4327
        %v5868 = vsel %vm5856, %v5803, %v4329
        %v5870 = vsel %vm5856, %v5805, %v4331
        %v5872 = vsel %vm5856, %v5807, %v4333
        %v5874 = vsel %vm5856, %v5809, %v4335
        %v5876 = vsel %vm5856, %v5811, %v4337
        %v5878 = vsel %vm5856, %v5813, %v4339
        %v5880 = vsel %vm5856, %v5815, %v4341
        %v5882 = vsel %vm5856, %v5817, %v4343
        %v5884 = vsel %vm5856, %v5819, %v4345
        %v5886 = vsel %vm5856, %v5821, %v4347
        %v5888 = vsel %vm5856, %v5823, %v4349
        %v5890 = vsel %vm5856, %v5825, %v4351
        %v5892 = vsel %vm5856, %v5827, %v4353
        %v5894 = vsel %vm5856, %v5829, %v4355
        %v5896 = vsel %vm5856, %v5831, %v4357
        %v5898 = vsel %vm5856, %v5833, %v4359
        %v5900 = vsel %vm5856, %v5835, %v4361
        %v5902 = vsel %vm5856, %v5837, %v4363
        %v5904 = vsel %vm5856, %v5839, %v4365
        %v5906 = vsel %vm5856, %v5841, %v4367
        %v5908 = vsel %vm5856, %v5843, %v4369
        %v5910 = vsel %vm5856, %v5845, %v4371
        %v5912 = vsel %vm5856, %v5847, %v4373
        %v5914 = vsel %vm5856, %v5849, %v4375
        %v5916 = vsel %vm5856, %v5851, %v4377
        %v5918 = vsel %vm5856, %v5853, %v4379
        %v5920 = vsel %vm5856, %v5855, %v4381
        %vm5921 = vcmask 162816
        %v5923 = vsel %vm5921, %v5858, %v4575
        %v5925 = vsel %vm5921, %v5860, %v4577
        %v5927 = vsel %vm5921, %v5862, %v4579
        %v5929 = vsel %vm5921, %v5864, %v4581
        %v5931 = vsel %vm5921, %v5866, %v4583
        %v5933 = vsel %vm5921, %v5868, %v4585
        %v5935 = vsel %vm5921, %v5870, %v4587
        %v5937 = vsel %vm5921, %v5872, %v4589
        %v5939 = vsel %vm5921, %v5874, %v4591
        %v5941 = vsel %vm5921, %v5876, %v4593
        %v5943 = vsel %vm5921, %v5878, %v4595
        %v5945 = vsel %vm5921, %v5880, %v4597
        %v5947 = vsel %vm5921, %v5882, %v4599
        %v5949 = vsel %vm5921, %v5884, %v4601
        %v5951 = vsel %vm5921, %v5886, %v4603
        %v5953 = vsel %vm5921, %v5888, %v4605
        %v5955 = vsel %vm5921, %v5890, %v4607
        %v5957 = vsel %vm5921, %v5892, %v4609
        %v5959 = vsel %vm5921, %v5894, %v4611
        %v5961 = vsel %vm5921, %v5896, %v4613
        %v5963 = vsel %vm5921, %v5898, %v4615
        %v5965 = vsel %vm5921, %v5900, %v4617
        %v5967 = vsel %vm5921, %v5902, %v4619
        %v5969 = vsel %vm5921, %v5904, %v4621
        %v5971 = vsel %vm5921, %v5906, %v4623
        %v5973 = vsel %vm5921, %v5908, %v4625
        %v5975 = vsel %vm5921, %v5910, %v4627
        %v5977 = vsel %vm5921, %v5912, %v4629
        %v5979 = vsel %vm5921, %v5914, %v4631
        %v5981 = vsel %vm5921, %v5916, %v4633
        %v5983 = vsel %vm5921, %v5918, %v4635
        %v5985 = vsel %vm5921, %v5920, %v4637
        %vm5986 = vcmask 195584
        %v5988 = vsel %vm5986, %v5923, %v4799
        %v5990 = vsel %vm5986, %v5925, %v4801
        %v5992 = vsel %vm5986, %v5927, %v4803
        %v5994 = vsel %vm5986, %v5929, %v4805
        %v5996 = vsel %vm5986, %v5931, %v4807
        %v5998 = vsel %vm5986, %v5933, %v4809
        %v6000 = vsel %vm5986, %v5935, %v4811
        %v6002 = vsel %vm5986, %v5937, %v4813
        %v6004 = vsel %vm5986, %v5939, %v4815
        %v6006 = vsel %vm5986, %v5941, %v4817
        %v6008 = vsel %vm5986, %v5943, %v4819
        %v6010 = vsel %vm5986, %v5945, %v4821
        %v6012 = vsel %vm5986, %v5947, %v4823
        %v6014 = vsel %vm5986, %v5949, %v4825
        %v6016 = vsel %vm5986, %v5951, %v4827
        %v6018 = vsel %vm5986, %v5953, %v4829
        %v6020 = vsel %vm5986, %v5955, %v4831
        %v6022 = vsel %vm5986, %v5957, %v4833
        %v6024 = vsel %vm5986, %v5959, %v4835
        %v6026 = vsel %vm5986, %v5961, %v4837
        %v6028 = vsel %vm5986, %v5963, %v4839
        %v6030 = vsel %vm5986, %v5965, %v4841
        %v6032 = vsel %vm5986, %v5967, %v4843
        %v6034 = vsel %vm5986, %v5969, %v4845
        %v6036 = vsel %vm5986, %v5971, %v4847
        %v6038 = vsel %vm5986, %v5973, %v4849
        %v6040 = vsel %vm5986, %v5975, %v4851
        %v6042 = vsel %vm5986, %v5977, %v4853
        %v6044 = vsel %vm5986, %v5979, %v4855
        %v6046 = vsel %vm5986, %v5981, %v4857
        %v6048 = vsel %vm5986, %v5983, %v4859
        %v6050 = vsel %vm5986, %v5985, %v4861
        %vm6051 = vcmask 228352
        %v6053 = vsel %vm6051, %v5988, %v5343
        %v6055 = vsel %vm6051, %v5990, %v5345
        %v6057 = vsel %vm6051, %v5992, %v5347
        %v6059 = vsel %vm6051, %v5994, %v5349
        %v6061 = vsel %vm6051, %v5996, %v5351
        %v6063 = vsel %vm6051, %v5998, %v5353
        %v6065 = vsel %vm6051, %v6000, %v5355
        %v6067 = vsel %vm6051, %v6002, %v5357
        %v6069 = vsel %vm6051, %v6004, %v5359
        %v6071 = vsel %vm6051, %v6006, %v5361
        %v6073 = vsel %vm6051, %v6008, %v5363
        %v6075 = vsel %vm6051, %v6010, %v5365
        %v6077 = vsel %vm6051, %v6012, %v5367
        %v6079 = vsel %vm6051, %v6014, %v5369
        %v6081 = vsel %vm6051, %v6016, %v5371
        %v6083 = vsel %vm6051, %v6018, %v5373
        %v6085 = vsel %vm6051, %v6020, %v5375
        %v6087 = vsel %vm6051, %v6022, %v5377
        %v6089 = vsel %vm6051, %v6024, %v5379
        %v6091 = vsel %vm6051, %v6026, %v5381
        %v6093 = vsel %vm6051, %v6028, %v5383
        %v6095 = vsel %vm6051, %v6030, %v5385
        %v6097 = vsel %vm6051, %v6032, %v5387
        %v6099 = vsel %vm6051, %v6034, %v5389
        %v6101 = vsel %vm6051, %v6036, %v5391
        %v6103 = vsel %vm6051, %v6038, %v5393
        %v6105 = vsel %vm6051, %v6040, %v5395
        %v6107 = vsel %vm6051, %v6042, %v5397
        %v6109 = vsel %vm6051, %v6044, %v5399
        %v6111 = vsel %vm6051, %v6046, %v5401
        %v6113 = vsel %vm6051, %v6048, %v5403
        %v6115 = vsel %vm6051, %v6050, %v5405
        %vm6116 = vcmask 261120
        %v6118 = vsel %vm6116, %v6053, %v5599
        %v6120 = vsel %vm6116, %v6055, %v5601
        %v6122 = vsel %vm6116, %v6057, %v5603
        %v6124 = vsel %vm6116, %v6059, %v5605
        %v6126 = vsel %vm6116, %v6061, %v5607
        %v6128 = vsel %vm6116, %v6063, %v5609
        %v6130 = vsel %vm6116, %v6065, %v5611
        %v6132 = vsel %vm6116, %v6067, %v5613
        %v6134 = vsel %vm6116, %v6069, %v5615
        %v6136 = vsel %vm6116, %v6071, %v5617
        %v6138 = vsel %vm6116, %v6073, %v5619
        %v6140 = vsel %vm6116, %v6075, %v5621
        %v6142 = vsel %vm6116, %v6077, %v5623
        %v6144 = vsel %vm6116, %v6079, %v5625
        %v6146 = vsel %vm6116, %v6081, %v5627
        %v6148 = vsel %vm6116, %v6083, %v5629
        %v6150 = vsel %vm6116, %v6085, %v5631
        %v6152 = vsel %vm6116, %v6087, %v5633
        %v6154 = vsel %vm6116, %v6089, %v5635
        %v6156 = vsel %vm6116, %v6091, %v5637
        %v6158 = vsel %vm6116, %v6093, %v5639
        %v6160 = vsel %vm6116, %v6095, %v5641
        %v6162 = vsel %vm6116, %v6097, %v5643
        %v6164 = vsel %vm6116, %v6099, %v5645
        %v6166 = vsel %vm6116, %v6101, %v5647
        %v6168 = vsel %vm6116, %v6103, %v5649
        %v6170 = vsel %vm6116, %v6105, %v5651
        %v6172 = vsel %vm6116, %v6107, %v5653
        %v6174 = vsel %vm6116, %v6109, %v5655
        %v6176 = vsel %vm6116, %v6111, %v5657
        %v6178 = vsel %vm6116, %v6113, %v5659
        %v6180 = vsel %vm6116, %v6115, %v5661
        %v6181 = vld [vmem:[%s3] sm:$0xf]
        %v6182 = vld [vmem:[%s3 + $0x4] sm:$0xf]
        %v6183 = vld [vmem:[%s3 + $0x8] sm:$0xf]
        %v6184 = vld [vmem:[%s3 + $0xc] sm:$0xf]
        %v6185 = vld [vmem:[%s3 + $0x10] sm:$0x3]
        %v6186 = vld [vmem:[%s4] sm:$0x1]
        %v6188 = vlaneseq
        %v6189 = vshrl.u32 %v6188, 7
        %v6190 = vsub.s32 0, %v6189
        %v6191 = vrot.slane %v6186, %v6190
        %v6198 = vunpack.c.l.b16 %v6181
        %v6199 = vunpack.c.l.b16 %v6182
        %v6200 = vunpack.c.l.b16 %v6183
        %v6201 = vunpack.c.l.b16 %v6184
        %v6202 = vunpack.c.l.b16 %v6185
        %v6203 = vpack.c.b16 %v6199, %v6198
        %v6204 = vpack.c.b16 %v6201, %v6200
        %v6205 = vpack.c.b16 %v6202, %v6202
        %vm6208 = vcmask 293888
        %v6209 = vsel %vm6208, %v6118, 0
        %v6211 = vsel %vm6208, %v6120, 0
        %v6213 = vsel %vm6208, %v6122, 0
        %v6215 = vsel %vm6208, %v6124, 0
        %v6217 = vsel %vm6208, %v6126, 0
        %v6219 = vsel %vm6208, %v6128, 0
        %v6221 = vsel %vm6208, %v6130, 0
        %v6223 = vsel %vm6208, %v6132, 0
        %v6225 = vsel %vm6208, %v6134, 0
        %v6227 = vsel %vm6208, %v6136, 0
        %v6229 = vsel %vm6208, %v6138, 0
        %v6231 = vsel %vm6208, %v6140, 0
        %v6233 = vsel %vm6208, %v6142, 0
        %v6235 = vsel %vm6208, %v6144, 0
        %v6237 = vsel %vm6208, %v6146, 0
        %v6239 = vsel %vm6208, %v6148, 0
        %v6241 = vsel %vm6208, %v6150, 0
        %v6243 = vsel %vm6208, %v6152, 0
        %v6245 = vsel %vm6208, %v6154, 0
        %v6247 = vsel %vm6208, %v6156, 0
        %v6249 = vsel %vm6208, %v6158, 0
        %v6251 = vsel %vm6208, %v6160, 0
        %v6253 = vsel %vm6208, %v6162, 0
        %v6255 = vsel %vm6208, %v6164, 0
        %v6257 = vsel %vm6208, %v6166, 0
        %v6259 = vsel %vm6208, %v6168, 0
        %v6261 = vsel %vm6208, %v6170, 0
        %v6263 = vsel %vm6208, %v6172, 0
        %v6265 = vsel %vm6208, %v6174, 0
        %v6267 = vsel %vm6208, %v6176, 0
        %v6269 = vsel %vm6208, %v6178, 0
        %v6271 = vsel %vm6208, %v6180, 0
        %v6274 = vsel %vm613, %v6205, 0
        %6276 = vmatprep.subr.bf16.mxu0 0
        %6277 = vmatpush1.bf16.msra.mxu0 %v6203
        %6278 = vmatprep.subr.bf16.mxu0 0
        %6279 = vmatpush1.bf16.msra.mxu0 %v6204
        %6280 = vmatprep.subr.bf16.mxu0 0
        %6281 = vmatpush1.bf16.msra.mxu0 %v6274
        %6282 = vmatprep.subr.bf16.mxu0 0
        %6283 = vmatpush1.bf16.msra.mxu0 0
        %6284 = vmatprep.subr.bf16.mxu0 0
        %6285 = vmatpush1.bf16.msra.mxu0 0
        %6286 = vmatprep.subr.bf16.mxu0 0
        %6287 = vmatpush1.bf16.msra.mxu0 0
        %6288 = vmatprep.subr.bf16.mxu0 0
        %6289 = vmatpush1.bf16.msra.mxu0 0
        %6290 = vmatprep.subr.bf16.mxu0 0
        %6291 = vmatpush1.bf16.msra.mxu0 0
        %6292 = vmatprep.subr.bf16.mxu0 0
        %6293 = vmatpush1.bf16.msra.mxu0 0
        %6294 = vmatprep.subr.bf16.mxu0 0
        %6295 = vmatpush1.bf16.msra.mxu0 0
        %6296 = vmatprep.subr.bf16.mxu0 0
        %6297 = vmatpush1.bf16.msra.mxu0 0
        %6298 = vmatprep.subr.bf16.mxu0 0
        %6299 = vmatpush1.bf16.msra.mxu0 0
        %6300 = vmatprep.subr.bf16.mxu0 0
        %6301 = vmatpush1.bf16.msra.mxu0 0
        %6302 = vmatprep.subr.bf16.mxu0 0
        %6303 = vmatpush1.bf16.msra.mxu0 0
        %6304 = vmatprep.subr.bf16.mxu0 0
        %6305 = vmatpush1.bf16.msra.mxu0 0
        %6306 = vmatprep.subr.bf16.mxu0 0
        %6307 = vmatpush1.bf16.msra.mxu0 0
        %6308 = vmatprep.mubr.bf16.mxu0 0
        %6309 = vmatmul.mubr.bf16.gmra.mrb[0].mxu0 %v6209
        %v6310 = vpop.f32.mrb[0].mxu0
        %v6311 = vadd.f32 %v6191, %v6310
        %v6312 = vpop.f32.mrb[0].mxu0
        %v6313 = vpop.f32.mrb[0].mxu0
        %v6314 = vadd.f32 %v6191, %v6313
        %v6315 = vpop.f32.mrb[0].mxu0
        %6316 = vmatprep.mubr.bf16.mxu0 0
        %6317 = vmatmul.mubr.bf16.gmra.mrb[0].mxu0 %v6211
        %v6318 = vpop.f32.mrb[0].mxu0
        %v6319 = vadd.f32 %v6191, %v6318
        %v6320 = vpop.f32.mrb[0].mxu0
        %v6321 = vpop.f32.mrb[0].mxu0
        %v6322 = vadd.f32 %v6191, %v6321
        %v6323 = vpop.f32.mrb[0].mxu0
        %6324 = vmatprep.mubr.bf16.mxu0 0
        %6325 = vmatmul.mubr.bf16.gmra.mrb[0].mxu0 %v6213
        %v6326 = vpop.f32.mrb[0].mxu0
        %v6327 = vadd.f32 %v6191, %v6326
        %v6328 = vpop.f32.mrb[0].mxu0
        %v6329 = vpop.f32.mrb[0].mxu0
        %v6330 = vadd.f32 %v6191, %v6329
        %v6331 = vpop.f32.mrb[0].mxu0
        %6332 = vmatprep.mubr.bf16.mxu0 0
        %6333 = vmatmul.mubr.bf16.gmra.mrb[0].mxu0 %v6215
        %v6334 = vpop.f32.mrb[0].mxu0
        %v6335 = vadd.f32 %v6191, %v6334
        %v6336 = vpop.f32.mrb[0].mxu0
        %v6337 = vpop.f32.mrb[0].mxu0
        %v6338 = vadd.f32 %v6191, %v6337
        %v6339 = vpop.f32.mrb[0].mxu0
        %6340 = vmatprep.mubr.bf16.mxu0 0
        %6341 = vmatmul.mubr.bf16.gmra.mrb[0].mxu0 %v6217
        %v6342 = vpop.f32.mrb[0].mxu0
        %v6343 = vadd.f32 %v6191, %v6342
        %v6344 = vpop.f32.mrb[0].mxu0
        %v6345 = vpop.f32.mrb[0].mxu0
        %v6346 = vadd.f32 %v6191, %v6345
        %v6347 = vpop.f32.mrb[0].mxu0
        %6348 = vmatprep.mubr.bf16.mxu0 0
        %6349 = vmatmul.mubr.bf16.gmra.mrb[0].mxu0 %v6219
        %v6350 = vpop.f32.mrb[0].mxu0
        %v6351 = vadd.f32 %v6191, %v6350
        %v6352 = vpop.f32.mrb[0].mxu0
        %v6353 = vpop.f32.mrb[0].mxu0
        %v6354 = vadd.f32 %v6191, %v6353
        %v6355 = vpop.f32.mrb[0].mxu0
        %6356 = vmatprep.mubr.bf16.mxu0 0
        %6357 = vmatmul.mubr.bf16.gmra.mrb[0].mxu0 %v6221
        %v6358 = vpop.f32.mrb[0].mxu0
        %v6359 = vadd.f32 %v6191, %v6358
        %v6360 = vpop.f32.mrb[0].mxu0
        %v6361 = vpop.f32.mrb[0].mxu0
        %v6362 = vadd.f32 %v6191, %v6361
        %v6363 = vpop.f32.mrb[0].mxu0
        %6364 = vmatprep.mubr.bf16.mxu0 0
        %6365 = vmatmul.mubr.bf16.gmra.mrb[0].mxu0 %v6223
        %v6366 = vpop.f32.mrb[0].mxu0
        %v6367 = vadd.f32 %v6191, %v6366
        %v6368 = vpop.f32.mrb[0].mxu0
        %v6369 = vpop.f32.mrb[0].mxu0
        %v6370 = vadd.f32 %v6191, %v6369
        %v6371 = vpop.f32.mrb[0].mxu0
        %6372 = vmatprep.mubr.bf16.mxu0 0
        %6373 = vmatmul.mubr.bf16.gmra.mrb[0].mxu0 %v6225
        %v6374 = vpop.f32.mrb[0].mxu0
        %v6375 = vadd.f32 %v6191, %v6374
        %v6376 = vpop.f32.mrb[0].mxu0
        %v6377 = vpop.f32.mrb[0].mxu0
        %v6378 = vadd.f32 %v6191, %v6377
        %v6379 = vpop.f32.mrb[0].mxu0
        %6380 = vmatprep.mubr.bf16.mxu0 0
        %6381 = vmatmul.mubr.bf16.gmra.mrb[0].mxu0 %v6227
        %v6382 = vpop.f32.mrb[0].mxu0
        %v6383 = vadd.f32 %v6191, %v6382
        %v6384 = vpop.f32.mrb[0].mxu0
        %v6385 = vpop.f32.mrb[0].mxu0
        %v6386 = vadd.f32 %v6191, %v6385
        %v6387 = vpop.f32.mrb[0].mxu0
        %6388 = vmatprep.mubr.bf16.mxu0 0
        %6389 = vmatmul.mubr.bf16.gmra.mrb[0].mxu0 %v6229
        %v6390 = vpop.f32.mrb[0].mxu0
        %v6391 = vadd.f32 %v6191, %v6390
        %v6392 = vpop.f32.mrb[0].mxu0
        %v6393 = vpop.f32.mrb[0].mxu0
        %v6394 = vadd.f32 %v6191, %v6393
        %v6395 = vpop.f32.mrb[0].mxu0
        %6396 = vmatprep.mubr.bf16.mxu0 0
        %6397 = vmatmul.mubr.bf16.gmra.mrb[0].mxu0 %v6231
        %v6398 = vpop.f32.mrb[0].mxu0
        %v6399 = vadd.f32 %v6191, %v6398
        %v6400 = vpop.f32.mrb[0].mxu0
        %v6401 = vpop.f32.mrb[0].mxu0
        %v6402 = vadd.f32 %v6191, %v6401
        %v6403 = vpop.f32.mrb[0].mxu0
        %6404 = vmatprep.mubr.bf16.mxu0 0
        %6405 = vmatmul.mubr.bf16.gmra.mrb[0].mxu0 %v6233
        %v6406 = vpop.f32.mrb[0].mxu0
        %v6407 = vadd.f32 %v6191, %v6406
        %v6408 = vpop.f32.mrb[0].mxu0
        %v6409 = vpop.f32.mrb[0].mxu0
        %v6410 = vadd.f32 %v6191, %v6409
        %v6411 = vpop.f32.mrb[0].mxu0
        %6412 = vmatprep.mubr.bf16.mxu0 0
        %6413 = vmatmul.mubr.bf16.gmra.mrb[0].mxu0 %v6235
        %v6414 = vpop.f32.mrb[0].mxu0
        %v6415 = vadd.f32 %v6191, %v6414
        %v6416 = vpop.f32.mrb[0].mxu0
        %v6417 = vpop.f32.mrb[0].mxu0
        %v6418 = vadd.f32 %v6191, %v6417
        %v6419 = vpop.f32.mrb[0].mxu0
        %6420 = vmatprep.mubr.bf16.mxu0 0
        %6421 = vmatmul.mubr.bf16.gmra.mrb[0].mxu0 %v6237
        %v6422 = vpop.f32.mrb[0].mxu0
        %v6423 = vadd.f32 %v6191, %v6422
        %v6424 = vpop.f32.mrb[0].mxu0
        %v6425 = vpop.f32.mrb[0].mxu0
        %v6426 = vadd.f32 %v6191, %v6425
        %v6427 = vpop.f32.mrb[0].mxu0
        %6428 = vmatprep.mubr.bf16.mxu0 0
        %6429 = vmatmul.mubr.bf16.gmra.mrb[0].mxu0 %v6239
        %v6430 = vpop.f32.mrb[0].mxu0
        %v6431 = vadd.f32 %v6191, %v6430
        %v6432 = vpop.f32.mrb[0].mxu0
        %v6433 = vpop.f32.mrb[0].mxu0
        %v6434 = vadd.f32 %v6191, %v6433
        %v6435 = vpop.f32.mrb[0].mxu0
        %6436 = vmatprep.mubr.bf16.mxu0 0
        %6437 = vmatmul.mubr.bf16.gmra.mrb[0].mxu0 %v6241
        %v6438 = vpop.f32.mrb[0].mxu0
        %v6439 = vadd.f32 %v6191, %v6438
        %v6440 = vpop.f32.mrb[0].mxu0
        %v6441 = vpop.f32.mrb[0].mxu0
        %v6442 = vadd.f32 %v6191, %v6441
        %v6443 = vpop.f32.mrb[0].mxu0
        %6444 = vmatprep.mubr.bf16.mxu0 0
        %6445 = vmatmul.mubr.bf16.gmra.mrb[0].mxu0 %v6243
        %v6446 = vpop.f32.mrb[0].mxu0
        %v6447 = vadd.f32 %v6191, %v6446
        %v6448 = vpop.f32.mrb[0].mxu0
        %v6449 = vpop.f32.mrb[0].mxu0
        %v6450 = vadd.f32 %v6191, %v6449
        %v6451 = vpop.f32.mrb[0].mxu0
        %6452 = vmatprep.mubr.bf16.mxu0 0
        %6453 = vmatmul.mubr.bf16.gmra.mrb[0].mxu0 %v6245
        %v6454 = vpop.f32.mrb[0].mxu0
        %v6455 = vadd.f32 %v6191, %v6454
        %v6456 = vpop.f32.mrb[0].mxu0
        %v6457 = vpop.f32.mrb[0].mxu0
        %v6458 = vadd.f32 %v6191, %v6457
        %v6459 = vpop.f32.mrb[0].mxu0
        %6460 = vmatprep.mubr.bf16.mxu0 0
        %6461 = vmatmul.mubr.bf16.gmra.mrb[0].mxu0 %v6247
        %v6462 = vpop.f32.mrb[0].mxu0
        %v6463 = vadd.f32 %v6191, %v6462
        %v6464 = vpop.f32.mrb[0].mxu0
        %v6465 = vpop.f32.mrb[0].mxu0
        %v6466 = vadd.f32 %v6191, %v6465
        %v6467 = vpop.f32.mrb[0].mxu0
        %6468 = vmatprep.mubr.bf16.mxu0 0
        %6469 = vmatmul.mubr.bf16.gmra.mrb[0].mxu0 %v6249
        %v6470 = vpop.f32.mrb[0].mxu0
        %v6471 = vadd.f32 %v6191, %v6470
        %v6472 = vpop.f32.mrb[0].mxu0
        %v6473 = vpop.f32.mrb[0].mxu0
        %v6474 = vadd.f32 %v6191, %v6473
        %v6475 = vpop.f32.mrb[0].mxu0
        %6476 = vmatprep.mubr.bf16.mxu0 0
        %6477 = vmatmul.mubr.bf16.gmra.mrb[0].mxu0 %v6251
        %v6478 = vpop.f32.mrb[0].mxu0
        %v6479 = vadd.f32 %v6191, %v6478
        %v6480 = vpop.f32.mrb[0].mxu0
        %v6481 = vpop.f32.mrb[0].mxu0
        %v6482 = vadd.f32 %v6191, %v6481
        %v6483 = vpop.f32.mrb[0].mxu0
        %6484 = vmatprep.mubr.bf16.mxu0 0
        %6485 = vmatmul.mubr.bf16.gmra.mrb[0].mxu0 %v6253
        %v6486 = vpop.f32.mrb[0].mxu0
        %v6487 = vadd.f32 %v6191, %v6486
        %v6488 = vpop.f32.mrb[0].mxu0
        %v6489 = vpop.f32.mrb[0].mxu0
        %v6490 = vadd.f32 %v6191, %v6489
        %v6491 = vpop.f32.mrb[0].mxu0
        %6492 = vmatprep.mubr.bf16.mxu0 0
        %6493 = vmatmul.mubr.bf16.gmra.mrb[0].mxu0 %v6255
        %v6494 = vpop.f32.mrb[0].mxu0
        %v6495 = vadd.f32 %v6191, %v6494
        %v6496 = vpop.f32.mrb[0].mxu0
        %v6497 = vpop.f32.mrb[0].mxu0
        %v6498 = vadd.f32 %v6191, %v6497
        %v6499 = vpop.f32.mrb[0].mxu0
        %6500 = vmatprep.mubr.bf16.mxu0 0
        %6501 = vmatmul.mubr.bf16.gmra.mrb[0].mxu0 %v6257
        %v6502 = vpop.f32.mrb[0].mxu0
        %v6503 = vadd.f32 %v6191, %v6502
        %v6504 = vpop.f32.mrb[0].mxu0
        %v6505 = vpop.f32.mrb[0].mxu0
        %v6506 = vadd.f32 %v6191, %v6505
        %v6507 = vpop.f32.mrb[0].mxu0
        %6508 = vmatprep.mubr.bf16.mxu0 0
        %6509 = vmatmul.mubr.bf16.gmra.mrb[0].mxu0 %v6259
        %v6510 = vpop.f32.mrb[0].mxu0
        %v6511 = vadd.f32 %v6191, %v6510
        %v6512 = vpop.f32.mrb[0].mxu0
        %v6513 = vpop.f32.mrb[0].mxu0
        %v6514 = vadd.f32 %v6191, %v6513
        %v6515 = vpop.f32.mrb[0].mxu0
        %6516 = vmatprep.mubr.bf16.mxu0 0
        %6517 = vmatmul.mubr.bf16.gmra.mrb[0].mxu0 %v6261
        %v6518 = vpop.f32.mrb[0].mxu0
        %v6519 = vadd.f32 %v6191, %v6518
        %v6520 = vpop.f32.mrb[0].mxu0
        %v6521 = vpop.f32.mrb[0].mxu0
        %v6522 = vadd.f32 %v6191, %v6521
        %v6523 = vpop.f32.mrb[0].mxu0
        %6524 = vmatprep.mubr.bf16.mxu0 0
        %6525 = vmatmul.mubr.bf16.gmra.mrb[0].mxu0 %v6263
        %v6526 = vpop.f32.mrb[0].mxu0
        %v6527 = vadd.f32 %v6191, %v6526
        %v6528 = vpop.f32.mrb[0].mxu0
        %v6529 = vpop.f32.mrb[0].mxu0
        %v6530 = vadd.f32 %v6191, %v6529
        %v6531 = vpop.f32.mrb[0].mxu0
        %6532 = vmatprep.mubr.bf16.mxu0 0
        %6533 = vmatmul.mubr.bf16.gmra.mrb[0].mxu0 %v6265
        %v6534 = vpop.f32.mrb[0].mxu0
        %v6535 = vadd.f32 %v6191, %v6534
        %v6536 = vpop.f32.mrb[0].mxu0
        %v6537 = vpop.f32.mrb[0].mxu0
        %v6538 = vadd.f32 %v6191, %v6537
        %v6539 = vpop.f32.mrb[0].mxu0
        %6540 = vmatprep.mubr.bf16.mxu0 0
        %6541 = vmatmul.mubr.bf16.gmra.mrb[0].mxu0 %v6267
        %v6542 = vpop.f32.mrb[0].mxu0
        %v6543 = vadd.f32 %v6191, %v6542
        %v6544 = vpop.f32.mrb[0].mxu0
        %v6545 = vpop.f32.mrb[0].mxu0
        %v6546 = vadd.f32 %v6191, %v6545
        %v6547 = vpop.f32.mrb[0].mxu0
        %6548 = vmatprep.mubr.bf16.mxu0 0
        %6549 = vmatmul.mubr.bf16.gmra.mrb[0].mxu0 %v6269
        %v6550 = vpop.f32.mrb[0].mxu0
        %v6551 = vadd.f32 %v6191, %v6550
        %v6552 = vpop.f32.mrb[0].mxu0
        %v6553 = vpop.f32.mrb[0].mxu0
        %v6554 = vadd.f32 %v6191, %v6553
        %v6555 = vpop.f32.mrb[0].mxu0
        %6556 = vmatprep.mubr.bf16.mxu0 0
        %6557 = vmatmul.mubr.bf16.gmra.mrb[0].mxu0 %v6271
        %v6558 = vpop.f32.mrb[0].mxu0
        %v6559 = vadd.f32 %v6191, %v6558
        %v6560 = vpop.f32.mrb[0].mxu0
        %v6561 = vpop.f32.mrb[0].mxu0
        %v6562 = vadd.f32 %v6191, %v6561
        %v6563 = vpop.f32.mrb[0].mxu0
        %6564 = vdwg.mxu0
        %v6565 = vmax.f32 %v6311, 0.0
        %v6566 = vmax.f32 %v6314, 0.0
        %v6567 = vmax.f32 %v6319, 0.0
        %v6568 = vmax.f32 %v6322, 0.0
        %v6569 = vmax.f32 %v6327, 0.0
        %v6570 = vmax.f32 %v6330, 0.0
        %v6571 = vmax.f32 %v6335, 0.0
        %v6572 = vmax.f32 %v6338, 0.0
        %v6573 = vmax.f32 %v6343, 0.0
        %v6574 = vmax.f32 %v6346, 0.0
        %v6575 = vmax.f32 %v6351, 0.0
        %v6576 = vmax.f32 %v6354, 0.0
        %v6577 = vmax.f32 %v6359, 0.0
        %v6578 = vmax.f32 %v6362, 0.0
        %v6579 = vmax.f32 %v6367, 0.0
        %v6580 = vmax.f32 %v6370, 0.0
        %v6581 = vmax.f32 %v6375, 0.0
        %v6582 = vmax.f32 %v6378, 0.0
        %v6583 = vmax.f32 %v6383, 0.0
        %v6584 = vmax.f32 %v6386, 0.0
        %v6585 = vmax.f32 %v6391, 0.0
        %v6586 = vmax.f32 %v6394, 0.0
        %v6587 = vmax.f32 %v6399, 0.0
        %v6588 = vmax.f32 %v6402, 0.0
        %v6589 = vmax.f32 %v6407, 0.0
        %v6590 = vmax.f32 %v6410, 0.0
        %v6591 = vmax.f32 %v6415, 0.0
        %v6592 = vmax.f32 %v6418, 0.0
        %v6593 = vmax.f32 %v6423, 0.0
        %v6594 = vmax.f32 %v6426, 0.0
        %v6595 = vmax.f32 %v6431, 0.0
        %v6596 = vmax.f32 %v6434, 0.0
        %v6597 = vmax.f32 %v6439, 0.0
        %v6598 = vmax.f32 %v6442, 0.0
        %v6599 = vmax.f32 %v6447, 0.0
        %v6600 = vmax.f32 %v6450, 0.0
        %v6601 = vmax.f32 %v6455, 0.0
        %v6602 = vmax.f32 %v6458, 0.0
        %v6603 = vmax.f32 %v6463, 0.0
        %v6604 = vmax.f32 %v6466, 0.0
        %v6605 = vmax.f32 %v6471, 0.0
        %v6606 = vmax.f32 %v6474, 0.0
        %v6607 = vmax.f32 %v6479, 0.0
        %v6608 = vmax.f32 %v6482, 0.0
        %v6609 = vmax.f32 %v6487, 0.0
        %v6610 = vmax.f32 %v6490, 0.0
        %v6611 = vmax.f32 %v6495, 0.0
        %v6612 = vmax.f32 %v6498, 0.0
        %v6613 = vmax.f32 %v6503, 0.0
        %v6614 = vmax.f32 %v6506, 0.0
        %v6615 = vmax.f32 %v6511, 0.0
        %v6616 = vmax.f32 %v6514, 0.0
        %v6617 = vmax.f32 %v6519, 0.0
        %v6618 = vmax.f32 %v6522, 0.0
        %v6619 = vmax.f32 %v6527, 0.0
        %v6620 = vmax.f32 %v6530, 0.0
        %v6621 = vmax.f32 %v6535, 0.0
        %v6622 = vmax.f32 %v6538, 0.0
        %v6623 = vmax.f32 %v6543, 0.0
        %v6624 = vmax.f32 %v6546, 0.0
        %v6625 = vmax.f32 %v6551, 0.0
        %v6626 = vmax.f32 %v6554, 0.0
        %v6627 = vmax.f32 %v6559, 0.0
        %v6628 = vmax.f32 %v6562, 0.0
        %v6629 = vpack.c.bf16 %v6566, %v6565
        %v6630 = vpack.c.bf16 %v6568, %v6567
        %v6631 = vpack.c.bf16 %v6570, %v6569
        %v6632 = vpack.c.bf16 %v6572, %v6571
        %v6633 = vpack.c.bf16 %v6574, %v6573
        %v6634 = vpack.c.bf16 %v6576, %v6575
        %v6635 = vpack.c.bf16 %v6578, %v6577
        %v6636 = vpack.c.bf16 %v6580, %v6579
        %v6637 = vpack.c.bf16 %v6582, %v6581
        %v6638 = vpack.c.bf16 %v6584, %v6583
        %v6639 = vpack.c.bf16 %v6586, %v6585
        %v6640 = vpack.c.bf16 %v6588, %v6587
        %v6641 = vpack.c.bf16 %v6590, %v6589
        %v6642 = vpack.c.bf16 %v6592, %v6591
        %v6643 = vpack.c.bf16 %v6594, %v6593
        %v6644 = vpack.c.bf16 %v6596, %v6595
        %v6645 = vpack.c.bf16 %v6598, %v6597
        %v6646 = vpack.c.bf16 %v6600, %v6599
        %v6647 = vpack.c.bf16 %v6602, %v6601
        %v6648 = vpack.c.bf16 %v6604, %v6603
        %v6649 = vpack.c.bf16 %v6606, %v6605
        %v6650 = vpack.c.bf16 %v6608, %v6607
        %v6651 = vpack.c.bf16 %v6610, %v6609
        %v6652 = vpack.c.bf16 %v6612, %v6611
        %v6653 = vpack.c.bf16 %v6614, %v6613
        %v6654 = vpack.c.bf16 %v6616, %v6615
        %v6655 = vpack.c.bf16 %v6618, %v6617
        %v6656 = vpack.c.bf16 %v6620, %v6619
        %v6657 = vpack.c.bf16 %v6622, %v6621
        %v6658 = vpack.c.bf16 %v6624, %v6623
        %v6659 = vpack.c.bf16 %v6626, %v6625
        %v6660 = vpack.c.bf16 %v6628, %v6627
        %v6661 = vld [vmem:[%s5] sm:$0x3]
        %v6662 = vld [vmem:[%s6] sm:$0x1]
        %v6664 = vlaneseq
        %v6665 = vshrl.u32 %v6664, 7
        %v6666 = vsub.s32 0, %v6665
        %v6667 = vrot.slane %v6662, %v6666
        %v6670 = vsel %vm516, %v6629, 0
        %v6673 = vsel %vm516, %v6630, 0
        %v6676 = vsel %vm516, %v6631, 0
        %v6679 = vsel %vm516, %v6632, 0
        %v6682 = vsel %vm516, %v6633, 0
        %v6685 = vsel %vm516, %v6634, 0
        %v6688 = vsel %vm516, %v6635, 0
        %v6691 = vsel %vm516, %v6636, 0
        %v6694 = vsel %vm516, %v6637, 0
        %v6697 = vsel %vm516, %v6638, 0
        %v6700 = vsel %vm516, %v6639, 0
        %v6703 = vsel %vm516, %v6640, 0
        %v6706 = vsel %vm516, %v6641, 0
        %v6709 = vsel %vm516, %v6642, 0
        %v6712 = vsel %vm516, %v6643, 0
        %v6715 = vsel %vm516, %v6644, 0
        %v6718 = vsel %vm516, %v6645, 0
        %v6721 = vsel %vm516, %v6646, 0
        %v6724 = vsel %vm516, %v6647, 0
        %v6727 = vsel %vm516, %v6648, 0
        %v6730 = vsel %vm516, %v6649, 0
        %v6733 = vsel %vm516, %v6650, 0
        %v6736 = vsel %vm516, %v6651, 0
        %v6739 = vsel %vm516, %v6652, 0
        %v6742 = vsel %vm516, %v6653, 0
        %v6745 = vsel %vm516, %v6654, 0
        %v6748 = vsel %vm516, %v6655, 0
        %v6751 = vsel %vm516, %v6656, 0
        %v6754 = vsel %vm516, %v6657, 0
        %v6757 = vsel %vm516, %v6658, 0
        %v6760 = vsel %vm516, %v6659, 0
        %v6763 = vsel %vm516, %v6660, 0
        %v6766 = vsel %vm613, %v6661, 0
        %6768 = vmatprep.subr.bf16.mxu0 0
        %6769 = vmatpush1.bf16.msra.mxu0 %v6766
        %6770 = vmatprep.subr.bf16.mxu0 0
        %6771 = vmatpush1.bf16.msra.mxu0 0
        %6772 = vmatprep.subr.bf16.mxu0 0
        %6773 = vmatpush1.bf16.msra.mxu0 0
        %6774 = vmatprep.subr.bf16.mxu0 0
        %6775 = vmatpush1.bf16.msra.mxu0 0
        %6776 = vmatprep.subr.bf16.mxu0 0
        %6777 = vmatpush1.bf16.msra.mxu0 0
        %6778 = vmatprep.subr.bf16.mxu0 0
        %6779 = vmatpush1.bf16.msra.mxu0 0
        %6780 = vmatprep.subr.bf16.mxu0 0
        %6781 = vmatpush1.bf16.msra.mxu0 0
        %6782 = vmatprep.subr.bf16.mxu0 0
        %6783 = vmatpush1.bf16.msra.mxu0 0
        %6784 = vmatprep.subr.bf16.mxu0 0
        %6785 = vmatpush1.bf16.msra.mxu0 0
        %6786 = vmatprep.subr.bf16.mxu0 0
        %6787 = vmatpush1.bf16.msra.mxu0 0
        %6788 = vmatprep.subr.bf16.mxu0 0
        %6789 = vmatpush1.bf16.msra.mxu0 0
        %6790 = vmatprep.subr.bf16.mxu0 0
        %6791 = vmatpush1.bf16.msra.mxu0 0
        %6792 = vmatprep.subr.bf16.mxu0 0
        %6793 = vmatpush1.bf16.msra.mxu0 0
        %6794 = vmatprep.subr.bf16.mxu0 0
        %6795 = vmatpush1.bf16.msra.mxu0 0
        %6796 = vmatprep.subr.bf16.mxu0 0
        %6797 = vmatpush1.bf16.msra.mxu0 0
        %6798 = vmatprep.subr.bf16.mxu0 0
        %6799 = vmatpush1.bf16.msra.mxu0 0
        %6800 = vmatprep.mubr.bf16.mxu0 0
        %6801 = vmatmul.mubr.bf16.gmra.mrb[0].mxu0 %v6670
        %v6802 = vpop.f32.mrb[0].mxu0
        %v6803 = vadd.f32 %v6667, %v6802
        %v6804 = vpop.f32.mrb[0].mxu0
        %v6805 = vpop.f32.mrb[0].mxu0
        %v6806 = vadd.f32 %v6667, %v6805
        %v6807 = vpop.f32.mrb[0].mxu0
        %6808 = vmatprep.mubr.bf16.mxu0 0
        %6809 = vmatmul.mubr.bf16.gmra.mrb[0].mxu0 %v6673
        %v6810 = vpop.f32.mrb[0].mxu0
        %v6811 = vadd.f32 %v6667, %v6810
        %v6812 = vpop.f32.mrb[0].mxu0
        %v6813 = vpop.f32.mrb[0].mxu0
        %v6814 = vadd.f32 %v6667, %v6813
        %v6815 = vpop.f32.mrb[0].mxu0
        %6816 = vmatprep.mubr.bf16.mxu0 0
        %6817 = vmatmul.mubr.bf16.gmra.mrb[0].mxu0 %v6676
        %v6818 = vpop.f32.mrb[0].mxu0
        %v6819 = vadd.f32 %v6667, %v6818
        %v6820 = vpop.f32.mrb[0].mxu0
        %v6821 = vpop.f32.mrb[0].mxu0
        %v6822 = vadd.f32 %v6667, %v6821
        %v6823 = vpop.f32.mrb[0].mxu0
        %6824 = vmatprep.mubr.bf16.mxu0 0
        %6825 = vmatmul.mubr.bf16.gmra.mrb[0].mxu0 %v6679
        %v6826 = vpop.f32.mrb[0].mxu0
        %v6827 = vadd.f32 %v6667, %v6826
        %v6828 = vpop.f32.mrb[0].mxu0
        %v6829 = vpop.f32.mrb[0].mxu0
        %v6830 = vadd.f32 %v6667, %v6829
        %v6831 = vpop.f32.mrb[0].mxu0
        %6832 = vmatprep.mubr.bf16.mxu0 0
        %6833 = vmatmul.mubr.bf16.gmra.mrb[0].mxu0 %v6682
        %v6834 = vpop.f32.mrb[0].mxu0
        %v6835 = vadd.f32 %v6667, %v6834
        %v6836 = vpop.f32.mrb[0].mxu0
        %v6837 = vpop.f32.mrb[0].mxu0
        %v6838 = vadd.f32 %v6667, %v6837
        %v6839 = vpop.f32.mrb[0].mxu0
        %6840 = vmatprep.mubr.bf16.mxu0 0
        %6841 = vmatmul.mubr.bf16.gmra.mrb[0].mxu0 %v6685
        %v6842 = vpop.f32.mrb[0].mxu0
        %v6843 = vadd.f32 %v6667, %v6842
        %v6844 = vpop.f32.mrb[0].mxu0
        %v6845 = vpop.f32.mrb[0].mxu0
        %v6846 = vadd.f32 %v6667, %v6845
        %v6847 = vpop.f32.mrb[0].mxu0
        %6848 = vmatprep.mubr.bf16.mxu0 0
        %6849 = vmatmul.mubr.bf16.gmra.mrb[0].mxu0 %v6688
        %v6850 = vpop.f32.mrb[0].mxu0
        %v6851 = vadd.f32 %v6667, %v6850
        %v6852 = vpop.f32.mrb[0].mxu0
        %v6853 = vpop.f32.mrb[0].mxu0
        %v6854 = vadd.f32 %v6667, %v6853
        %v6855 = vpop.f32.mrb[0].mxu0
        %6856 = vmatprep.mubr.bf16.mxu0 0
        %6857 = vmatmul.mubr.bf16.gmra.mrb[0].mxu0 %v6691
        %v6858 = vpop.f32.mrb[0].mxu0
        %v6859 = vadd.f32 %v6667, %v6858
        %v6860 = vpop.f32.mrb[0].mxu0
        %v6861 = vpop.f32.mrb[0].mxu0
        %v6862 = vadd.f32 %v6667, %v6861
        %v6863 = vpop.f32.mrb[0].mxu0
        %6864 = vmatprep.mubr.bf16.mxu0 0
        %6865 = vmatmul.mubr.bf16.gmra.mrb[0].mxu0 %v6694
        %v6866 = vpop.f32.mrb[0].mxu0
        %v6867 = vadd.f32 %v6667, %v6866
        %v6868 = vpop.f32.mrb[0].mxu0
        %v6869 = vpop.f32.mrb[0].mxu0
        %v6870 = vadd.f32 %v6667, %v6869
        %v6871 = vpop.f32.mrb[0].mxu0
        %6872 = vmatprep.mubr.bf16.mxu0 0
        %6873 = vmatmul.mubr.bf16.gmra.mrb[0].mxu0 %v6697
        %v6874 = vpop.f32.mrb[0].mxu0
        %v6875 = vadd.f32 %v6667, %v6874
        %v6876 = vpop.f32.mrb[0].mxu0
        %v6877 = vpop.f32.mrb[0].mxu0
        %v6878 = vadd.f32 %v6667, %v6877
        %v6879 = vpop.f32.mrb[0].mxu0
        %6880 = vmatprep.mubr.bf16.mxu0 0
        %6881 = vmatmul.mubr.bf16.gmra.mrb[0].mxu0 %v6700
        %v6882 = vpop.f32.mrb[0].mxu0
        %v6883 = vadd.f32 %v6667, %v6882
        %v6884 = vpop.f32.mrb[0].mxu0
        %v6885 = vpop.f32.mrb[0].mxu0
        %v6886 = vadd.f32 %v6667, %v6885
        %v6887 = vpop.f32.mrb[0].mxu0
        %6888 = vmatprep.mubr.bf16.mxu0 0
        %6889 = vmatmul.mubr.bf16.gmra.mrb[0].mxu0 %v6703
        %v6890 = vpop.f32.mrb[0].mxu0
        %v6891 = vadd.f32 %v6667, %v6890
        %v6892 = vpop.f32.mrb[0].mxu0
        %v6893 = vpop.f32.mrb[0].mxu0
        %v6894 = vadd.f32 %v6667, %v6893
        %v6895 = vpop.f32.mrb[0].mxu0
        %6896 = vmatprep.mubr.bf16.mxu0 0
        %6897 = vmatmul.mubr.bf16.gmra.mrb[0].mxu0 %v6706
        %v6898 = vpop.f32.mrb[0].mxu0
        %v6899 = vadd.f32 %v6667, %v6898
        %v6900 = vpop.f32.mrb[0].mxu0
        %v6901 = vpop.f32.mrb[0].mxu0
        %v6902 = vadd.f32 %v6667, %v6901
        %v6903 = vpop.f32.mrb[0].mxu0
        %6904 = vmatprep.mubr.bf16.mxu0 0
        %6905 = vmatmul.mubr.bf16.gmra.mrb[0].mxu0 %v6709
        %v6906 = vpop.f32.mrb[0].mxu0
        %v6907 = vadd.f32 %v6667, %v6906
        %v6908 = vpop.f32.mrb[0].mxu0
        %v6909 = vpop.f32.mrb[0].mxu0
        %v6910 = vadd.f32 %v6667, %v6909
        %v6911 = vpop.f32.mrb[0].mxu0
        %6912 = vmatprep.mubr.bf16.mxu0 0
        %6913 = vmatmul.mubr.bf16.gmra.mrb[0].mxu0 %v6712
        %v6914 = vpop.f32.mrb[0].mxu0
        %v6915 = vadd.f32 %v6667, %v6914
        %v6916 = vpop.f32.mrb[0].mxu0
        %v6917 = vpop.f32.mrb[0].mxu0
        %v6918 = vadd.f32 %v6667, %v6917
        %v6919 = vpop.f32.mrb[0].mxu0
        %6920 = vmatprep.mubr.bf16.mxu0 0
        %6921 = vmatmul.mubr.bf16.gmra.mrb[0].mxu0 %v6715
        %v6922 = vpop.f32.mrb[0].mxu0
        %v6923 = vadd.f32 %v6667, %v6922
        %v6924 = vpop.f32.mrb[0].mxu0
        %v6925 = vpop.f32.mrb[0].mxu0
        %v6926 = vadd.f32 %v6667, %v6925
        %v6927 = vpop.f32.mrb[0].mxu0
        %6928 = vmatprep.mubr.bf16.mxu0 0
        %6929 = vmatmul.mubr.bf16.gmra.mrb[0].mxu0 %v6718
        %v6930 = vpop.f32.mrb[0].mxu0
        %v6931 = vadd.f32 %v6667, %v6930
        %v6932 = vpop.f32.mrb[0].mxu0
        %v6933 = vpop.f32.mrb[0].mxu0
        %v6934 = vadd.f32 %v6667, %v6933
        %v6935 = vpop.f32.mrb[0].mxu0
        %6936 = vmatprep.mubr.bf16.mxu0 0
        %6937 = vmatmul.mubr.bf16.gmra.mrb[0].mxu0 %v6721
        %v6938 = vpop.f32.mrb[0].mxu0
        %v6939 = vadd.f32 %v6667, %v6938
        %v6940 = vpop.f32.mrb[0].mxu0
        %v6941 = vpop.f32.mrb[0].mxu0
        %v6942 = vadd.f32 %v6667, %v6941
        %v6943 = vpop.f32.mrb[0].mxu0
        %6944 = vmatprep.mubr.bf16.mxu0 0
        %6945 = vmatmul.mubr.bf16.gmra.mrb[0].mxu0 %v6724
        %v6946 = vpop.f32.mrb[0].mxu0
        %v6947 = vadd.f32 %v6667, %v6946
        %v6948 = vpop.f32.mrb[0].mxu0
        %v6949 = vpop.f32.mrb[0].mxu0
        %v6950 = vadd.f32 %v6667, %v6949
        %v6951 = vpop.f32.mrb[0].mxu0
        %6952 = vmatprep.mubr.bf16.mxu0 0
        %6953 = vmatmul.mubr.bf16.gmra.mrb[0].mxu0 %v6727
        %v6954 = vpop.f32.mrb[0].mxu0
        %v6955 = vadd.f32 %v6667, %v6954
        %v6956 = vpop.f32.mrb[0].mxu0
        %v6957 = vpop.f32.mrb[0].mxu0
        %v6958 = vadd.f32 %v6667, %v6957
        %v6959 = vpop.f32.mrb[0].mxu0
        %6960 = vmatprep.mubr.bf16.mxu0 0
        %6961 = vmatmul.mubr.bf16.gmra.mrb[0].mxu0 %v6730
        %v6962 = vpop.f32.mrb[0].mxu0
        %v6963 = vadd.f32 %v6667, %v6962
        %v6964 = vpop.f32.mrb[0].mxu0
        %v6965 = vpop.f32.mrb[0].mxu0
        %v6966 = vadd.f32 %v6667, %v6965
        %v6967 = vpop.f32.mrb[0].mxu0
        %6968 = vmatprep.mubr.bf16.mxu0 0
        %6969 = vmatmul.mubr.bf16.gmra.mrb[0].mxu0 %v6733
        %v6970 = vpop.f32.mrb[0].mxu0
        %v6971 = vadd.f32 %v6667, %v6970
        %v6972 = vpop.f32.mrb[0].mxu0
        %v6973 = vpop.f32.mrb[0].mxu0
        %v6974 = vadd.f32 %v6667, %v6973
        %v6975 = vpop.f32.mrb[0].mxu0
        %6976 = vmatprep.mubr.bf16.mxu0 0
        %6977 = vmatmul.mubr.bf16.gmra.mrb[0].mxu0 %v6736
        %v6978 = vpop.f32.mrb[0].mxu0
        %v6979 = vadd.f32 %v6667, %v6978
        %v6980 = vpop.f32.mrb[0].mxu0
        %v6981 = vpop.f32.mrb[0].mxu0
        %v6982 = vadd.f32 %v6667, %v6981
        %v6983 = vpop.f32.mrb[0].mxu0
        %6984 = vmatprep.mubr.bf16.mxu0 0
        %6985 = vmatmul.mubr.bf16.gmra.mrb[0].mxu0 %v6739
        %v6986 = vpop.f32.mrb[0].mxu0
        %v6987 = vadd.f32 %v6667, %v6986
        %v6988 = vpop.f32.mrb[0].mxu0
        %v6989 = vpop.f32.mrb[0].mxu0
        %v6990 = vadd.f32 %v6667, %v6989
        %v6991 = vpop.f32.mrb[0].mxu0
        %6992 = vmatprep.mubr.bf16.mxu0 0
        %6993 = vmatmul.mubr.bf16.gmra.mrb[0].mxu0 %v6742
        %v6994 = vpop.f32.mrb[0].mxu0
        %v6995 = vadd.f32 %v6667, %v6994
        %v6996 = vpop.f32.mrb[0].mxu0
        %v6997 = vpop.f32.mrb[0].mxu0
        %v6998 = vadd.f32 %v6667, %v6997
        %v6999 = vpop.f32.mrb[0].mxu0
        %7000 = vmatprep.mubr.bf16.mxu0 0
        %7001 = vmatmul.mubr.bf16.gmra.mrb[0].mxu0 %v6745
        %v7002 = vpop.f32.mrb[0].mxu0
        %v7003 = vadd.f32 %v6667, %v7002
        %v7004 = vpop.f32.mrb[0].mxu0
        %v7005 = vpop.f32.mrb[0].mxu0
        %v7006 = vadd.f32 %v6667, %v7005
        %v7007 = vpop.f32.mrb[0].mxu0
        %7008 = vmatprep.mubr.bf16.mxu0 0
        %7009 = vmatmul.mubr.bf16.gmra.mrb[0].mxu0 %v6748
        %v7010 = vpop.f32.mrb[0].mxu0
        %v7011 = vadd.f32 %v6667, %v7010
        %v7012 = vpop.f32.mrb[0].mxu0
        %v7013 = vpop.f32.mrb[0].mxu0
        %v7014 = vadd.f32 %v6667, %v7013
        %v7015 = vpop.f32.mrb[0].mxu0
        %7016 = vmatprep.mubr.bf16.mxu0 0
        %7017 = vmatmul.mubr.bf16.gmra.mrb[0].mxu0 %v6751
        %v7018 = vpop.f32.mrb[0].mxu0
        %v7019 = vadd.f32 %v6667, %v7018
        %v7020 = vpop.f32.mrb[0].mxu0
        %v7021 = vpop.f32.mrb[0].mxu0
        %v7022 = vadd.f32 %v6667, %v7021
        %v7023 = vpop.f32.mrb[0].mxu0
        %7024 = vmatprep.mubr.bf16.mxu0 0
        %7025 = vmatmul.mubr.bf16.gmra.mrb[0].mxu0 %v6754
        %v7026 = vpop.f32.mrb[0].mxu0
        %v7027 = vadd.f32 %v6667, %v7026
        %v7028 = vpop.f32.mrb[0].mxu0
        %v7029 = vpop.f32.mrb[0].mxu0
        %v7030 = vadd.f32 %v6667, %v7029
        %v7031 = vpop.f32.mrb[0].mxu0
        %7032 = vmatprep.mubr.bf16.mxu0 0
        %7033 = vmatmul.mubr.bf16.gmra.mrb[0].mxu0 %v6757
        %v7034 = vpop.f32.mrb[0].mxu0
        %v7035 = vadd.f32 %v6667, %v7034
        %v7036 = vpop.f32.mrb[0].mxu0
        %v7037 = vpop.f32.mrb[0].mxu0
        %v7038 = vadd.f32 %v6667, %v7037
        %v7039 = vpop.f32.mrb[0].mxu0
        %7040 = vmatprep.mubr.bf16.mxu0 0
        %7041 = vmatmul.mubr.bf16.gmra.mrb[0].mxu0 %v6760
        %v7042 = vpop.f32.mrb[0].mxu0
        %v7043 = vadd.f32 %v6667, %v7042
        %v7044 = vpop.f32.mrb[0].mxu0
        %v7045 = vpop.f32.mrb[0].mxu0
        %v7046 = vadd.f32 %v6667, %v7045
        %v7047 = vpop.f32.mrb[0].mxu0
        %7048 = vmatprep.mubr.bf16.mxu0 0
        %7049 = vmatmul.mubr.bf16.gmra.mrb[0].mxu0 %v6763
        %v7050 = vpop.f32.mrb[0].mxu0
        %v7051 = vadd.f32 %v6667, %v7050
        %v7052 = vpop.f32.mrb[0].mxu0
        %v7053 = vpop.f32.mrb[0].mxu0
        %v7054 = vadd.f32 %v6667, %v7053
        %v7055 = vpop.f32.mrb[0].mxu0
        %7056 = vdwg.mxu0
        %7121 = vrot.lane.b32.xlu0 %v652, 124
        %v7122 = vpop.permute.xlu0 %7121
        %7123 = vrot.lane.b32.xlu0 %v655, 124
        %v7124 = vpop.permute.xlu0 %7123
        %7125 = vrot.lane.b32.xlu0 %v660, 124
        %v7126 = vpop.permute.xlu0 %7125
        %7127 = vrot.lane.b32.xlu0 %v663, 124
        %v7128 = vpop.permute.xlu0 %7127
        %7129 = vrot.lane.b32.xlu0 %v668, 124
        %v7130 = vpop.permute.xlu0 %7129
        %7131 = vrot.lane.b32.xlu0 %v671, 124
        %v7132 = vpop.permute.xlu0 %7131
        %7133 = vrot.lane.b32.xlu0 %v676, 124
        %v7134 = vpop.permute.xlu0 %7133
        %7135 = vrot.lane.b32.xlu0 %v679, 124
        %v7136 = vpop.permute.xlu0 %7135
        %7137 = vrot.lane.b32.xlu0 %v684, 124
        %v7138 = vpop.permute.xlu0 %7137
        %7139 = vrot.lane.b32.xlu0 %v687, 124
        %v7140 = vpop.permute.xlu0 %7139
        %7141 = vrot.lane.b32.xlu0 %v692, 124
        %v7142 = vpop.permute.xlu0 %7141
        %7143 = vrot.lane.b32.xlu0 %v695, 124
        %v7144 = vpop.permute.xlu0 %7143
        %7145 = vrot.lane.b32.xlu0 %v700, 124
        %v7146 = vpop.permute.xlu0 %7145
        %7147 = vrot.lane.b32.xlu0 %v703, 124
        %v7148 = vpop.permute.xlu0 %7147
        %7149 = vrot.lane.b32.xlu0 %v708, 124
        %v7150 = vpop.permute.xlu0 %7149
        %7151 = vrot.lane.b32.xlu0 %v711, 124
        %v7152 = vpop.permute.xlu0 %7151
        %7153 = vrot.lane.b32.xlu0 %v716, 124
        %v7154 = vpop.permute.xlu0 %7153
        %7155 = vrot.lane.b32.xlu0 %v719, 124
        %v7156 = vpop.permute.xlu0 %7155
        %7157 = vrot.lane.b32.xlu0 %v724, 124
        %v7158 = vpop.permute.xlu0 %7157
        %7159 = vrot.lane.b32.xlu0 %v727, 124
        %v7160 = vpop.permute.xlu0 %7159
        %7161 = vrot.lane.b32.xlu0 %v732, 124
        %v7162 = vpop.permute.xlu0 %7161
        %7163 = vrot.lane.b32.xlu0 %v735, 124
        %v7164 = vpop.permute.xlu0 %7163
        %7165 = vrot.lane.b32.xlu0 %v740, 124
        %v7166 = vpop.permute.xlu0 %7165
        %7167 = vrot.lane.b32.xlu0 %v743, 124
        %v7168 = vpop.permute.xlu0 %7167
        %7169 = vrot.lane.b32.xlu0 %v748, 124
        %v7170 = vpop.permute.xlu0 %7169
        %7171 = vrot.lane.b32.xlu0 %v751, 124
        %v7172 = vpop.permute.xlu0 %7171
        %7173 = vrot.lane.b32.xlu0 %v756, 124
        %v7174 = vpop.permute.xlu0 %7173
        %7175 = vrot.lane.b32.xlu0 %v759, 124
        %v7176 = vpop.permute.xlu0 %7175
        %7177 = vrot.lane.b32.xlu0 %v764, 124
        %v7178 = vpop.permute.xlu0 %7177
        %7179 = vrot.lane.b32.xlu0 %v767, 124
        %v7180 = vpop.permute.xlu0 %7179
        %7181 = vrot.lane.b32.xlu0 %v772, 124
        %v7182 = vpop.permute.xlu0 %7181
        %7183 = vrot.lane.b32.xlu0 %v775, 124
        %v7184 = vpop.permute.xlu0 %7183
        %7185 = vrot.lane.b32.xlu0 %v780, 124
        %v7186 = vpop.permute.xlu0 %7185
        %7187 = vrot.lane.b32.xlu0 %v783, 124
        %v7188 = vpop.permute.xlu0 %7187
        %7189 = vrot.lane.b32.xlu0 %v788, 124
        %v7190 = vpop.permute.xlu0 %7189
        %7191 = vrot.lane.b32.xlu0 %v791, 124
        %v7192 = vpop.permute.xlu0 %7191
        %7193 = vrot.lane.b32.xlu0 %v796, 124
        %v7194 = vpop.permute.xlu0 %7193
        %7195 = vrot.lane.b32.xlu0 %v799, 124
        %v7196 = vpop.permute.xlu0 %7195
        %7197 = vrot.lane.b32.xlu0 %v804, 124
        %v7198 = vpop.permute.xlu0 %7197
        %7199 = vrot.lane.b32.xlu0 %v807, 124
        %v7200 = vpop.permute.xlu0 %7199
        %7201 = vrot.lane.b32.xlu0 %v812, 124
        %v7202 = vpop.permute.xlu0 %7201
        %7203 = vrot.lane.b32.xlu0 %v815, 124
        %v7204 = vpop.permute.xlu0 %7203
        %7205 = vrot.lane.b32.xlu0 %v820, 124
        %v7206 = vpop.permute.xlu0 %7205
        %7207 = vrot.lane.b32.xlu0 %v823, 124
        %v7208 = vpop.permute.xlu0 %7207
        %7209 = vrot.lane.b32.xlu0 %v828, 124
        %v7210 = vpop.permute.xlu0 %7209
        %7211 = vrot.lane.b32.xlu0 %v831, 124
        %v7212 = vpop.permute.xlu0 %7211
        %7213 = vrot.lane.b32.xlu0 %v836, 124
        %v7214 = vpop.permute.xlu0 %7213
        %7215 = vrot.lane.b32.xlu0 %v839, 124
        %v7216 = vpop.permute.xlu0 %7215
        %7217 = vrot.lane.b32.xlu0 %v844, 124
        %v7218 = vpop.permute.xlu0 %7217
        %7219 = vrot.lane.b32.xlu0 %v847, 124
        %v7220 = vpop.permute.xlu0 %7219
        %7221 = vrot.lane.b32.xlu0 %v852, 124
        %v7222 = vpop.permute.xlu0 %7221
        %7223 = vrot.lane.b32.xlu0 %v855, 124
        %v7224 = vpop.permute.xlu0 %7223
        %7225 = vrot.lane.b32.xlu0 %v860, 124
        %v7226 = vpop.permute.xlu0 %7225
        %7227 = vrot.lane.b32.xlu0 %v863, 124
        %v7228 = vpop.permute.xlu0 %7227
        %7229 = vrot.lane.b32.xlu0 %v868, 124
        %v7230 = vpop.permute.xlu0 %7229
        %7231 = vrot.lane.b32.xlu0 %v871, 124
        %v7232 = vpop.permute.xlu0 %7231
        %7233 = vrot.lane.b32.xlu0 %v876, 124
        %v7234 = vpop.permute.xlu0 %7233
        %7235 = vrot.lane.b32.xlu0 %v879, 124
        %v7236 = vpop.permute.xlu0 %7235
        %7237 = vrot.lane.b32.xlu0 %v884, 124
        %v7238 = vpop.permute.xlu0 %7237
        %7239 = vrot.lane.b32.xlu0 %v887, 124
        %v7240 = vpop.permute.xlu0 %7239
        %7241 = vrot.lane.b32.xlu0 %v892, 124
        %v7242 = vpop.permute.xlu0 %7241
        %7243 = vrot.lane.b32.xlu0 %v895, 124
        %v7244 = vpop.permute.xlu0 %7243
        %7245 = vrot.lane.b32.xlu0 %v900, 124
        %v7246 = vpop.permute.xlu0 %7245
        %7247 = vrot.lane.b32.xlu0 %v903, 124
        %v7248 = vpop.permute.xlu0 %7247
        %v7313 = vadd.f32 %v6803, %v7122
        %v7314 = vadd.f32 %v6806, %v7124
        %v7315 = vadd.f32 %v6811, %v7126
        %v7316 = vadd.f32 %v6814, %v7128
        %v7317 = vadd.f32 %v6819, %v7130
        %v7318 = vadd.f32 %v6822, %v7132
        %v7319 = vadd.f32 %v6827, %v7134
        %v7320 = vadd.f32 %v6830, %v7136
        %v7321 = vadd.f32 %v6835, %v7138
        %v7322 = vadd.f32 %v6838, %v7140
        %v7323 = vadd.f32 %v6843, %v7142
        %v7324 = vadd.f32 %v6846, %v7144
        %v7325 = vadd.f32 %v6851, %v7146
        %v7326 = vadd.f32 %v6854, %v7148
        %v7327 = vadd.f32 %v6859, %v7150
        %v7328 = vadd.f32 %v6862, %v7152
        %v7329 = vadd.f32 %v6867, %v7154
        %v7330 = vadd.f32 %v6870, %v7156
        %v7331 = vadd.f32 %v6875, %v7158
        %v7332 = vadd.f32 %v6878, %v7160
        %v7333 = vadd.f32 %v6883, %v7162
        %v7334 = vadd.f32 %v6886, %v7164
        %v7335 = vadd.f32 %v6891, %v7166
        %v7336 = vadd.f32 %v6894, %v7168
        %v7337 = vadd.f32 %v6899, %v7170
        %v7338 = vadd.f32 %v6902, %v7172
        %v7339 = vadd.f32 %v6907, %v7174
        %v7340 = vadd.f32 %v6910, %v7176
        %v7341 = vadd.f32 %v6915, %v7178
        %v7342 = vadd.f32 %v6918, %v7180
        %v7343 = vadd.f32 %v6923, %v7182
        %v7344 = vadd.f32 %v6926, %v7184
        %v7345 = vadd.f32 %v6931, %v7186
        %v7346 = vadd.f32 %v6934, %v7188
        %v7347 = vadd.f32 %v6939, %v7190
        %v7348 = vadd.f32 %v6942, %v7192
        %v7349 = vadd.f32 %v6947, %v7194
        %v7350 = vadd.f32 %v6950, %v7196
        %v7351 = vadd.f32 %v6955, %v7198
        %v7352 = vadd.f32 %v6958, %v7200
        %v7353 = vadd.f32 %v6963, %v7202
        %v7354 = vadd.f32 %v6966, %v7204
        %v7355 = vadd.f32 %v6971, %v7206
        %v7356 = vadd.f32 %v6974, %v7208
        %v7357 = vadd.f32 %v6979, %v7210
        %v7358 = vadd.f32 %v6982, %v7212
        %v7359 = vadd.f32 %v6987, %v7214
        %v7360 = vadd.f32 %v6990, %v7216
        %v7361 = vadd.f32 %v6995, %v7218
        %v7362 = vadd.f32 %v6998, %v7220
        %v7363 = vadd.f32 %v7003, %v7222
        %v7364 = vadd.f32 %v7006, %v7224
        %v7365 = vadd.f32 %v7011, %v7226
        %v7366 = vadd.f32 %v7014, %v7228
        %v7367 = vadd.f32 %v7019, %v7230
        %v7368 = vadd.f32 %v7022, %v7232
        %v7369 = vadd.f32 %v7027, %v7234
        %v7370 = vadd.f32 %v7030, %v7236
        %v7371 = vadd.f32 %v7035, %v7238
        %v7372 = vadd.f32 %v7038, %v7240
        %v7373 = vadd.f32 %v7043, %v7242
        %v7374 = vadd.f32 %v7046, %v7244
        %v7375 = vadd.f32 %v7051, %v7246
        %v7376 = vadd.f32 %v7054, %v7248
        %v7377 = vmax.f32 %v7313, 0.0
        %v7378 = vmax.f32 %v7314, 0.0
        %v7379 = vmax.f32 %v7315, 0.0
        %v7380 = vmax.f32 %v7316, 0.0
        %v7381 = vmax.f32 %v7317, 0.0
        %v7382 = vmax.f32 %v7318, 0.0
        %v7383 = vmax.f32 %v7319, 0.0
        %v7384 = vmax.f32 %v7320, 0.0
        %v7385 = vmax.f32 %v7321, 0.0
        %v7386 = vmax.f32 %v7322, 0.0
        %v7387 = vmax.f32 %v7323, 0.0
        %v7388 = vmax.f32 %v7324, 0.0
        %v7389 = vmax.f32 %v7325, 0.0
        %v7390 = vmax.f32 %v7326, 0.0
        %v7391 = vmax.f32 %v7327, 0.0
        %v7392 = vmax.f32 %v7328, 0.0
        %v7393 = vmax.f32 %v7329, 0.0
        %v7394 = vmax.f32 %v7330, 0.0
        %v7395 = vmax.f32 %v7331, 0.0
        %v7396 = vmax.f32 %v7332, 0.0
        %v7397 = vmax.f32 %v7333, 0.0
        %v7398 = vmax.f32 %v7334, 0.0
        %v7399 = vmax.f32 %v7335, 0.0
        %v7400 = vmax.f32 %v7336, 0.0
        %v7401 = vmax.f32 %v7337, 0.0
        %v7402 = vmax.f32 %v7338, 0.0
        %v7403 = vmax.f32 %v7339, 0.0
        %v7404 = vmax.f32 %v7340, 0.0
        %v7405 = vmax.f32 %v7341, 0.0
        %v7406 = vmax.f32 %v7342, 0.0
        %v7407 = vmax.f32 %v7343, 0.0
        %v7408 = vmax.f32 %v7344, 0.0
        %v7409 = vmax.f32 %v7345, 0.0
        %v7410 = vmax.f32 %v7346, 0.0
        %v7411 = vmax.f32 %v7347, 0.0
        %v7412 = vmax.f32 %v7348, 0.0
        %v7413 = vmax.f32 %v7349, 0.0
        %v7414 = vmax.f32 %v7350, 0.0
        %v7415 = vmax.f32 %v7351, 0.0
        %v7416 = vmax.f32 %v7352, 0.0
        %v7417 = vmax.f32 %v7353, 0.0
        %v7418 = vmax.f32 %v7354, 0.0
        %v7419 = vmax.f32 %v7355, 0.0
        %v7420 = vmax.f32 %v7356, 0.0
        %v7421 = vmax.f32 %v7357, 0.0
        %v7422 = vmax.f32 %v7358, 0.0
        %v7423 = vmax.f32 %v7359, 0.0
        %v7424 = vmax.f32 %v7360, 0.0
        %v7425 = vmax.f32 %v7361, 0.0
        %v7426 = vmax.f32 %v7362, 0.0
        %v7427 = vmax.f32 %v7363, 0.0
        %v7428 = vmax.f32 %v7364, 0.0
        %v7429 = vmax.f32 %v7365, 0.0
        %v7430 = vmax.f32 %v7366, 0.0
        %v7431 = vmax.f32 %v7367, 0.0
        %v7432 = vmax.f32 %v7368, 0.0
        %v7433 = vmax.f32 %v7369, 0.0
        %v7434 = vmax.f32 %v7370, 0.0
        %v7435 = vmax.f32 %v7371, 0.0
        %v7436 = vmax.f32 %v7372, 0.0
        %v7437 = vmax.f32 %v7373, 0.0
        %v7438 = vmax.f32 %v7374, 0.0
        %v7439 = vmax.f32 %v7375, 0.0
        %v7440 = vmax.f32 %v7376, 0.0
        %v7441 = vpack.c.bf16 %v7378, %v7377
        %v7442 = vpack.c.bf16 %v7380, %v7379
        %v7443 = vpack.c.bf16 %v7382, %v7381
        %v7444 = vpack.c.bf16 %v7384, %v7383
        %v7445 = vpack.c.bf16 %v7386, %v7385
        %v7446 = vpack.c.bf16 %v7388, %v7387
        %v7447 = vpack.c.bf16 %v7390, %v7389
        %v7448 = vpack.c.bf16 %v7392, %v7391
        %v7449 = vpack.c.bf16 %v7394, %v7393
        %v7450 = vpack.c.bf16 %v7396, %v7395
        %v7451 = vpack.c.bf16 %v7398, %v7397
        %v7452 = vpack.c.bf16 %v7400, %v7399
        %v7453 = vpack.c.bf16 %v7402, %v7401
        %v7454 = vpack.c.bf16 %v7404, %v7403
        %v7455 = vpack.c.bf16 %v7406, %v7405
        %v7456 = vpack.c.bf16 %v7408, %v7407
        %v7457 = vpack.c.bf16 %v7410, %v7409
        %v7458 = vpack.c.bf16 %v7412, %v7411
        %v7459 = vpack.c.bf16 %v7414, %v7413
        %v7460 = vpack.c.bf16 %v7416, %v7415
        %v7461 = vpack.c.bf16 %v7418, %v7417
        %v7462 = vpack.c.bf16 %v7420, %v7419
        %v7463 = vpack.c.bf16 %v7422, %v7421
        %v7464 = vpack.c.bf16 %v7424, %v7423
        %v7465 = vpack.c.bf16 %v7426, %v7425
        %v7466 = vpack.c.bf16 %v7428, %v7427
        %v7467 = vpack.c.bf16 %v7430, %v7429
        %v7468 = vpack.c.bf16 %v7432, %v7431
        %v7469 = vpack.c.bf16 %v7434, %v7433
        %v7470 = vpack.c.bf16 %v7436, %v7435
        %v7471 = vpack.c.bf16 %v7438, %v7437
        %v7472 = vpack.c.bf16 %v7440, %v7439
        %v7505 = vunpack.c.l.b16 %v7441
        %v7506 = vunpack.c.h.b16 %v7441
        %v7507 = vunpack.c.l.b16 %v7442
        %v7508 = vunpack.c.h.b16 %v7442
        %v7509 = vunpack.c.l.b16 %v7443
        %v7510 = vunpack.c.h.b16 %v7443
        %v7511 = vunpack.c.l.b16 %v7444
        %v7512 = vunpack.c.h.b16 %v7444
        %v7513 = vunpack.c.l.b16 %v7445
        %v7514 = vunpack.c.h.b16 %v7445
        %v7515 = vunpack.c.l.b16 %v7446
        %v7516 = vunpack.c.h.b16 %v7446
        %v7517 = vunpack.c.l.b16 %v7447
        %v7518 = vunpack.c.h.b16 %v7447
        %v7519 = vunpack.c.l.b16 %v7448
        %v7520 = vunpack.c.h.b16 %v7448
        %v7521 = vunpack.c.l.b16 %v7449
        %v7522 = vunpack.c.h.b16 %v7449
        %v7523 = vunpack.c.l.b16 %v7450
        %v7524 = vunpack.c.h.b16 %v7450
        %v7525 = vunpack.c.l.b16 %v7451
        %v7526 = vunpack.c.h.b16 %v7451
        %v7527 = vunpack.c.l.b16 %v7452
        %v7528 = vunpack.c.h.b16 %v7452
        %v7529 = vunpack.c.l.b16 %v7453
        %v7530 = vunpack.c.h.b16 %v7453
        %v7531 = vunpack.c.l.b16 %v7454
        %v7532 = vunpack.c.h.b16 %v7454
        %v7533 = vunpack.c.l.b16 %v7455
        %v7534 = vunpack.c.h.b16 %v7455
        %v7535 = vunpack.c.l.b16 %v7456
        %v7536 = vunpack.c.h.b16 %v7456
        %v7537 = vunpack.c.l.b16 %v7457
        %v7538 = vunpack.c.h.b16 %v7457
        %v7539 = vunpack.c.l.b16 %v7458
        %v7540 = vunpack.c.h.b16 %v7458
        %v7541 = vunpack.c.l.b16 %v7459
        %v7542 = vunpack.c.h.b16 %v7459
        %v7543 = vunpack.c.l.b16 %v7460
        %v7544 = vunpack.c.h.b16 %v7460
        %v7545 = vunpack.c.l.b16 %v7461
        %v7546 = vunpack.c.h.b16 %v7461
        %v7547 = vunpack.c.l.b16 %v7462
        %v7548 = vunpack.c.h.b16 %v7462
        %v7549 = vunpack.c.l.b16 %v7463
        %v7550 = vunpack.c.h.b16 %v7463
        %v7551 = vunpack.c.l.b16 %v7464
        %v7552 = vunpack.c.h.b16 %v7464
        %v7553 = vunpack.c.l.b16 %v7465
        %v7554 = vunpack.c.h.b16 %v7465
        %v7555 = vunpack.c.l.b16 %v7466
        %v7556 = vunpack.c.h.b16 %v7466
        %v7557 = vunpack.c.l.b16 %v7467
        %v7558 = vunpack.c.h.b16 %v7467
        %v7559 = vunpack.c.l.b16 %v7468
        %v7560 = vunpack.c.h.b16 %v7468
        %v7561 = vunpack.c.l.b16 %v7469
        %v7562 = vunpack.c.h.b16 %v7469
        %v7563 = vunpack.c.l.b16 %v7470
        %v7564 = vunpack.c.h.b16 %v7470
        %v7565 = vunpack.c.l.b16 %v7471
        %v7566 = vunpack.c.h.b16 %v7471
        %v7567 = vunpack.c.l.b16 %v7472
        %v7568 = vunpack.c.h.b16 %v7472
        %v7569 = vpack.c.b16 %v7505, %v7505
        %v7570 = vpack.c.b16 %v7506, %v7506
        %v7571 = vpack.c.b16 %v7507, %v7507
        %v7572 = vpack.c.b16 %v7508, %v7508
        %v7573 = vpack.c.b16 %v7509, %v7509
        %v7574 = vpack.c.b16 %v7510, %v7510
        %v7575 = vpack.c.b16 %v7511, %v7511
        %v7576 = vpack.c.b16 %v7512, %v7512
        %v7577 = vpack.c.b16 %v7513, %v7513
        %v7578 = vpack.c.b16 %v7514, %v7514
        %v7579 = vpack.c.b16 %v7515, %v7515
        %v7580 = vpack.c.b16 %v7516, %v7516
        %v7581 = vpack.c.b16 %v7517, %v7517
        %v7582 = vpack.c.b16 %v7518, %v7518
        %v7583 = vpack.c.b16 %v7519, %v7519
        %v7584 = vpack.c.b16 %v7520, %v7520
        %v7585 = vpack.c.b16 %v7521, %v7521
        %v7586 = vpack.c.b16 %v7522, %v7522
        %v7587 = vpack.c.b16 %v7523, %v7523
        %v7588 = vpack.c.b16 %v7524, %v7524
        %v7589 = vpack.c.b16 %v7525, %v7525
        %v7590 = vpack.c.b16 %v7526, %v7526
        %v7591 = vpack.c.b16 %v7527, %v7527
        %v7592 = vpack.c.b16 %v7528, %v7528
        %v7593 = vpack.c.b16 %v7529, %v7529
        %v7594 = vpack.c.b16 %v7530, %v7530
        %v7595 = vpack.c.b16 %v7531, %v7531
        %v7596 = vpack.c.b16 %v7532, %v7532
        %v7597 = vpack.c.b16 %v7533, %v7533
        %v7598 = vpack.c.b16 %v7534, %v7534
        %v7599 = vpack.c.b16 %v7535, %v7535
        %v7600 = vpack.c.b16 %v7536, %v7536
        %v7601 = vpack.c.b16 %v7537, %v7537
        %v7602 = vpack.c.b16 %v7538, %v7538
        %v7603 = vpack.c.b16 %v7539, %v7539
        %v7604 = vpack.c.b16 %v7540, %v7540
        %v7605 = vpack.c.b16 %v7541, %v7541
        %v7606 = vpack.c.b16 %v7542, %v7542
        %v7607 = vpack.c.b16 %v7543, %v7543
        %v7608 = vpack.c.b16 %v7544, %v7544
        %v7609 = vpack.c.b16 %v7545, %v7545
        %v7610 = vpack.c.b16 %v7546, %v7546
        %v7611 = vpack.c.b16 %v7547, %v7547
        %v7612 = vpack.c.b16 %v7548, %v7548
        %v7613 = vpack.c.b16 %v7549, %v7549
        %v7614 = vpack.c.b16 %v7550, %v7550
        %v7615 = vpack.c.b16 %v7551, %v7551
        %v7616 = vpack.c.b16 %v7552, %v7552
        %v7617 = vpack.c.b16 %v7553, %v7553
        %v7618 = vpack.c.b16 %v7554, %v7554
        %v7619 = vpack.c.b16 %v7555, %v7555
        %v7620 = vpack.c.b16 %v7556, %v7556
        %v7621 = vpack.c.b16 %v7557, %v7557
        %v7622 = vpack.c.b16 %v7558, %v7558
        %v7623 = vpack.c.b16 %v7559, %v7559
        %v7624 = vpack.c.b16 %v7560, %v7560
        %v7625 = vpack.c.b16 %v7561, %v7561
        %v7626 = vpack.c.b16 %v7562, %v7562
        %v7627 = vpack.c.b16 %v7563, %v7563
        %v7628 = vpack.c.b16 %v7564, %v7564
        %v7629 = vpack.c.b16 %v7565, %v7565
        %v7630 = vpack.c.b16 %v7566, %v7566
        %v7631 = vpack.c.b16 %v7567, %v7567
        %v7632 = vpack.c.b16 %v7568, %v7568
        %vm7697 = vcmask 125952
        %7698 = vst.msk [vmem:[%s274] sm:$0xf] %vm7697, %v7569
        %7699 = vst.msk [vmem:[%s274 + $0x4] sm:$0xf] %vm7697, %v7570
        %7700 = vst.msk [vmem:[%s274 + $0x8] sm:$0xf] %vm7697, %v7571
        %7701 = vst.msk [vmem:[%s274 + $0xc] sm:$0xf] %vm7697, %v7572
        %7702 = vst.msk [vmem:[%s274 + $0x10] sm:$0xf] %vm7697, %v7573
        %7703 = vst.msk [vmem:[%s274 + $0x14] sm:$0xf] %vm7697, %v7574
        %7704 = vst.msk [vmem:[%s274 + $0x18] sm:$0xf] %vm7697, %v7575
        %7705 = vst.msk [vmem:[%s274 + $0x1c] sm:$0xf] %vm7697, %v7576
        %7706 = vst.msk [vmem:[%s274 + $0x20] sm:$0xf] %vm7697, %v7577
        %7707 = vst.msk [vmem:[%s274 + $0x24] sm:$0xf] %vm7697, %v7578
        %7708 = vst.msk [vmem:[%s274 + $0x28] sm:$0xf] %vm7697, %v7579
        %7709 = vst.msk [vmem:[%s274 + $0x2c] sm:$0xf] %vm7697, %v7580
        %7710 = vst.msk [vmem:[%s274 + $0x30] sm:$0xf] %vm7697, %v7581
        %7711 = vst.msk [vmem:[%s274 + $0x34] sm:$0xf] %vm7697, %v7582
        %7712 = vst.msk [vmem:[%s274 + $0x38] sm:$0xf] %vm7697, %v7583
        %7713 = vst.msk [vmem:[%s274 + $0x3c] sm:$0xf] %vm7697, %v7584
        %7714 = vst.msk [vmem:[%s274 + $0x40] sm:$0xf] %vm7697, %v7585
        %7715 = vst.msk [vmem:[%s274 + $0x44] sm:$0xf] %vm7697, %v7586
        %7716 = vst.msk [vmem:[%s274 + $0x48] sm:$0xf] %vm7697, %v7587
        %7717 = vst.msk [vmem:[%s274 + $0x4c] sm:$0xf] %vm7697, %v7588
        %7718 = vst.msk [vmem:[%s274 + $0x50] sm:$0xf] %vm7697, %v7589
        %7719 = vst.msk [vmem:[%s274 + $0x54] sm:$0xf] %vm7697, %v7590
        %7720 = vst.msk [vmem:[%s274 + $0x58] sm:$0xf] %vm7697, %v7591
        %7721 = vst.msk [vmem:[%s274 + $0x5c] sm:$0xf] %vm7697, %v7592
        %7722 = vst.msk [vmem:[%s274 + $0x60] sm:$0xf] %vm7697, %v7593
        %7723 = vst.msk [vmem:[%s274 + $0x64] sm:$0xf] %vm7697, %v7594
        %7724 = vst.msk [vmem:[%s274 + $0x68] sm:$0xf] %vm7697, %v7595
        %7725 = vst.msk [vmem:[%s274 + $0x6c] sm:$0xf] %vm7697, %v7596
        %7726 = vst.msk [vmem:[%s274 + $0x70] sm:$0xf] %vm7697, %v7597
        %7727 = vst.msk [vmem:[%s274 + $0x74] sm:$0xf] %vm7697, %v7598
        %7728 = vst.msk [vmem:[%s274 + $0x78] sm:$0xf] %vm7697, %v7599
        %7729 = vst.msk [vmem:[%s274 + $0x7c] sm:$0xf] %vm7697, %v7600
        %7730 = vst.msk [vmem:[%s274 + $0x80] sm:$0xf] %vm7697, %v7601
        %7731 = vst.msk [vmem:[%s274 + $0x84] sm:$0xf] %vm7697, %v7602
        %7732 = vst.msk [vmem:[%s274 + $0x88] sm:$0xf] %vm7697, %v7603
        %7733 = vst.msk [vmem:[%s274 + $0x8c] sm:$0xf] %vm7697, %v7604
        %7734 = vst.msk [vmem:[%s274 + $0x90] sm:$0xf] %vm7697, %v7605
        %7735 = vst.msk [vmem:[%s274 + $0x94] sm:$0xf] %vm7697, %v7606
        %7736 = vst.msk [vmem:[%s274 + $0x98] sm:$0xf] %vm7697, %v7607
        %7737 = vst.msk [vmem:[%s274 + $0x9c] sm:$0xf] %vm7697, %v7608
        %7738 = vst.msk [vmem:[%s274 + $0xa0] sm:$0xf] %vm7697, %v7609
        %7739 = vst.msk [vmem:[%s274 + $0xa4] sm:$0xf] %vm7697, %v7610
        %7740 = vst.msk [vmem:[%s274 + $0xa8] sm:$0xf] %vm7697, %v7611
        %7741 = vst.msk [vmem:[%s274 + $0xac] sm:$0xf] %vm7697, %v7612
        %7742 = vst.msk [vmem:[%s274 + $0xb0] sm:$0xf] %vm7697, %v7613
        %7743 = vst.msk [vmem:[%s274 + $0xb4] sm:$0xf] %vm7697, %v7614
        %7744 = vst.msk [vmem:[%s274 + $0xb8] sm:$0xf] %vm7697, %v7615
        %7745 = vst.msk [vmem:[%s274 + $0xbc] sm:$0xf] %vm7697, %v7616
        %7746 = vst.msk [vmem:[%s274 + $0xc0] sm:$0xf] %vm7697, %v7617
        %7747 = vst.msk [vmem:[%s274 + $0xc4] sm:$0xf] %vm7697, %v7618
        %7748 = vst.msk [vmem:[%s274 + $0xc8] sm:$0xf] %vm7697, %v7619
        %7749 = vst.msk [vmem:[%s274 + $0xcc] sm:$0xf] %vm7697, %v7620
        %7750 = vst.msk [vmem:[%s274 + $0xd0] sm:$0xf] %vm7697, %v7621
        %7751 = vst.msk [vmem:[%s274 + $0xd4] sm:$0xf] %vm7697, %v7622
        %7752 = vst.msk [vmem:[%s274 + $0xd8] sm:$0xf] %vm7697, %v7623
        %7753 = vst.msk [vmem:[%s274 + $0xdc] sm:$0xf] %vm7697, %v7624
        %7754 = vst.msk [vmem:[%s274 + $0xe0] sm:$0xf] %vm7697, %v7625
        %7755 = vst.msk [vmem:[%s274 + $0xe4] sm:$0xf] %vm7697, %v7626
        %7756 = vst.msk [vmem:[%s274 + $0xe8] sm:$0xf] %vm7697, %v7627
        %7757 = vst.msk [vmem:[%s274 + $0xec] sm:$0xf] %vm7697, %v7628
        %7758 = vst.msk [vmem:[%s274 + $0xf0] sm:$0xf] %vm7697, %v7629
        %7759 = vst.msk [vmem:[%s274 + $0xf4] sm:$0xf] %vm7697, %v7630
        %7760 = vst.msk [vmem:[%s274 + $0xf8] sm:$0xf] %vm7697, %v7631
        %7761 = vst.msk [vmem:[%s274 + $0xfc] sm:$0xf] %vm7697, %v7632
        %s7762 = sand.u32 %s181, 1
        %s7763 = scalar_lea.sflag [#allocation4], %s7762
        %s7764 = sand.u32 %s181, 1
        %s7765 = smul.addr %s7764, 256
        %s7766 = scalar_lea.vmem [#allocation3], %s7765
        // Predicated region
        $region49: #{tpu_custom_call.1} parent=47 // pred_check
          %p7767 = pneg %p191
        $region50: #{tpu_custom_call.1} parent=47 // pred_check_branch
          %7769 = sbr.rel (%p7767) target = $region52
        $region51: #{tpu_custom_call.1} parent=47 // pred_region
          %s7770 = smul.u32 2, %s21
          %s7772 = ssub.s32 4096, 4096
          %7773 = vsyncadd %s7763, %s7772
          %s7774 = smul.addr %s7770, 32
          %s7775 = smul.addr %s7774, 64
          %s7776 = scalar_lea.hbm %s7, %s7775
          %s7777 = sshll.u32 %s7766, 4
          %s7778 = int_to_ptr.vmem [resolvable:$true] %s7777
          %7783 = dma.vmem_to_hbm [thread:$0]  %s7778, 4096, %s7776, %s7763, 64, 64, 4
        $region52: #{tpu_custom_call.1} parent=47 // pred_fallthru
          _
      $region48: #{tpu_custom_call.1} parent=5 // pred_fallthru
        _
      %p7784 = scmp.le.s32.totalorder 2, %s16
      // Predicated region
      $region53: #{tpu_custom_call.1} parent=5 // pred_check
        %p7785 = pneg %p7784
      $region54: #{tpu_custom_call.1} parent=5 // pred_check_branch
        %7787 = sbr.rel (%p7785) target = $region56
      $region55: #{tpu_custom_call.1} parent=5 // pred_region
        %s7788 = ssub.s32 %s16, 2
        // Predicated region
        $region57: #{tpu_custom_call.1} parent=55 // pred_check
          %p7789 = pneg %p197
        $region58: #{tpu_custom_call.1} parent=55 // pred_check_branch
          %7791 = sbr.rel (%p7789) target = $region60
        $region59: #{tpu_custom_call.1} parent=55 // pred_region
          %s7792 = sand.u32 %s182, 1
          %s7793 = scalar_lea.sflag [#allocation4], %s7792
          %s7794 = sand.u32 %s182, 1
          %s7795 = smul.addr %s7794, 256
          %s7796 = scalar_lea.vmem [#allocation3], %s7795
          %7797 = dma.done %s7793, 4096
        $region60: #{tpu_custom_call.1} parent=55 // pred_fallthru
          _
      $region56: #{tpu_custom_call.1} parent=5 // pred_fallthru
        _
    $region6: #{tpu_custom_call.1} parent=1 // loop_footer
      %s20 = sadd.s32 1, %s16
    $region7: #{tpu_custom_call.1} parent=1 // loop_footer_branch
      %15 = sbr.rel target = $region3
    $region8: #{tpu_custom_call.1} parent=1 // loop_exit
      _
    %7798 = vsyncpa [#allocation4], 1
    %s7799 = scalar_lea.sflag [#allocation4], 1
    %7800 = vsyncpa %s7799, 1

</llo_original>
